<compile_context>
chip_gen: v7x
topology: tpu7x:2x2x1
jax: 0.10.0
libtpu: 0.0.40
codegen_flags: <defaults>
</compile_context>

<pallas_src>
import functools

import numpy as np
import jax
import jax.numpy as jnp
from jax import lax
from jax.experimental import pallas as pl
from jax.experimental.pallas import tpu as pltpu

EPS = 1e-5              # nn.InstanceNorm2d default eps
F_IN = 64 * 9 * 9       # 5184 flattened conv features
HEAD_TK = 1792          # 14 * 128, K tile for the streamed fc matmul
F_PAD = 3 * HEAD_TK     # 5376, padded feature dim (zero-padded rows/cols)
HID = 512


# ----------------------------------------------------------------------------
# Pallas kernels
# ----------------------------------------------------------------------------
def _conv_relu_instnorm_kernel(p_ref, w_ref, b_ref, o_ref, *, n_valid):
    # p_ref: (1, K, P_pad) bf16  (im2col patches, channels-major K)
    # w_ref: (Cout, K)     bf16
    # b_ref: (Cout, 1)     f32
    # o_ref: (1, Cout, P_pad) bf16   -- lane-dense (spatial on lanes)
    y = jnp.dot(w_ref[...], p_ref[0], preferred_element_type=jnp.float32)
    y = y + b_ref[...]
    y = jnp.maximum(y, 0.0)                                    # ReLU

    # InstanceNorm2d (affine=False): per-channel stats over the valid spatial
    # positions only (pad columns masked out). One-pass variance.
    col = lax.broadcasted_iota(jnp.int32, y.shape, 1)
    mask = col < n_valid
    ym = jnp.where(mask, y, 0.0)
    inv_n = 1.0 / float(n_valid)
    s1 = jnp.sum(ym, axis=1, keepdims=True)                    # (Cout, 1)
    s2 = jnp.sum(ym * ym, axis=1, keepdims=True)
    mean = s1 * inv_n
    var = jnp.maximum(s2 * inv_n - mean * mean, 0.0)           # biased var
    o_ref[0] = ((y - mean) * lax.rsqrt(var + EPS)).astype(o_ref.dtype)


def conv_relu_instnorm(patches, w_mat, b_vec, *, n_valid):
    B, K, Pp = patches.shape
    Cout = w_mat.shape[0]
    kernel = functools.partial(_conv_relu_instnorm_kernel, n_valid=n_valid)
    return pl.pallas_call(
        kernel,
        out_shape=jax.ShapeDtypeStruct((B, Cout, Pp), jnp.bfloat16),
        grid_spec=pltpu.PrefetchScalarGridSpec(
            num_scalar_prefetch=0,
            grid=(B,),
            in_specs=[
                pl.BlockSpec((1, K, Pp), lambda b: (b, 0, 0)),
                pl.BlockSpec((Cout, K), lambda b: (0, 0)),
                pl.BlockSpec((Cout, 1), lambda b: (0, 0)),
            ],
            out_specs=pl.BlockSpec((1, Cout, Pp), lambda b: (b, 0, 0)),
        ),
        compiler_params=pltpu.CompilerParams(
            dimension_semantics=("parallel",)),
    )(patches, w_mat, b_vec.reshape(Cout, 1))


def _head_kernel(x_ref, w1_ref, b1_ref, wc_ref, bc_ref, o_ref, acc_ref):
    # Streams the fc weight over K tiles; f32 accumulator in VMEM.
    k = pl.program_id(0)

    @pl.when(k == 0)
    def _():
        acc_ref[...] = jnp.zeros_like(acc_ref)

    acc_ref[...] += jnp.dot(x_ref[...], w1_ref[...],
                            preferred_element_type=jnp.float32)

    @pl.when(k == pl.num_programs(0) - 1)
    def _():
        h = jnp.maximum(acc_ref[...] + b1_ref[...], 0.0)       # ReLU(fc), f32
        # critic (512 -> 1) as a lane reduction instead of an N=1 MXU matmul.
        o_ref[...] = (jnp.sum(h * wc_ref[...], axis=-1, keepdims=True)
                      + bc_ref[0, 0])


def fc_head(feats, w1, b1, wc, bc):
    B, Fp = feats.shape
    H = w1.shape[1]
    nk = Fp // HEAD_TK
    return pl.pallas_call(
        _head_kernel,
        out_shape=jax.ShapeDtypeStruct((B, 1), jnp.float32),
        grid_spec=pltpu.PrefetchScalarGridSpec(
            num_scalar_prefetch=0,
            grid=(nk,),
            in_specs=[
                pl.BlockSpec((B, HEAD_TK), lambda k: (0, k)),
                pl.BlockSpec((HEAD_TK, H), lambda k: (k, 0)),
                pl.BlockSpec((1, H), lambda k: (0, 0)),
                pl.BlockSpec((1, H), lambda k: (0, 0)),
                pl.BlockSpec((1, 1), lambda k: (0, 0)),
            ],
            out_specs=pl.BlockSpec((B, 1), lambda k: (0, 0)),
            scratch_shapes=[pltpu.VMEM((B, H), jnp.float32)],
        ),
        compiler_params=pltpu.CompilerParams(
            dimension_semantics=("arbitrary",)),
    )(feats, w1, b1.reshape(1, H), wc, bc.reshape(1, 1))


# ----------------------------------------------------------------------------
# JAX glue: im2col, bicubic upsample matrix, parameter init
# ----------------------------------------------------------------------------
def im2col(x_nchw, kh, kw, stride):
    """Returns patches of shape (B, C*kh*kw, OH*OW) with (C, kh, kw)-major K
    ordering (matches PyTorch's weight.reshape(Cout, -1))."""
    B, C, H, W = x_nchw.shape
    OH = (H - kh) // stride + 1
    OW = (W - kw) // stride + 1
    cols = []
    for i in range(kh):
        for j in range(kw):
            cols.append(
                x_nchw[:, :, i:i + stride * OH:stride, j:j + stride * OW:stride])
    p = jnp.stack(cols, axis=2)                     # (B, C, kh*kw, OH, OW)
    return p.reshape(B, C * kh * kw, OH * OW), OH, OW


def conv_stage(h_nchw, w_mat, b_vec, ksz, stride):
    patches, OH, OW = im2col(h_nchw, ksz, ksz, stride)   # (B, K, P)
    B, K, P = patches.shape
    P_pad = ((P + 127) // 128) * 128
    patches = jnp.pad(patches, ((0, 0), (0, 0), (0, P_pad - P)))
    patches = patches.astype(jnp.bfloat16)
    out = conv_relu_instnorm(patches, w_mat, b_vec, n_valid=P)  # (B,Cout,P_pad)
    Cout = w_mat.shape[0]
    return out[:, :, :P].reshape(B, Cout, OH, OW)


def bicubic_1d_matrix(in_size, out_size, a=-0.75):
    """PyTorch nn.Upsample(mode='bicubic', align_corners=False) along one axis
    as a dense (out_size, in_size) linear map."""
    M = np.zeros((out_size, in_size), dtype=np.float32)
    scale = in_size / out_size

    def c1(x):  # |x| <= 1
        return ((a + 2.0) * x - (a + 3.0)) * x * x + 1.0

    def c2(x):  # 1 < |x| < 2
        return (((x - 5.0) * x + 8.0) * x - 4.0) * a

    for j in range(out_size):
        src = (j + 0.5) * scale - 0.5
        x0 = int(np.floor(src))
        t = src - x0
        ws = [c2(t + 1.0), c1(t), c1(1.0 - t), c2(2.0 - t)]
        for k in range(4):
            idx = min(max(x0 - 1 + k, 0), in_size - 1)
            M[j, idx] += ws[k]
    return M


def init_params(key, action_dim):
    keys = jax.random.split(key, 10)

    def u(k, shape, fan_in):
        bound = 1.0 / np.sqrt(fan_in)
        return jax.random.uniform(k, shape, jnp.float32, -bound, bound)

    w1 = u(keys[0], (32, 5, 8, 8), 5 * 8 * 8);      b1 = u(keys[1], (32,), 5 * 8 * 8)
    w2 = u(keys[2], (64, 32, 4, 4), 32 * 4 * 4);    b2 = u(keys[3], (64,), 32 * 4 * 4)
    w3 = u(keys[4], (64, 64, 3, 3), 64 * 3 * 3);    b3 = u(keys[5], (64,), 64 * 3 * 3)
    wf = u(keys[6], (HID, F_IN), F_IN);             bf = u(keys[7], (HID,), F_IN)
    wc = u(keys[8], (1, HID), HID);                 bc = u(keys[9], (1,), HID)

    wf_mat = jnp.pad(wf.T, ((0, F_PAD - F_IN), (0, 0)))    # zero rows: no effect
    return {
        # conv weights as (Cout, Cin*kh*kw) in bf16 (lane-dense kernel layout)
        "w1": w1.reshape(32, -1).astype(jnp.bfloat16), "b1": b1,
        "w2": w2.reshape(64, -1).astype(jnp.bfloat16), "b2": b2,
        "w3": w3.reshape(64, -1).astype(jnp.bfloat16), "b3": b3,
        "wf": wf_mat.astype(jnp.bfloat16), "bf": bf,
        "wc": wc, "bc": bc,
        "upsample_mat": jnp.asarray(bicubic_1d_matrix(action_dim, 100)),
    }


# ----------------------------------------------------------------------------
# Forward pass (Critic.forward)
# ----------------------------------------------------------------------------
def critic_forward(params, x, actions):
    B = x.shape[0]
    # actions.unsqueeze(1).unsqueeze(1) -> (B,1,1,A); bicubic upsample to (100,100).
    # Height has a single source sample (cubic weights sum to 1 -> identity);
    # width is a fixed linear map applied as a small matmul (glue).
    act_w = actions @ params["upsample_mat"].T                   # (B, 100)
    act_up = jnp.broadcast_to(act_w[:, None, None, :], (B, 1, 100, 100))
    xc = jnp.concatenate([x, act_up], axis=1)                    # (B, 5, 100, 100)

    h = xc
    for (wk, bk, ksz, stride) in (("w1", "b1", 8, 4),
                                  ("w2", "b2", 4, 2),
                                  ("w3", "b3", 3, 1)):
        h = conv_stage(h, params[wk], params[bk], ksz, stride)   # (B, Cout, OH, OW)

    feats = h.reshape(B, -1)                                     # == torch x.view(B,-1)
    feats = jnp.pad(feats, ((0, 0), (0, F_PAD - F_IN))).astype(jnp.bfloat16)
    val = fc_head(feats, params["wf"], params["bf"], params["wc"], params["bc"])
    # In the reference module x_2 == x after the concat, so both critic branches
    # are mathematically identical; compute once and return it twice.
    return val, val


if __name__ == "__main__":
    key = jax.random.PRNGKey(0)
    kx, ka, kp = jax.random.split(key, 3)
    B, A = 2, 8
    x = jax.random.normal(kx, (B, 4, 100, 100), jnp.float32)
    actions = jax.random.normal(ka, (B, A), jnp.float32)
    params = init_params(kp, A)

    fwd = jax.jit(lambda xx, aa: critic_forward(params, xx, aa))
    o1, o2 = fwd(x, actions)
    jax.block_until_ready((o1, o2))
    assert o1.shape == (B, 1) and o2.shape == (B, 1)
    assert bool(jnp.all(jnp.isfinite(o1))) and bool(jnp.all(jnp.isfinite(o2)))
    print("KERNEL_OK")
</pallas_src>

<mosaic_0001>
module attributes {stable_mosaic.version = 11 : i64} {
  func.func @_conv_relu_instnorm_kernel(%arg0: i32, %arg1: memref<1x320x640xbf16, #tpu.memory_space<vmem>>, %arg2: memref<32x320xbf16, #tpu.memory_space<vmem>>, %arg3: memref<32x1xf32, #tpu.memory_space<vmem>>, %arg4: memref<1x32x640xbf16, #tpu.memory_space<vmem>>) attributes {dimension_semantics = [#tpu.dimension_semantics<parallel>], iteration_bounds = array<i64: 2>, scalar_prefetch = 0 : i64, scratch_operands = 0 : i64, tpu.core_type = #tpu.core_type<tc>, window_params = [{transform_indices = @transform_0, window_bounds = array<i64: 1, 320, 640>}, {pipeline_mode = #tpu.pipeline_mode<synchronous>, transform_indices = @transform_1, window_bounds = array<i64: 32, 320>}, {pipeline_mode = #tpu.pipeline_mode<synchronous>, transform_indices = @transform_2, window_bounds = array<i64: 32, 1>}, {transform_indices = @transform_3, window_bounds = array<i64: 1, 32, 640>}]} {
    %c0 = arith.constant 0 : index
    %c0_0 = arith.constant 0 : index
    %0 = vector.load %arg2[%c0, %c0_0] : memref<32x320xbf16, #tpu.memory_space<vmem>>, vector<32x320xbf16>
    %c0_1 = arith.constant 0 : index
    %c0_2 = arith.constant 0 : index
    %c0_3 = arith.constant 0 : index
    %1 = vector.load %arg1[%c0_1, %c0_2, %c0_3] : memref<1x320x640xbf16, #tpu.memory_space<vmem>>, vector<1x320x640xbf16>
    %2 = vector.shape_cast %1 : vector<1x320x640xbf16> to vector<320x640xbf16>
    %cst = arith.constant dense<0.000000e+00> : vector<32x640xf32>
    %3 = tpu.matmul %0, %2, %cst {dimension_numbers = #tpu.dot_dimension_numbers<[1], [0], [0], [1], [0, 0, 1, 1], [], []>} : vector<32x320xbf16>, vector<320x640xbf16>, vector<32x640xf32> -> vector<32x640xf32>
    %c0_4 = arith.constant 0 : index
    %c0_5 = arith.constant 0 : index
    %4 = vector.load %arg3[%c0_4, %c0_5] : memref<32x1xf32, #tpu.memory_space<vmem>>, vector<32x1xf32>
    %5 = vector.broadcast %4 : vector<32x1xf32> to vector<32x640xf32>
    %6 = arith.addf %3, %5 : vector<32x640xf32>
    %cst_6 = arith.constant 0.000000e+00 : f32
    %7 = vector.broadcast %cst_6 : f32 to vector<32x640xf32>
    %8 = arith.maximumf %6, %7 : vector<32x640xf32>
    %9 = tpu.iota {dimensions = array<i32: 1>} : vector<32x640xi32>
    %c576_i32 = arith.constant 576 : i32
    %10 = vector.broadcast %c576_i32 : i32 to vector<32x640xi32>
    %11 = arith.cmpi slt, %9, %10 : vector<32x640xi32>
    %cst_7 = arith.constant 0.000000e+00 : f32
    %12 = vector.broadcast %cst_7 : f32 to vector<32x640xf32>
    %13 = arith.select %11, %8, %12 : vector<32x640xi1>, vector<32x640xf32>
    %cst_8 = arith.constant dense<0.000000e+00> : vector<32xf32>
    %14 = vector.multi_reduction <add>, %13, %cst_8 [1] : vector<32x640xf32> to vector<32xf32>
    %15 = vector.shape_cast %14 : vector<32xf32> to vector<32x1xf32>
    %16 = arith.mulf %13, %13 : vector<32x640xf32>
    %cst_9 = arith.constant dense<0.000000e+00> : vector<32xf32>
    %17 = vector.multi_reduction <add>, %16, %cst_9 [1] : vector<32x640xf32> to vector<32xf32>
    %18 = vector.shape_cast %17 : vector<32xf32> to vector<32x1xf32>
    %cst_10 = arith.constant 0.00173611112 : f32
    %19 = vector.broadcast %cst_10 : f32 to vector<32x1xf32>
    %20 = arith.mulf %15, %19 : vector<32x1xf32>
    %cst_11 = arith.constant 0.00173611112 : f32
    %21 = vector.broadcast %cst_11 : f32 to vector<32x1xf32>
    %22 = arith.mulf %18, %21 : vector<32x1xf32>
    %23 = arith.mulf %20, %20 : vector<32x1xf32>
    %24 = arith.subf %22, %23 : vector<32x1xf32>
    %cst_12 = arith.constant 0.000000e+00 : f32
    %25 = vector.broadcast %cst_12 : f32 to vector<32x1xf32>
    %26 = arith.maximumf %24, %25 : vector<32x1xf32>
    %27 = vector.broadcast %20 : vector<32x1xf32> to vector<32x640xf32>
    %28 = arith.subf %8, %27 : vector<32x640xf32>
    %cst_13 = arith.constant 9.99999974E-6 : f32
    %29 = vector.broadcast %cst_13 : f32 to vector<32x1xf32>
    %30 = arith.addf %26, %29 : vector<32x1xf32>
    %31 = math.rsqrt %30 : vector<32x1xf32>
    %32 = vector.broadcast %31 : vector<32x1xf32> to vector<32x640xf32>
    %33 = arith.mulf %28, %32 : vector<32x640xf32>
    %34 = arith.truncf %33 : vector<32x640xf32> to vector<32x640xbf16>
    %c0_14 = arith.constant 0 : index
    %c0_15 = arith.constant 0 : index
    %c0_16 = arith.constant 0 : index
    %35 = vector.load %arg4[%c0_14, %c0_15, %c0_16] : memref<1x32x640xbf16, #tpu.memory_space<vmem>>, vector<1x32x640xbf16>
    %36 = vector.shape_cast %35 : vector<1x32x640xbf16> to vector<32x640xbf16>
    %37 = vector.shape_cast %34 : vector<32x640xbf16> to vector<1x32x640xbf16>
    tpu.vector_store %arg4[%c0_14, %c0_15, %c0_16], %37 {strides = array<i32>} : memref<1x32x640xbf16, #tpu.memory_space<vmem>>, vector<1x32x640xbf16>,
    return
  }
  func.func @transform_0(%arg0: i32) -> (i32, i32, i32) {
    %c0_i32 = arith.constant 0 : i32
    %c0_i32_0 = arith.constant 0 : i32
    %c0_i32_1 = arith.constant 0 : i32
    return %arg0, %c0_i32, %c0_i32_0 : i32, i32, i32
  }
  func.func @transform_1(%arg0: i32) -> (i32, i32) {
    %c0_i32 = arith.constant 0 : i32
    %c0_i32_0 = arith.constant 0 : i32
    %c0_i32_1 = arith.constant 0 : i32
    return %c0_i32, %c0_i32_0 : i32, i32
  }
  func.func @transform_2(%arg0: i32) -> (i32, i32) {
    %c0_i32 = arith.constant 0 : i32
    %c0_i32_0 = arith.constant 0 : i32
    %c0_i32_1 = arith.constant 0 : i32
    return %c0_i32, %c0_i32_0 : i32, i32
  }
  func.func @transform_3(%arg0: i32) -> (i32, i32, i32) {
    %c0_i32 = arith.constant 0 : i32
    %c0_i32_0 = arith.constant 0 : i32
    %c0_i32_1 = arith.constant 0 : i32
    return %arg0, %c0_i32, %c0_i32_0 : i32, i32, i32
  }
}

module attributes {stable_mosaic.version = 11 : i64} {
  func.func @_conv_relu_instnorm_kernel(%arg0: i32, %arg1: memref<1x512x128xbf16, #tpu.memory_space<vmem>>, %arg2: memref<64x512xbf16, #tpu.memory_space<vmem>>, %arg3: memref<64x1xf32, #tpu.memory_space<vmem>>, %arg4: memref<1x64x128xbf16, #tpu.memory_space<vmem>>) attributes {dimension_semantics = [#tpu.dimension_semantics<parallel>], iteration_bounds = array<i64: 2>, scalar_prefetch = 0 : i64, scratch_operands = 0 : i64, tpu.core_type = #tpu.core_type<tc>, window_params = [{transform_indices = @transform_0, window_bounds = array<i64: 1, 512, 128>}, {pipeline_mode = #tpu.pipeline_mode<synchronous>, transform_indices = @transform_1, window_bounds = array<i64: 64, 512>}, {pipeline_mode = #tpu.pipeline_mode<synchronous>, transform_indices = @transform_2, window_bounds = array<i64: 64, 1>}, {transform_indices = @transform_3, window_bounds = array<i64: 1, 64, 128>}]} {
    %c0 = arith.constant 0 : index
    %c0_0 = arith.constant 0 : index
    %0 = vector.load %arg2[%c0, %c0_0] : memref<64x512xbf16, #tpu.memory_space<vmem>>, vector<64x512xbf16>
    %c0_1 = arith.constant 0 : index
    %c0_2 = arith.constant 0 : index
    %c0_3 = arith.constant 0 : index
    %1 = vector.load %arg1[%c0_1, %c0_2, %c0_3] : memref<1x512x128xbf16, #tpu.memory_space<vmem>>, vector<1x512x128xbf16>
    %2 = vector.shape_cast %1 : vector<1x512x128xbf16> to vector<512x128xbf16>
    %cst = arith.constant dense<0.000000e+00> : vector<64x128xf32>
    %3 = tpu.matmul %0, %2, %cst {dimension_numbers = #tpu.dot_dimension_numbers<[1], [0], [0], [1], [0, 0, 1, 1], [], []>} : vector<64x512xbf16>, vector<512x128xbf16>, vector<64x128xf32> -> vector<64x128xf32>
    %c0_4 = arith.constant 0 : index
    %c0_5 = arith.constant 0 : index
    %4 = vector.load %arg3[%c0_4, %c0_5] : memref<64x1xf32, #tpu.memory_space<vmem>>, vector<64x1xf32>
    %5 = vector.broadcast %4 : vector<64x1xf32> to vector<64x128xf32>
    %6 = arith.addf %3, %5 : vector<64x128xf32>
    %cst_6 = arith.constant 0.000000e+00 : f32
    %7 = vector.broadcast %cst_6 : f32 to vector<64x128xf32>
    %8 = arith.maximumf %6, %7 : vector<64x128xf32>
    %9 = tpu.iota {dimensions = array<i32: 1>} : vector<64x128xi32>
    %c121_i32 = arith.constant 121 : i32
    %10 = vector.broadcast %c121_i32 : i32 to vector<64x128xi32>
    %11 = arith.cmpi slt, %9, %10 : vector<64x128xi32>
    %cst_7 = arith.constant 0.000000e+00 : f32
    %12 = vector.broadcast %cst_7 : f32 to vector<64x128xf32>
    %13 = arith.select %11, %8, %12 : vector<64x128xi1>, vector<64x128xf32>
    %cst_8 = arith.constant dense<0.000000e+00> : vector<64xf32>
    %14 = vector.multi_reduction <add>, %13, %cst_8 [1] : vector<64x128xf32> to vector<64xf32>
    %15 = vector.shape_cast %14 : vector<64xf32> to vector<64x1xf32>
    %16 = arith.mulf %13, %13 : vector<64x128xf32>
    %cst_9 = arith.constant dense<0.000000e+00> : vector<64xf32>
    %17 = vector.multi_reduction <add>, %16, %cst_9 [1] : vector<64x128xf32> to vector<64xf32>
    %18 = vector.shape_cast %17 : vector<64xf32> to vector<64x1xf32>
    %cst_10 = arith.constant 0.00826446246 : f32
    %19 = vector.broadcast %cst_10 : f32 to vector<64x1xf32>
    %20 = arith.mulf %15, %19 : vector<64x1xf32>
    %cst_11 = arith.constant 0.00826446246 : f32
    %21 = vector.broadcast %cst_11 : f32 to vector<64x1xf32>
    %22 = arith.mulf %18, %21 : vector<64x1xf32>
    %23 = arith.mulf %20, %20 : vector<64x1xf32>
    %24 = arith.subf %22, %23 : vector<64x1xf32>
    %cst_12 = arith.constant 0.000000e+00 : f32
    %25 = vector.broadcast %cst_12 : f32 to vector<64x1xf32>
    %26 = arith.maximumf %24, %25 : vector<64x1xf32>
    %27 = vector.broadcast %20 : vector<64x1xf32> to vector<64x128xf32>
    %28 = arith.subf %8, %27 : vector<64x128xf32>
    %cst_13 = arith.constant 9.99999974E-6 : f32
    %29 = vector.broadcast %cst_13 : f32 to vector<64x1xf32>
    %30 = arith.addf %26, %29 : vector<64x1xf32>
    %31 = math.rsqrt %30 : vector<64x1xf32>
    %32 = vector.broadcast %31 : vector<64x1xf32> to vector<64x128xf32>
    %33 = arith.mulf %28, %32 : vector<64x128xf32>
    %34 = arith.truncf %33 : vector<64x128xf32> to vector<64x128xbf16>
    %c0_14 = arith.constant 0 : index
    %c0_15 = arith.constant 0 : index
    %c0_16 = arith.constant 0 : index
    %35 = vector.load %arg4[%c0_14, %c0_15, %c0_16] : memref<1x64x128xbf16, #tpu.memory_space<vmem>>, vector<1x64x128xbf16>
    %36 = vector.shape_cast %35 : vector<1x64x128xbf16> to vector<64x128xbf16>
    %37 = vector.shape_cast %34 : vector<64x128xbf16> to vector<1x64x128xbf16>
    tpu.vector_store %arg4[%c0_14, %c0_15, %c0_16], %37 {strides = array<i32>} : memref<1x64x128xbf16, #tpu.memory_space<vmem>>, vector<1x64x128xbf16>,
    return
  }
  func.func @transform_0(%arg0: i32) -> (i32, i32, i32) {
    %c0_i32 = arith.constant 0 : i32
    %c0_i32_0 = arith.constant 0 : i32
    %c0_i32_1 = arith.constant 0 : i32
    return %arg0, %c0_i32, %c0_i32_0 : i32, i32, i32
  }
  func.func @transform_1(%arg0: i32) -> (i32, i32) {
    %c0_i32 = arith.constant 0 : i32
    %c0_i32_0 = arith.constant 0 : i32
    %c0_i32_1 = arith.constant 0 : i32
    return %c0_i32, %c0_i32_0 : i32, i32
  }
  func.func @transform_2(%arg0: i32) -> (i32, i32) {
    %c0_i32 = arith.constant 0 : i32
    %c0_i32_0 = arith.constant 0 : i32
    %c0_i32_1 = arith.constant 0 : i32
    return %c0_i32, %c0_i32_0 : i32, i32
  }
  func.func @transform_3(%arg0: i32) -> (i32, i32, i32) {
    %c0_i32 = arith.constant 0 : i32
    %c0_i32_0 = arith.constant 0 : i32
    %c0_i32_1 = arith.constant 0 : i32
    return %arg0, %c0_i32, %c0_i32_0 : i32, i32, i32
  }
}

module attributes {stable_mosaic.version = 11 : i64} {
  func.func @_conv_relu_instnorm_kernel(%arg0: i32, %arg1: memref<1x576x128xbf16, #tpu.memory_space<vmem>>, %arg2: memref<64x576xbf16, #tpu.memory_space<vmem>>, %arg3: memref<64x1xf32, #tpu.memory_space<vmem>>, %arg4: memref<1x64x128xbf16, #tpu.memory_space<vmem>>) attributes {dimension_semantics = [#tpu.dimension_semantics<parallel>], iteration_bounds = array<i64: 2>, scalar_prefetch = 0 : i64, scratch_operands = 0 : i64, tpu.core_type = #tpu.core_type<tc>, window_params = [{transform_indices = @transform_0, window_bounds = array<i64: 1, 576, 128>}, {pipeline_mode = #tpu.pipeline_mode<synchronous>, transform_indices = @transform_1, window_bounds = array<i64: 64, 576>}, {pipeline_mode = #tpu.pipeline_mode<synchronous>, transform_indices = @transform_2, window_bounds = array<i64: 64, 1>}, {transform_indices = @transform_3, window_bounds = array<i64: 1, 64, 128>}]} {
    %c0 = arith.constant 0 : index
    %c0_0 = arith.constant 0 : index
    %0 = vector.load %arg2[%c0, %c0_0] : memref<64x576xbf16, #tpu.memory_space<vmem>>, vector<64x576xbf16>
    %c0_1 = arith.constant 0 : index
    %c0_2 = arith.constant 0 : index
    %c0_3 = arith.constant 0 : index
    %1 = vector.load %arg1[%c0_1, %c0_2, %c0_3] : memref<1x576x128xbf16, #tpu.memory_space<vmem>>, vector<1x576x128xbf16>
    %2 = vector.shape_cast %1 : vector<1x576x128xbf16> to vector<576x128xbf16>
    %cst = arith.constant dense<0.000000e+00> : vector<64x128xf32>
    %3 = tpu.matmul %0, %2, %cst {dimension_numbers = #tpu.dot_dimension_numbers<[1], [0], [0], [1], [0, 0, 1, 1], [], []>} : vector<64x576xbf16>, vector<576x128xbf16>, vector<64x128xf32> -> vector<64x128xf32>
    %c0_4 = arith.constant 0 : index
    %c0_5 = arith.constant 0 : index
    %4 = vector.load %arg3[%c0_4, %c0_5] : memref<64x1xf32, #tpu.memory_space<vmem>>, vector<64x1xf32>
    %5 = vector.broadcast %4 : vector<64x1xf32> to vector<64x128xf32>
    %6 = arith.addf %3, %5 : vector<64x128xf32>
    %cst_6 = arith.constant 0.000000e+00 : f32
    %7 = vector.broadcast %cst_6 : f32 to vector<64x128xf32>
    %8 = arith.maximumf %6, %7 : vector<64x128xf32>
    %9 = tpu.iota {dimensions = array<i32: 1>} : vector<64x128xi32>
    %c81_i32 = arith.constant 81 : i32
    %10 = vector.broadcast %c81_i32 : i32 to vector<64x128xi32>
    %11 = arith.cmpi slt, %9, %10 : vector<64x128xi32>
    %cst_7 = arith.constant 0.000000e+00 : f32
    %12 = vector.broadcast %cst_7 : f32 to vector<64x128xf32>
    %13 = arith.select %11, %8, %12 : vector<64x128xi1>, vector<64x128xf32>
    %cst_8 = arith.constant dense<0.000000e+00> : vector<64xf32>
    %14 = vector.multi_reduction <add>, %13, %cst_8 [1] : vector<64x128xf32> to vector<64xf32>
    %15 = vector.shape_cast %14 : vector<64xf32> to vector<64x1xf32>
    %16 = arith.mulf %13, %13 : vector<64x128xf32>
    %cst_9 = arith.constant dense<0.000000e+00> : vector<64xf32>
    %17 = vector.multi_reduction <add>, %16, %cst_9 [1] : vector<64x128xf32> to vector<64xf32>
    %18 = vector.shape_cast %17 : vector<64xf32> to vector<64x1xf32>
    %cst_10 = arith.constant 0.0123456791 : f32
    %19 = vector.broadcast %cst_10 : f32 to vector<64x1xf32>
    %20 = arith.mulf %15, %19 : vector<64x1xf32>
    %cst_11 = arith.constant 0.0123456791 : f32
    %21 = vector.broadcast %cst_11 : f32 to vector<64x1xf32>
    %22 = arith.mulf %18, %21 : vector<64x1xf32>
    %23 = arith.mulf %20, %20 : vector<64x1xf32>
    %24 = arith.subf %22, %23 : vector<64x1xf32>
    %cst_12 = arith.constant 0.000000e+00 : f32
    %25 = vector.broadcast %cst_12 : f32 to vector<64x1xf32>
    %26 = arith.maximumf %24, %25 : vector<64x1xf32>
    %27 = vector.broadcast %20 : vector<64x1xf32> to vector<64x128xf32>
    %28 = arith.subf %8, %27 : vector<64x128xf32>
    %cst_13 = arith.constant 9.99999974E-6 : f32
    %29 = vector.broadcast %cst_13 : f32 to vector<64x1xf32>
    %30 = arith.addf %26, %29 : vector<64x1xf32>
    %31 = math.rsqrt %30 : vector<64x1xf32>
    %32 = vector.broadcast %31 : vector<64x1xf32> to vector<64x128xf32>
    %33 = arith.mulf %28, %32 : vector<64x128xf32>
    %34 = arith.truncf %33 : vector<64x128xf32> to vector<64x128xbf16>
    %c0_14 = arith.constant 0 : index
    %c0_15 = arith.constant 0 : index
    %c0_16 = arith.constant 0 : index
    %35 = vector.load %arg4[%c0_14, %c0_15, %c0_16] : memref<1x64x128xbf16, #tpu.memory_space<vmem>>, vector<1x64x128xbf16>
    %36 = vector.shape_cast %35 : vector<1x64x128xbf16> to vector<64x128xbf16>
    %37 = vector.shape_cast %34 : vector<64x128xbf16> to vector<1x64x128xbf16>
    tpu.vector_store %arg4[%c0_14, %c0_15, %c0_16], %37 {strides = array<i32>} : memref<1x64x128xbf16, #tpu.memory_space<vmem>>, vector<1x64x128xbf16>,
    return
  }
  func.func @transform_0(%arg0: i32) -> (i32, i32, i32) {
    %c0_i32 = arith.constant 0 : i32
    %c0_i32_0 = arith.constant 0 : i32
    %c0_i32_1 = arith.constant 0 : i32
    return %arg0, %c0_i32, %c0_i32_0 : i32, i32, i32
  }
  func.func @transform_1(%arg0: i32) -> (i32, i32) {
    %c0_i32 = arith.constant 0 : i32
    %c0_i32_0 = arith.constant 0 : i32
    %c0_i32_1 = arith.constant 0 : i32
    return %c0_i32, %c0_i32_0 : i32, i32
  }
  func.func @transform_2(%arg0: i32) -> (i32, i32) {
    %c0_i32 = arith.constant 0 : i32
    %c0_i32_0 = arith.constant 0 : i32
    %c0_i32_1 = arith.constant 0 : i32
    return %c0_i32, %c0_i32_0 : i32, i32
  }
  func.func @transform_3(%arg0: i32) -> (i32, i32, i32) {
    %c0_i32 = arith.constant 0 : i32
    %c0_i32_0 = arith.constant 0 : i32
    %c0_i32_1 = arith.constant 0 : i32
    return %arg0, %c0_i32, %c0_i32_0 : i32, i32, i32
  }
}

module attributes {stable_mosaic.version = 11 : i64} {
  func.func @_head_kernel(%arg0: i32, %arg1: memref<2x1792xbf16, #tpu.memory_space<vmem>>, %arg2: memref<1792x512xbf16, #tpu.memory_space<vmem>>, %arg3: memref<1x512xf32, #tpu.memory_space<vmem>>, %arg4: memref<1x512xf32, #tpu.memory_space<vmem>>, %arg5: memref<1x1xf32, #tpu.memory_space<vmem>>, %arg6: memref<2x1xf32, #tpu.memory_space<vmem>>, %arg7: memref<2x512xf32, #tpu.memory_space<vmem>>) attributes {dimension_semantics = [#tpu.dimension_semantics<arbitrary>], iteration_bounds = array<i64: 3>, scalar_prefetch = 0 : i64, scratch_operands = 1 : i64, tpu.core_type = #tpu.core_type<tc>, window_params = [{transform_indices = @transform_0, window_bounds = array<i64: 2, 1792>}, {transform_indices = @transform_1, window_bounds = array<i64: 1792, 512>}, {pipeline_mode = #tpu.pipeline_mode<synchronous>, transform_indices = @transform_2, window_bounds = array<i64: 1, 512>}, {pipeline_mode = #tpu.pipeline_mode<synchronous>, transform_indices = @transform_3, window_bounds = array<i64: 1, 512>}, {pipeline_mode = #tpu.pipeline_mode<synchronous>, transform_indices = @transform_4, window_bounds = array<i64: 1, 1>}, {pipeline_mode = #tpu.pipeline_mode<synchronous>, transform_indices = @transform_5, window_bounds = array<i64: 2, 1>}]} {
    %c0_i32 = arith.constant 0 : i32
    %0 = arith.cmpi eq, %arg0, %c0_i32 : i32
    %1 = arith.extui %0 : i1 to i32
    %c0_i32_0 = arith.constant 0 : i32
    %2 = arith.cmpi ne, %1, %c0_i32_0 : i32
    scf.if %2 {
      %cst_9 = arith.constant 0.000000e+00 : f32
      %12 = vector.broadcast %cst_9 : f32 to vector<2x512xf32>
      %c0_10 = arith.constant 0 : index
      %c0_11 = arith.constant 0 : index
      %13 = vector.load %arg7[%c0_10, %c0_11] : memref<2x512xf32, #tpu.memory_space<vmem>>, vector<2x512xf32>
      tpu.vector_store %arg7[%c0_10, %c0_11], %12 {strides = array<i32>} : memref<2x512xf32, #tpu.memory_space<vmem>>, vector<2x512xf32>,
    } else {
    }
    %c0 = arith.constant 0 : index
    %c0_1 = arith.constant 0 : index
    %3 = vector.load %arg7[%c0, %c0_1] : memref<2x512xf32, #tpu.memory_space<vmem>>, vector<2x512xf32>
    %c0_2 = arith.constant 0 : index
    %c0_3 = arith.constant 0 : index
    %4 = vector.load %arg1[%c0_2, %c0_3] : memref<2x1792xbf16, #tpu.memory_space<vmem>>, vector<2x1792xbf16>
    %c0_4 = arith.constant 0 : index
    %c0_5 = arith.constant 0 : index
    %5 = vector.load %arg2[%c0_4, %c0_5] : memref<1792x512xbf16, #tpu.memory_space<vmem>>, vector<1792x512xbf16>
    %cst = arith.constant dense<0.000000e+00> : vector<2x512xf32>
    %6 = tpu.matmul %4, %5, %cst {dimension_numbers = #tpu.dot_dimension_numbers<[1], [0], [0], [1], [0, 0, 1, 1], [], []>} : vector<2x1792xbf16>, vector<1792x512xbf16>, vector<2x512xf32> -> vector<2x512xf32>
    %7 = arith.addf %3, %6 : vector<2x512xf32>
    %c0_6 = arith.constant 0 : index
    %c0_7 = arith.constant 0 : index
    %8 = vector.load %arg7[%c0_6, %c0_7] : memref<2x512xf32, #tpu.memory_space<vmem>>, vector<2x512xf32>
    tpu.vector_store %arg7[%c0_6, %c0_7], %7 {strides = array<i32>} : memref<2x512xf32, #tpu.memory_space<vmem>>, vector<2x512xf32>,
    %c2_i32 = arith.constant 2 : i32
    %9 = arith.cmpi eq, %arg0, %c2_i32 : i32
    %10 = arith.extui %9 : i1 to i32
    %c0_i32_8 = arith.constant 0 : i32
    %11 = arith.cmpi ne, %10, %c0_i32_8 : i32
    scf.if %11 {
      %c0_9 = arith.constant 0 : index
      %c0_10 = arith.constant 0 : index
      %12 = vector.load %arg7[%c0_9, %c0_10] : memref<2x512xf32, #tpu.memory_space<vmem>>, vector<2x512xf32>
      %c0_11 = arith.constant 0 : index
      %c0_12 = arith.constant 0 : index
      %13 = vector.load %arg3[%c0_11, %c0_12] : memref<1x512xf32, #tpu.memory_space<vmem>>, vector<1x512xf32>
      %14 = vector.broadcast %13 : vector<1x512xf32> to vector<2x512xf32>
      %15 = arith.addf %12, %14 : vector<2x512xf32>
      %cst_13 = arith.constant 0.000000e+00 : f32
      %16 = vector.broadcast %cst_13 : f32 to vector<2x512xf32>
      %17 = arith.maximumf %15, %16 : vector<2x512xf32>
      %c0_14 = arith.constant 0 : index
      %c0_15 = arith.constant 0 : index
      %18 = vector.load %arg4[%c0_14, %c0_15] : memref<1x512xf32, #tpu.memory_space<vmem>>, vector<1x512xf32>
      %19 = vector.broadcast %18 : vector<1x512xf32> to vector<2x512xf32>
      %20 = arith.mulf %17, %19 : vector<2x512xf32>
      %cst_16 = arith.constant dense<0.000000e+00> : vector<2xf32>
      %21 = vector.multi_reduction <add>, %20, %cst_16 [1] : vector<2x512xf32> to vector<2xf32>
      %22 = vector.shape_cast %21 : vector<2xf32> to vector<2x1xf32>
      %c0_17 = arith.constant 0 : index
      %c0_18 = arith.constant 0 : index
      %23 = vector.load %arg5[%c0_17, %c0_18] : memref<1x1xf32, #tpu.memory_space<vmem>>, vector<1x1xf32>
      %24 = vector.extract %23[0, 0] : f32 from vector<1x1xf32>
      %25 = vector.broadcast %24 : f32 to vector<2x1xf32>
      %26 = arith.addf %22, %25 : vector<2x1xf32>
      %c0_19 = arith.constant 0 : index
      %c0_20 = arith.constant 0 : index
      %27 = vector.load %arg6[%c0_19, %c0_20] : memref<2x1xf32, #tpu.memory_space<vmem>>, vector<2x1xf32>
      tpu.vector_store %arg6[%c0_19, %c0_20], %26 {strides = array<i32>} : memref<2x1xf32, #tpu.memory_space<vmem>>, vector<2x1xf32>,
    } else {
    }
    return
  }
  func.func @transform_0(%arg0: i32) -> (i32, i32) {
    %c0_i32 = arith.constant 0 : i32
    %c0_i32_0 = arith.constant 0 : i32
    return %c0_i32, %arg0 : i32, i32
  }
  func.func @transform_1(%arg0: i32) -> (i32, i32) {
    %c0_i32 = arith.constant 0 : i32
    %c0_i32_0 = arith.constant 0 : i32
    return %arg0, %c0_i32 : i32, i32
  }
  func.func @transform_2(%arg0: i32) -> (i32, i32) {
    %c0_i32 = arith.constant 0 : i32
    %c0_i32_0 = arith.constant 0 : i32
    %c0_i32_1 = arith.constant 0 : i32
    return %c0_i32, %c0_i32_0 : i32, i32
  }
  func.func @transform_3(%arg0: i32) -> (i32, i32) {
    %c0_i32 = arith.constant 0 : i32
    %c0_i32_0 = arith.constant 0 : i32
    %c0_i32_1 = arith.constant 0 : i32
    return %c0_i32, %c0_i32_0 : i32, i32
  }
  func.func @transform_4(%arg0: i32) -> (i32, i32) {
    %c0_i32 = arith.constant 0 : i32
    %c0_i32_0 = arith.constant 0 : i32
    %c0_i32_1 = arith.constant 0 : i32
    return %c0_i32, %c0_i32_0 : i32, i32
  }
  func.func @transform_5(%arg0: i32) -> (i32, i32) {
    %c0_i32 = arith.constant 0 : i32
    %c0_i32_0 = arith.constant 0 : i32
    %c0_i32_1 = arith.constant 0 : i32
    return %c0_i32, %c0_i32_0 : i32, i32
  }
}

</mosaic_0001>

<llo_original>
// kernel: _lambda_.4
$region0: #{_lambda_.4}
  #allocation0 [shape = 'u32[]', space=smem, size = 0x4, offset = 0x4, fixed_abs, tag = 'smem constant byte address 0x4 - core index']
  #allocation1 [shape = 'u32[144,128]{1,0:T(1,128)}', space=vmem, size = 0x12000, scoped, tag = 'internal scratch']
  %s0 = inlined_call_operand.vmem [shape: bf16[2,320,640], index: 0, kind: input, shape index: {}]
  %s1 = inlined_call_operand.vmem [shape: bf16[32,320], index: 1, kind: input, shape index: {}]
  %s2 = inlined_call_operand.vmem [shape: f32[32,1], index: 2, kind: input, shape index: {}]
  %s3 = inlined_call_operand.vmem [shape: bf16[2,32,640], index: 3, kind: output, shape index: {}]
  %s4 = sld [smem:[#allocation0]]
  $region45: #{_lambda_.4} parent=0
    _
  %s6 = ssub.s32 1, %s4
  %s7 = scalar_select 0, %s6, %s4
  loop: start=0, step=1, limit=4
  $region2: #{_lambda_.4} parent=0 // loop_pre_header
    _
  $region3: #{_lambda_.4} parent=0 // loop_header
    %s9 = sphi 0, %s13
    %p10 = scmp.ge.s32.totalorder %s9, 4
    %s19 = sphi 0, %s21
    %s22 = sphi 0, %s19
    %s23 = sphi 0, %s22
    %s39 = sphi 0, %s23
    %s43 = sphi 0, %s43
    %s45 = sphi 0, %s43
    %s46 = sphi 0, %s45
    %s60 = sphi 0, %s46
    %s64 = sphi 0, %s64
    %s66 = sphi 0, %s64
    %s67 = sphi 0, %s66
    %s81 = sphi 0, %s67
    %s87 = sphi 0, %s89
    %s90 = sphi 0, %s87
    %s91 = sphi 0, %s90
    %s107 = sphi 0, %s91
  $region4: #{_lambda_.4} parent=0 // loop_header_branch
    %12 = sbr.rel (%p10) target = $region8
  $region5: #{_lambda_.4} parent=0 // loop_body
    %s14 = ssub.s32 %s9, 1
    %s15 = ssub.s32 %s9, 2
    %s16 = sadd.s32 %s9, 1
    %s17 = ssub.s32 %s9, %s16
    %p18 = scmp.eq.s32.totalorder %s17, 0
    %s20 = sadd.s32 %s19, 1
    %s21 = scalar_select %p18, %s19, %s20
    %p24 = pneg %p18
    %p25 = scmp.eq.s32.totalorder %s9, 1
    %p26 = por %p24, %p25
    %p27 = scmp.ne.s32.totalorder %s19, %s22
    %p28 = scmp.eq.s32.totalorder %s9, 0
    %p29 = por %p27, %p28
    %p30 = scmp.ne.s32.totalorder %s19, %s22
    %p31 = scmp.eq.s32.totalorder %s14, 1
    %p32 = por %p30, %p31
    %p33 = scmp.ne.s32.totalorder %s22, %s23
    %p34 = scmp.eq.s32.totalorder %s14, 0
    %p35 = por %p33, %p34
    %p36 = scmp.ne.s32.totalorder %s22, %s23
    %p37 = scmp.eq.s32.totalorder %s15, 1
    %p38 = por %p36, %p37
    %p40 = scmp.ne.s32.totalorder %s23, %s39
    %p41 = scmp.eq.s32.totalorder %s15, 0
    %p42 = por %p40, %p41
    %s44 = sadd.s32 %s43, 1
    %p47 = scmp.eq.s32.totalorder %s9, 1
    %p48 = scmp.ne.s32.totalorder %s43, %s45
    %p49 = scmp.eq.s32.totalorder %s9, 0
    %p50 = por %p48, %p49
    %p51 = scmp.ne.s32.totalorder %s43, %s45
    %p52 = scmp.eq.s32.totalorder %s14, 1
    %p53 = por %p51, %p52
    %p54 = scmp.ne.s32.totalorder %s45, %s46
    %p55 = scmp.eq.s32.totalorder %s14, 0
    %p56 = por %p54, %p55
    %p57 = scmp.ne.s32.totalorder %s45, %s46
    %p58 = scmp.eq.s32.totalorder %s15, 1
    %p59 = por %p57, %p58
    %p61 = scmp.ne.s32.totalorder %s46, %s60
    %p62 = scmp.eq.s32.totalorder %s15, 0
    %p63 = por %p61, %p62
    %s65 = sadd.s32 %s64, 1
    %p68 = scmp.eq.s32.totalorder %s9, 1
    %p69 = scmp.ne.s32.totalorder %s64, %s66
    %p70 = scmp.eq.s32.totalorder %s9, 0
    %p71 = por %p69, %p70
    %p72 = scmp.ne.s32.totalorder %s64, %s66
    %p73 = scmp.eq.s32.totalorder %s14, 1
    %p74 = por %p72, %p73
    %p75 = scmp.ne.s32.totalorder %s66, %s67
    %p76 = scmp.eq.s32.totalorder %s14, 0
    %p77 = por %p75, %p76
    %p78 = scmp.ne.s32.totalorder %s66, %s67
    %p79 = scmp.eq.s32.totalorder %s15, 1
    %p80 = por %p78, %p79
    %p82 = scmp.ne.s32.totalorder %s67, %s81
    %p83 = scmp.eq.s32.totalorder %s15, 0
    %p84 = por %p82, %p83
    %s85 = ssub.s32 %s9, %s16
    %p86 = scmp.eq.s32.totalorder %s85, 0
    %s88 = sadd.s32 %s87, 1
    %s89 = scalar_select %p86, %s87, %s88
    %p92 = pneg %p86
    %p93 = scmp.eq.s32.totalorder %s9, 1
    %p94 = por %p92, %p93
    %p95 = scmp.ne.s32.totalorder %s87, %s90
    %p96 = scmp.eq.s32.totalorder %s9, 0
    %p97 = por %p95, %p96
    %p98 = scmp.ne.s32.totalorder %s87, %s90
    %p99 = scmp.eq.s32.totalorder %s14, 1
    %p100 = por %p98, %p99
    %p101 = scmp.ne.s32.totalorder %s90, %s91
    %p102 = scmp.eq.s32.totalorder %s14, 0
    %p103 = por %p101, %p102
    %p104 = scmp.ne.s32.totalorder %s90, %s91
    %p105 = scmp.eq.s32.totalorder %s15, 1
    %p106 = por %p104, %p105
    %p108 = scmp.ne.s32.totalorder %s91, %s107
    %p109 = scmp.eq.s32.totalorder %s15, 0
    %p110 = por %p108, %p109
    %p111 = scmp.le.s32.totalorder 1, %s9
    %p112 = scmp.lt.s32.totalorder %s9, 3
    %p113 = pnand %p111, %p112
    %p114 = pneg %p113
    // Predicated region
    $region9: #{_lambda_.4} parent=5 // pred_check
      _
    $region10: #{_lambda_.4} parent=5 // pred_check_branch
      %116 = sbr.rel (%p113) target = $region12
    $region11: #{_lambda_.4} parent=5 // pred_region
      %s117 = ssub.s32 %s9, 1
      // Predicated region
      $region13: #{_lambda_.4} parent=11 // pred_check
        %p118 = pneg %p56
      $region14: #{_lambda_.4} parent=11 // pred_check_branch
        %120 = sbr.rel (%p118) target = $region16
      $region15: #{_lambda_.4} parent=11 // pred_region
        _
      $region16: #{_lambda_.4} parent=11 // pred_fallthru
        _
      // Predicated region
      $region17: #{_lambda_.4} parent=11 // pred_check
        %p121 = pneg %p77
      $region18: #{_lambda_.4} parent=11 // pred_check_branch
        %123 = sbr.rel (%p121) target = $region20
      $region19: #{_lambda_.4} parent=11 // pred_region
        _
      $region20: #{_lambda_.4} parent=11 // pred_fallthru
        _
    $region12: #{_lambda_.4} parent=5 // pred_fallthru
      _
    %p124 = scmp.lt.s32.totalorder %s9, 2
    // Predicated region
    $region21: #{_lambda_.4} parent=5 // pred_check
      %p125 = pneg %p124
    $region22: #{_lambda_.4} parent=5 // pred_check_branch
      %127 = sbr.rel (%p125) target = $region24
    $region23: #{_lambda_.4} parent=5 // pred_region
      // Predicated region
      $region25: #{_lambda_.4} parent=23 // pred_check
        %p128 = pneg %p29
      $region26: #{_lambda_.4} parent=23 // pred_check_branch
        %130 = sbr.rel (%p128) target = $region28
      $region27: #{_lambda_.4} parent=23 // pred_region
        %p131 = scmp.lt.s32.totalorder %s9, 1
        %s132 = scalar_select %p131, %s9, 1
        %s133 = smul.addr %s132, 200
        %s134 = smul.addr %s133, 4
        %s135 = scalar_lea.vmem %s0, %s134
      $region28: #{_lambda_.4} parent=23 // pred_fallthru
        _
    $region24: #{_lambda_.4} parent=5 // pred_fallthru
      _
    %p136 = scmp.le.s32.totalorder 1, %s9
    %p137 = scmp.lt.s32.totalorder %s9, 3
    %p138 = pnand %p136, %p137
    %p139 = pneg %p138
    // Predicated region
    $region29: #{_lambda_.4} parent=5 // pred_check
      _
    $region30: #{_lambda_.4} parent=5 // pred_check_branch
      %141 = sbr.rel (%p138) target = $region32
    $region31: #{_lambda_.4} parent=5 // pred_region
      %s142 = ssub.s32 %s9, 1
      %p143 = scmp.lt.s32.totalorder %s14, 1
      %s144 = scalar_select %p143, %s14, 1
      %s145 = smul.addr %s144, 200
      %s146 = smul.addr %s145, 4
      %s147 = scalar_lea.vmem %s0, %s146
      %p148 = pneg %p35
      %p149 = pneg %p32
      %p150 = pneg %p56
      %p151 = pneg %p53
      %p152 = pneg %p77
      %p153 = pneg %p74
      %p154 = pneg %p103
      %p155 = pneg %p100
      %p156 = scmp.lt.s32.totalorder %s14, 1
      %s157 = scalar_select %p156, %s14, 1
      %s158 = smul.addr %s157, 20
      %s159 = smul.addr %s158, 4
      %s160 = scalar_lea.vmem %s3, %s159
      %p161 = scmp.lt.s32.totalorder %s14, 1
      %s162 = scalar_select %p161, %s14, 1
      %s163 = smul.addr %s162, 200
      %s164 = smul.addr %s163, 4
      %s165 = scalar_lea.vmem %s0, %s164
      %p166 = scmp.lt.s32.totalorder %s14, 1
      %s167 = scalar_select %p166, %s14, 1
      %s168 = smul.addr %s167, 20
      %s169 = smul.addr %s168, 4
      %s170 = scalar_lea.vmem %s3, %s169
      %v172 = vld [vmem:[%s1] sm:$0xff]
      %v173 = vld [vmem:[%s1 + $0x8] sm:$0xf]
      %v174 = vld [vmem:[%s1 + $0xc] sm:$0xff]
      %v175 = vld [vmem:[%s1 + $0x14] sm:$0xf]
      %v176 = vld [vmem:[%s1 + $0x18] sm:$0xff]
      %v177 = vld [vmem:[%s1 + $0x20] sm:$0xf]
      %v178 = vld [vmem:[%s1 + $0x24] sm:$0xff]
      %v179 = vld [vmem:[%s1 + $0x2c] sm:$0xf]
      %v180 = vld [vmem:[%s165] sm:$0xff]
      %v181 = vld [vmem:[%s165 + $0x8] sm:$0xff]
      %v182 = vld [vmem:[%s165 + $0x10] sm:$0xf]
      %v183 = vld [vmem:[%s165 + $0x14] sm:$0xff]
      %v184 = vld [vmem:[%s165 + $0x1c] sm:$0xff]
      %v185 = vld [vmem:[%s165 + $0x24] sm:$0xf]
      %v186 = vld [vmem:[%s165 + $0x28] sm:$0xff]
      %v187 = vld [vmem:[%s165 + $0x30] sm:$0xff]
      %v188 = vld [vmem:[%s165 + $0x38] sm:$0xf]
      %v189 = vld [vmem:[%s165 + $0x3c] sm:$0xff]
      %v190 = vld [vmem:[%s165 + $0x44] sm:$0xff]
      %v191 = vld [vmem:[%s165 + $0x4c] sm:$0xf]
      %v192 = vld [vmem:[%s165 + $0x50] sm:$0xff]
      %v193 = vld [vmem:[%s165 + $0x58] sm:$0xff]
      %v194 = vld [vmem:[%s165 + $0x60] sm:$0xf]
      %v195 = vld [vmem:[%s165 + $0x64] sm:$0xff]
      %v196 = vld [vmem:[%s165 + $0x6c] sm:$0xff]
      %v197 = vld [vmem:[%s165 + $0x74] sm:$0xf]
      %v198 = vld [vmem:[%s165 + $0x78] sm:$0xff]
      %v199 = vld [vmem:[%s165 + $0x80] sm:$0xff]
      %v200 = vld [vmem:[%s165 + $0x88] sm:$0xf]
      %v201 = vld [vmem:[%s165 + $0x8c] sm:$0xff]
      %v202 = vld [vmem:[%s165 + $0x94] sm:$0xff]
      %v203 = vld [vmem:[%s165 + $0x9c] sm:$0xf]
      %v204 = vld [vmem:[%s165 + $0xa0] sm:$0xff]
      %v205 = vld [vmem:[%s165 + $0xa8] sm:$0xff]
      %v206 = vld [vmem:[%s165 + $0xb0] sm:$0xf]
      %v207 = vld [vmem:[%s165 + $0xb4] sm:$0xff]
      %v208 = vld [vmem:[%s165 + $0xbc] sm:$0xff]
      %v209 = vld [vmem:[%s165 + $0xc4] sm:$0xf]
      %v210 = vld [vmem:[%s165 + $0xc8] sm:$0xff]
      %v211 = vld [vmem:[%s165 + $0xd0] sm:$0xff]
      %v212 = vld [vmem:[%s165 + $0xd8] sm:$0xf]
      %v213 = vld [vmem:[%s165 + $0xdc] sm:$0xff]
      %v214 = vld [vmem:[%s165 + $0xe4] sm:$0xff]
      %v215 = vld [vmem:[%s165 + $0xec] sm:$0xf]
      %v216 = vld [vmem:[%s165 + $0xf0] sm:$0xff]
      %v217 = vld [vmem:[%s165 + $0xf8] sm:$0xff]
      %v218 = vld [vmem:[%s165 + $0x100] sm:$0xf]
      %v219 = vld [vmem:[%s165 + $0x104] sm:$0xff]
      %v220 = vld [vmem:[%s165 + $0x10c] sm:$0xff]
      %v221 = vld [vmem:[%s165 + $0x114] sm:$0xf]
      %v222 = vld [vmem:[%s165 + $0x118] sm:$0xff]
      %v223 = vld [vmem:[%s165 + $0x120] sm:$0xff]
      %v224 = vld [vmem:[%s165 + $0x128] sm:$0xf]
      %v225 = vld [vmem:[%s165 + $0x12c] sm:$0xff]
      %v226 = vld [vmem:[%s165 + $0x134] sm:$0xff]
      %v227 = vld [vmem:[%s165 + $0x13c] sm:$0xf]
      %v228 = vld [vmem:[%s165 + $0x140] sm:$0xff]
      %v229 = vld [vmem:[%s165 + $0x148] sm:$0xff]
      %v230 = vld [vmem:[%s165 + $0x150] sm:$0xf]
      %v231 = vld [vmem:[%s165 + $0x154] sm:$0xff]
      %v232 = vld [vmem:[%s165 + $0x15c] sm:$0xff]
      %v233 = vld [vmem:[%s165 + $0x164] sm:$0xf]
      %v234 = vld [vmem:[%s165 + $0x168] sm:$0xff]
      %v235 = vld [vmem:[%s165 + $0x170] sm:$0xff]
      %v236 = vld [vmem:[%s165 + $0x178] sm:$0xf]
      %v237 = vld [vmem:[%s165 + $0x17c] sm:$0xff]
      %v238 = vld [vmem:[%s165 + $0x184] sm:$0xff]
      %v239 = vld [vmem:[%s165 + $0x18c] sm:$0xf]
      %v240 = vld [vmem:[%s165 + $0x190] sm:$0xff]
      %v241 = vld [vmem:[%s165 + $0x198] sm:$0xff]
      %v242 = vld [vmem:[%s165 + $0x1a0] sm:$0xf]
      %v243 = vld [vmem:[%s165 + $0x1a4] sm:$0xff]
      %v244 = vld [vmem:[%s165 + $0x1ac] sm:$0xff]
      %v245 = vld [vmem:[%s165 + $0x1b4] sm:$0xf]
      %v246 = vld [vmem:[%s165 + $0x1b8] sm:$0xff]
      %v247 = vld [vmem:[%s165 + $0x1c0] sm:$0xff]
      %v248 = vld [vmem:[%s165 + $0x1c8] sm:$0xf]
      %v249 = vld [vmem:[%s165 + $0x1cc] sm:$0xff]
      %v250 = vld [vmem:[%s165 + $0x1d4] sm:$0xff]
      %v251 = vld [vmem:[%s165 + $0x1dc] sm:$0xf]
      %v252 = vld [vmem:[%s165 + $0x1e0] sm:$0xff]
      %v253 = vld [vmem:[%s165 + $0x1e8] sm:$0xff]
      %v254 = vld [vmem:[%s165 + $0x1f0] sm:$0xf]
      %v255 = vld [vmem:[%s165 + $0x1f4] sm:$0xff]
      %v256 = vld [vmem:[%s165 + $0x1fc] sm:$0xff]
      %v257 = vld [vmem:[%s165 + $0x204] sm:$0xf]
      %v258 = vld [vmem:[%s165 + $0x208] sm:$0xff]
      %v259 = vld [vmem:[%s165 + $0x210] sm:$0xff]
      %v260 = vld [vmem:[%s165 + $0x218] sm:$0xf]
      %v261 = vld [vmem:[%s165 + $0x21c] sm:$0xff]
      %v262 = vld [vmem:[%s165 + $0x224] sm:$0xff]
      %v263 = vld [vmem:[%s165 + $0x22c] sm:$0xf]
      %v264 = vld [vmem:[%s165 + $0x230] sm:$0xff]
      %v265 = vld [vmem:[%s165 + $0x238] sm:$0xff]
      %v266 = vld [vmem:[%s165 + $0x240] sm:$0xf]
      %v267 = vld [vmem:[%s165 + $0x244] sm:$0xff]
      %v268 = vld [vmem:[%s165 + $0x24c] sm:$0xff]
      %v269 = vld [vmem:[%s165 + $0x254] sm:$0xf]
      %v270 = vld [vmem:[%s165 + $0x258] sm:$0xff]
      %v271 = vld [vmem:[%s165 + $0x260] sm:$0xff]
      %v272 = vld [vmem:[%s165 + $0x268] sm:$0xf]
      %v273 = vld [vmem:[%s165 + $0x26c] sm:$0xff]
      %v274 = vld [vmem:[%s165 + $0x274] sm:$0xff]
      %v275 = vld [vmem:[%s165 + $0x27c] sm:$0xf]
      %v276 = vld [vmem:[%s165 + $0x280] sm:$0xff]
      %v277 = vld [vmem:[%s165 + $0x288] sm:$0xff]
      %v278 = vld [vmem:[%s165 + $0x290] sm:$0xf]
      %v279 = vld [vmem:[%s165 + $0x294] sm:$0xff]
      %v280 = vld [vmem:[%s165 + $0x29c] sm:$0xff]
      %v281 = vld [vmem:[%s165 + $0x2a4] sm:$0xf]
      %v282 = vld [vmem:[%s165 + $0x2a8] sm:$0xff]
      %v283 = vld [vmem:[%s165 + $0x2b0] sm:$0xff]
      %v284 = vld [vmem:[%s165 + $0x2b8] sm:$0xf]
      %v285 = vld [vmem:[%s165 + $0x2bc] sm:$0xff]
      %v286 = vld [vmem:[%s165 + $0x2c4] sm:$0xff]
      %v287 = vld [vmem:[%s165 + $0x2cc] sm:$0xf]
      %v288 = vld [vmem:[%s165 + $0x2d0] sm:$0xff]
      %v289 = vld [vmem:[%s165 + $0x2d8] sm:$0xff]
      %v290 = vld [vmem:[%s165 + $0x2e0] sm:$0xf]
      %v291 = vld [vmem:[%s165 + $0x2e4] sm:$0xff]
      %v292 = vld [vmem:[%s165 + $0x2ec] sm:$0xff]
      %v293 = vld [vmem:[%s165 + $0x2f4] sm:$0xf]
      %v294 = vld [vmem:[%s165 + $0x2f8] sm:$0xff]
      %v295 = vld [vmem:[%s165 + $0x300] sm:$0xff]
      %v296 = vld [vmem:[%s165 + $0x308] sm:$0xf]
      %v297 = vld [vmem:[%s165 + $0x30c] sm:$0xff]
      %v298 = vld [vmem:[%s165 + $0x314] sm:$0xff]
      %v299 = vld [vmem:[%s165 + $0x31c] sm:$0xf]
      %v300 = vld [vmem:[%s2] sm:$0xff]
      %v301 = vld [vmem:[%s2 + $0x8] sm:$0xff]
      %v302 = vld [vmem:[%s2 + $0x10] sm:$0xff]
      %v303 = vld [vmem:[%s2 + $0x18] sm:$0xff]
      %305 = vset.pattern.permute.xlu0 0
      %306 = vperm.xlu0 %305, %v300
      %v307 = vpop.permute.xlu0 %306
      %310 = vset.pattern.permute.xlu0 0
      %311 = vperm.xlu0 %310, %v301
      %v312 = vpop.permute.xlu0 %311
      %315 = vset.pattern.permute.xlu0 0
      %316 = vperm.xlu0 %315, %v302
      %v317 = vpop.permute.xlu0 %316
      %320 = vset.pattern.permute.xlu0 0
      %321 = vperm.xlu0 %320, %v303
      %v322 = vpop.permute.xlu0 %321
      %v332 = vunpack.c.l.b16 %v172
      %v333 = vunpack.c.h.b16 %v172
      %v334 = vunpack.c.l.b16 %v173
      %v335 = vunpack.c.l.b16 %v174
      %v336 = vunpack.c.h.b16 %v174
      %v337 = vunpack.c.l.b16 %v175
      %v338 = vunpack.c.l.b16 %v176
      %v339 = vunpack.c.h.b16 %v176
      %v340 = vunpack.c.l.b16 %v177
      %v341 = vunpack.c.l.b16 %v178
      %v342 = vunpack.c.h.b16 %v178
      %v343 = vunpack.c.l.b16 %v179
      %v344 = vpack.c.b16 %v335, %v332
      %v345 = vpack.c.b16 %v336, %v333
      %v346 = vpack.c.b16 %v337, %v334
      %v347 = vpack.c.b16 %v341, %v338
      %v348 = vpack.c.b16 %v342, %v339
      %v349 = vpack.c.b16 %v343, %v340
      %v474 = vunpack.c.l.b16 %v180
      %v475 = vunpack.c.h.b16 %v180
      %v476 = vunpack.c.l.b16 %v181
      %v477 = vunpack.c.h.b16 %v181
      %v478 = vunpack.c.l.b16 %v182
      %v479 = vunpack.c.l.b16 %v183
      %v480 = vunpack.c.h.b16 %v183
      %v481 = vunpack.c.l.b16 %v184
      %v482 = vunpack.c.h.b16 %v184
      %v483 = vunpack.c.l.b16 %v185
      %v484 = vunpack.c.l.b16 %v186
      %v485 = vunpack.c.h.b16 %v186
      %v486 = vunpack.c.l.b16 %v187
      %v487 = vunpack.c.h.b16 %v187
      %v488 = vunpack.c.l.b16 %v188
      %v489 = vunpack.c.l.b16 %v189
      %v490 = vunpack.c.h.b16 %v189
      %v491 = vunpack.c.l.b16 %v190
      %v492 = vunpack.c.h.b16 %v190
      %v493 = vunpack.c.l.b16 %v191
      %v494 = vunpack.c.l.b16 %v192
      %v495 = vunpack.c.h.b16 %v192
      %v496 = vunpack.c.l.b16 %v193
      %v497 = vunpack.c.h.b16 %v193
      %v498 = vunpack.c.l.b16 %v194
      %v499 = vunpack.c.l.b16 %v195
      %v500 = vunpack.c.h.b16 %v195
      %v501 = vunpack.c.l.b16 %v196
      %v502 = vunpack.c.h.b16 %v196
      %v503 = vunpack.c.l.b16 %v197
      %v504 = vunpack.c.l.b16 %v198
      %v505 = vunpack.c.h.b16 %v198
      %v506 = vunpack.c.l.b16 %v199
      %v507 = vunpack.c.h.b16 %v199
      %v508 = vunpack.c.l.b16 %v200
      %v509 = vunpack.c.l.b16 %v201
      %v510 = vunpack.c.h.b16 %v201
      %v511 = vunpack.c.l.b16 %v202
      %v512 = vunpack.c.h.b16 %v202
      %v513 = vunpack.c.l.b16 %v203
      %v514 = vunpack.c.l.b16 %v204
      %v515 = vunpack.c.h.b16 %v204
      %v516 = vunpack.c.l.b16 %v205
      %v517 = vunpack.c.h.b16 %v205
      %v518 = vunpack.c.l.b16 %v206
      %v519 = vunpack.c.l.b16 %v207
      %v520 = vunpack.c.h.b16 %v207
      %v521 = vunpack.c.l.b16 %v208
      %v522 = vunpack.c.h.b16 %v208
      %v523 = vunpack.c.l.b16 %v209
      %v524 = vunpack.c.l.b16 %v210
      %v525 = vunpack.c.h.b16 %v210
      %v526 = vunpack.c.l.b16 %v211
      %v527 = vunpack.c.h.b16 %v211
      %v528 = vunpack.c.l.b16 %v212
      %v529 = vunpack.c.l.b16 %v213
      %v530 = vunpack.c.h.b16 %v213
      %v531 = vunpack.c.l.b16 %v214
      %v532 = vunpack.c.h.b16 %v214
      %v533 = vunpack.c.l.b16 %v215
      %v534 = vunpack.c.l.b16 %v216
      %v535 = vunpack.c.h.b16 %v216
      %v536 = vunpack.c.l.b16 %v217
      %v537 = vunpack.c.h.b16 %v217
      %v538 = vunpack.c.l.b16 %v218
      %v539 = vunpack.c.l.b16 %v219
      %v540 = vunpack.c.h.b16 %v219
      %v541 = vunpack.c.l.b16 %v220
      %v542 = vunpack.c.h.b16 %v220
      %v543 = vunpack.c.l.b16 %v221
      %v544 = vunpack.c.l.b16 %v222
      %v545 = vunpack.c.h.b16 %v222
      %v546 = vunpack.c.l.b16 %v223
      %v547 = vunpack.c.h.b16 %v223
      %v548 = vunpack.c.l.b16 %v224
      %v549 = vunpack.c.l.b16 %v225
      %v550 = vunpack.c.h.b16 %v225
      %v551 = vunpack.c.l.b16 %v226
      %v552 = vunpack.c.h.b16 %v226
      %v553 = vunpack.c.l.b16 %v227
      %v554 = vunpack.c.l.b16 %v228
      %v555 = vunpack.c.h.b16 %v228
      %v556 = vunpack.c.l.b16 %v229
      %v557 = vunpack.c.h.b16 %v229
      %v558 = vunpack.c.l.b16 %v230
      %v559 = vunpack.c.l.b16 %v231
      %v560 = vunpack.c.h.b16 %v231
      %v561 = vunpack.c.l.b16 %v232
      %v562 = vunpack.c.h.b16 %v232
      %v563 = vunpack.c.l.b16 %v233
      %v564 = vunpack.c.l.b16 %v234
      %v565 = vunpack.c.h.b16 %v234
      %v566 = vunpack.c.l.b16 %v235
      %v567 = vunpack.c.h.b16 %v235
      %v568 = vunpack.c.l.b16 %v236
      %v569 = vunpack.c.l.b16 %v237
      %v570 = vunpack.c.h.b16 %v237
      %v571 = vunpack.c.l.b16 %v238
      %v572 = vunpack.c.h.b16 %v238
      %v573 = vunpack.c.l.b16 %v239
      %v574 = vunpack.c.l.b16 %v240
      %v575 = vunpack.c.h.b16 %v240
      %v576 = vunpack.c.l.b16 %v241
      %v577 = vunpack.c.h.b16 %v241
      %v578 = vunpack.c.l.b16 %v242
      %v579 = vunpack.c.l.b16 %v243
      %v580 = vunpack.c.h.b16 %v243
      %v581 = vunpack.c.l.b16 %v244
      %v582 = vunpack.c.h.b16 %v244
      %v583 = vunpack.c.l.b16 %v245
      %v584 = vunpack.c.l.b16 %v246
      %v585 = vunpack.c.h.b16 %v246
      %v586 = vunpack.c.l.b16 %v247
      %v587 = vunpack.c.h.b16 %v247
      %v588 = vunpack.c.l.b16 %v248
      %v589 = vunpack.c.l.b16 %v249
      %v590 = vunpack.c.h.b16 %v249
      %v591 = vunpack.c.l.b16 %v250
      %v592 = vunpack.c.h.b16 %v250
      %v593 = vunpack.c.l.b16 %v251
      %v594 = vunpack.c.l.b16 %v252
      %v595 = vunpack.c.h.b16 %v252
      %v596 = vunpack.c.l.b16 %v253
      %v597 = vunpack.c.h.b16 %v253
      %v598 = vunpack.c.l.b16 %v254
      %v599 = vunpack.c.l.b16 %v255
      %v600 = vunpack.c.h.b16 %v255
      %v601 = vunpack.c.l.b16 %v256
      %v602 = vunpack.c.h.b16 %v256
      %v603 = vunpack.c.l.b16 %v257
      %v604 = vunpack.c.l.b16 %v258
      %v605 = vunpack.c.h.b16 %v258
      %v606 = vunpack.c.l.b16 %v259
      %v607 = vunpack.c.h.b16 %v259
      %v608 = vunpack.c.l.b16 %v260
      %v609 = vunpack.c.l.b16 %v261
      %v610 = vunpack.c.h.b16 %v261
      %v611 = vunpack.c.l.b16 %v262
      %v612 = vunpack.c.h.b16 %v262
      %v613 = vunpack.c.l.b16 %v263
      %v614 = vunpack.c.l.b16 %v264
      %v615 = vunpack.c.h.b16 %v264
      %v616 = vunpack.c.l.b16 %v265
      %v617 = vunpack.c.h.b16 %v265
      %v618 = vunpack.c.l.b16 %v266
      %v619 = vunpack.c.l.b16 %v267
      %v620 = vunpack.c.h.b16 %v267
      %v621 = vunpack.c.l.b16 %v268
      %v622 = vunpack.c.h.b16 %v268
      %v623 = vunpack.c.l.b16 %v269
      %v624 = vunpack.c.l.b16 %v270
      %v625 = vunpack.c.h.b16 %v270
      %v626 = vunpack.c.l.b16 %v271
      %v627 = vunpack.c.h.b16 %v271
      %v628 = vunpack.c.l.b16 %v272
      %v629 = vunpack.c.l.b16 %v273
      %v630 = vunpack.c.h.b16 %v273
      %v631 = vunpack.c.l.b16 %v274
      %v632 = vunpack.c.h.b16 %v274
      %v633 = vunpack.c.l.b16 %v275
      %v634 = vunpack.c.l.b16 %v276
      %v635 = vunpack.c.h.b16 %v276
      %v636 = vunpack.c.l.b16 %v277
      %v637 = vunpack.c.h.b16 %v277
      %v638 = vunpack.c.l.b16 %v278
      %v639 = vunpack.c.l.b16 %v279
      %v640 = vunpack.c.h.b16 %v279
      %v641 = vunpack.c.l.b16 %v280
      %v642 = vunpack.c.h.b16 %v280
      %v643 = vunpack.c.l.b16 %v281
      %v644 = vunpack.c.l.b16 %v282
      %v645 = vunpack.c.h.b16 %v282
      %v646 = vunpack.c.l.b16 %v283
      %v647 = vunpack.c.h.b16 %v283
      %v648 = vunpack.c.l.b16 %v284
      %v649 = vunpack.c.l.b16 %v285
      %v650 = vunpack.c.h.b16 %v285
      %v651 = vunpack.c.l.b16 %v286
      %v652 = vunpack.c.h.b16 %v286
      %v653 = vunpack.c.l.b16 %v287
      %v654 = vunpack.c.l.b16 %v288
      %v655 = vunpack.c.h.b16 %v288
      %v656 = vunpack.c.l.b16 %v289
      %v657 = vunpack.c.h.b16 %v289
      %v658 = vunpack.c.l.b16 %v290
      %v659 = vunpack.c.l.b16 %v291
      %v660 = vunpack.c.h.b16 %v291
      %v661 = vunpack.c.l.b16 %v292
      %v662 = vunpack.c.h.b16 %v292
      %v663 = vunpack.c.l.b16 %v293
      %v664 = vunpack.c.l.b16 %v294
      %v665 = vunpack.c.h.b16 %v294
      %v666 = vunpack.c.l.b16 %v295
      %v667 = vunpack.c.h.b16 %v295
      %v668 = vunpack.c.l.b16 %v296
      %v669 = vunpack.c.l.b16 %v297
      %v670 = vunpack.c.h.b16 %v297
      %v671 = vunpack.c.l.b16 %v298
      %v672 = vunpack.c.h.b16 %v298
      %v673 = vunpack.c.l.b16 %v299
      %v674 = vpack.c.b16 %v479, %v474
      %v675 = vpack.c.b16 %v480, %v475
      %v676 = vpack.c.b16 %v481, %v476
      %v677 = vpack.c.b16 %v482, %v477
      %v678 = vpack.c.b16 %v483, %v478
      %v679 = vpack.c.b16 %v489, %v484
      %v680 = vpack.c.b16 %v490, %v485
      %v681 = vpack.c.b16 %v491, %v486
      %v682 = vpack.c.b16 %v492, %v487
      %v683 = vpack.c.b16 %v493, %v488
      %v684 = vpack.c.b16 %v499, %v494
      %v685 = vpack.c.b16 %v500, %v495
      %v686 = vpack.c.b16 %v501, %v496
      %v687 = vpack.c.b16 %v502, %v497
      %v688 = vpack.c.b16 %v503, %v498
      %v689 = vpack.c.b16 %v509, %v504
      %v690 = vpack.c.b16 %v510, %v505
      %v691 = vpack.c.b16 %v511, %v506
      %v692 = vpack.c.b16 %v512, %v507
      %v693 = vpack.c.b16 %v513, %v508
      %v694 = vpack.c.b16 %v519, %v514
      %v695 = vpack.c.b16 %v520, %v515
      %v696 = vpack.c.b16 %v521, %v516
      %v697 = vpack.c.b16 %v522, %v517
      %v698 = vpack.c.b16 %v523, %v518
      %v699 = vpack.c.b16 %v529, %v524
      %v700 = vpack.c.b16 %v530, %v525
      %v701 = vpack.c.b16 %v531, %v526
      %v702 = vpack.c.b16 %v532, %v527
      %v703 = vpack.c.b16 %v533, %v528
      %v704 = vpack.c.b16 %v539, %v534
      %v705 = vpack.c.b16 %v540, %v535
      %v706 = vpack.c.b16 %v541, %v536
      %v707 = vpack.c.b16 %v542, %v537
      %v708 = vpack.c.b16 %v543, %v538
      %v709 = vpack.c.b16 %v549, %v544
      %v710 = vpack.c.b16 %v550, %v545
      %v711 = vpack.c.b16 %v551, %v546
      %v712 = vpack.c.b16 %v552, %v547
      %v713 = vpack.c.b16 %v553, %v548
      %v714 = vpack.c.b16 %v559, %v554
      %v715 = vpack.c.b16 %v560, %v555
      %v716 = vpack.c.b16 %v561, %v556
      %v717 = vpack.c.b16 %v562, %v557
      %v718 = vpack.c.b16 %v563, %v558
      %v719 = vpack.c.b16 %v569, %v564
      %v720 = vpack.c.b16 %v570, %v565
      %v721 = vpack.c.b16 %v571, %v566
      %v722 = vpack.c.b16 %v572, %v567
      %v723 = vpack.c.b16 %v573, %v568
      %v724 = vpack.c.b16 %v579, %v574
      %v725 = vpack.c.b16 %v580, %v575
      %v726 = vpack.c.b16 %v581, %v576
      %v727 = vpack.c.b16 %v582, %v577
      %v728 = vpack.c.b16 %v583, %v578
      %v729 = vpack.c.b16 %v589, %v584
      %v730 = vpack.c.b16 %v590, %v585
      %v731 = vpack.c.b16 %v591, %v586
      %v732 = vpack.c.b16 %v592, %v587
      %v733 = vpack.c.b16 %v593, %v588
      %v734 = vpack.c.b16 %v599, %v594
      %v735 = vpack.c.b16 %v600, %v595
      %v736 = vpack.c.b16 %v601, %v596
      %v737 = vpack.c.b16 %v602, %v597
      %v738 = vpack.c.b16 %v603, %v598
      %v739 = vpack.c.b16 %v609, %v604
      %v740 = vpack.c.b16 %v610, %v605
      %v741 = vpack.c.b16 %v611, %v606
      %v742 = vpack.c.b16 %v612, %v607
      %v743 = vpack.c.b16 %v613, %v608
      %v744 = vpack.c.b16 %v619, %v614
      %v745 = vpack.c.b16 %v620, %v615
      %v746 = vpack.c.b16 %v621, %v616
      %v747 = vpack.c.b16 %v622, %v617
      %v748 = vpack.c.b16 %v623, %v618
      %v749 = vpack.c.b16 %v629, %v624
      %v750 = vpack.c.b16 %v630, %v625
      %v751 = vpack.c.b16 %v631, %v626
      %v752 = vpack.c.b16 %v632, %v627
      %v753 = vpack.c.b16 %v633, %v628
      %v754 = vpack.c.b16 %v639, %v634
      %v755 = vpack.c.b16 %v640, %v635
      %v756 = vpack.c.b16 %v641, %v636
      %v757 = vpack.c.b16 %v642, %v637
      %v758 = vpack.c.b16 %v643, %v638
      %v759 = vpack.c.b16 %v649, %v644
      %v760 = vpack.c.b16 %v650, %v645
      %v761 = vpack.c.b16 %v651, %v646
      %v762 = vpack.c.b16 %v652, %v647
      %v763 = vpack.c.b16 %v653, %v648
      %v764 = vpack.c.b16 %v659, %v654
      %v765 = vpack.c.b16 %v660, %v655
      %v766 = vpack.c.b16 %v661, %v656
      %v767 = vpack.c.b16 %v662, %v657
      %v768 = vpack.c.b16 %v663, %v658
      %v769 = vpack.c.b16 %v669, %v664
      %v770 = vpack.c.b16 %v670, %v665
      %v771 = vpack.c.b16 %v671, %v666
      %v772 = vpack.c.b16 %v672, %v667
      %v773 = vpack.c.b16 %v673, %v668
      %vm874 = vcmask 523264
      %v876 = vsel %vm874, %v346, 0
      %v879 = vsel %vm874, %v349, 0
      %881 = vmatprep.subr.bf16.mxu0 %v675
      %882 = vmatpush1.bf16.msra.mxu0 %v674
      %883 = vmatprep.subr.bf16.mxu0 %v680
      %884 = vmatpush1.bf16.msra.mxu0 %v679
      %885 = vmatprep.subr.bf16.mxu0 %v685
      %886 = vmatpush1.bf16.msra.mxu0 %v684
      %887 = vmatprep.subr.bf16.mxu0 %v690
      %888 = vmatpush1.bf16.msra.mxu0 %v689
      %889 = vmatprep.subr.bf16.mxu0 %v695
      %890 = vmatpush1.bf16.msra.mxu0 %v694
      %891 = vmatprep.subr.bf16.mxu0 %v700
      %892 = vmatpush1.bf16.msra.mxu0 %v699
      %893 = vmatprep.subr.bf16.mxu0 %v705
      %894 = vmatpush1.bf16.msra.mxu0 %v704
      %895 = vmatprep.subr.bf16.mxu0 %v710
      %896 = vmatpush1.bf16.msra.mxu0 %v709
      %897 = vmatprep.subr.bf16.mxu0 %v715
      %898 = vmatpush1.bf16.msra.mxu0 %v714
      %899 = vmatprep.subr.bf16.mxu0 %v720
      %900 = vmatpush1.bf16.msra.mxu0 %v719
      %901 = vmatprep.subr.bf16.mxu0 %v725
      %902 = vmatpush1.bf16.msra.mxu0 %v724
      %903 = vmatprep.subr.bf16.mxu0 %v730
      %904 = vmatpush1.bf16.msra.mxu0 %v729
      %905 = vmatprep.subr.bf16.mxu0 %v735
      %906 = vmatpush1.bf16.msra.mxu0 %v734
      %907 = vmatprep.subr.bf16.mxu0 %v740
      %908 = vmatpush1.bf16.msra.mxu0 %v739
      %909 = vmatprep.subr.bf16.mxu0 %v745
      %910 = vmatpush1.bf16.msra.mxu0 %v744
      %911 = vmatprep.subr.bf16.mxu0 %v750
      %912 = vmatpush1.bf16.msra.mxu0 %v749
      %913 = vmatprep.mubr.bf16.mxu0 %v345
      %914 = vmatmul.mubr.bf16.gmra.mrb[0].mxu0 %v344
      %v915 = vpop.f32.mrb[0].mxu0
      %v916 = vadd.f32 %v307, %v915
      %v917 = vpop.f32.mrb[0].mxu0
      %v918 = vadd.f32 %v307, %v917
      %v919 = vpop.f32.mrb[0].mxu0
      %v920 = vadd.f32 %v312, %v919
      %v921 = vpop.f32.mrb[0].mxu0
      %v922 = vadd.f32 %v312, %v921
      %923 = vmatprep.mubr.bf16.mxu0 %v348
      %924 = vmatmul.mubr.bf16.gmra.mrb[0].mxu0 %v347
      %v925 = vpop.f32.mrb[0].mxu0
      %v926 = vadd.f32 %v317, %v925
      %v927 = vpop.f32.mrb[0].mxu0
      %v928 = vadd.f32 %v317, %v927
      %v929 = vpop.f32.mrb[0].mxu0
      %v930 = vadd.f32 %v322, %v929
      %v931 = vpop.f32.mrb[0].mxu0
      %v932 = vadd.f32 %v322, %v931
      %933 = vdwg.mxu0
      %934 = vmatprep.subr.bf16.mxu0 %v755
      %935 = vmatpush1.bf16.msra.mxu0 %v754
      %936 = vmatprep.subr.bf16.mxu0 %v760
      %937 = vmatpush1.bf16.msra.mxu0 %v759
      %938 = vmatprep.subr.bf16.mxu0 %v765
      %939 = vmatpush1.bf16.msra.mxu0 %v764
      %940 = vmatprep.subr.bf16.mxu0 %v770
      %941 = vmatpush1.bf16.msra.mxu0 %v769
      %942 = vmatprep.subr.bf16.mxu0 0
      %943 = vmatpush1.bf16.msra.mxu0 0
      %944 = vmatprep.subr.bf16.mxu0 0
      %945 = vmatpush1.bf16.msra.mxu0 0
      %946 = vmatprep.subr.bf16.mxu0 0
      %947 = vmatpush1.bf16.msra.mxu0 0
      %948 = vmatprep.subr.bf16.mxu0 0
      %949 = vmatpush1.bf16.msra.mxu0 0
      %950 = vmatprep.subr.bf16.mxu0 0
      %951 = vmatpush1.bf16.msra.mxu0 0
      %952 = vmatprep.subr.bf16.mxu0 0
      %953 = vmatpush1.bf16.msra.mxu0 0
      %954 = vmatprep.subr.bf16.mxu0 0
      %955 = vmatpush1.bf16.msra.mxu0 0
      %956 = vmatprep.subr.bf16.mxu0 0
      %957 = vmatpush1.bf16.msra.mxu0 0
      %958 = vmatprep.subr.bf16.mxu0 0
      %959 = vmatpush1.bf16.msra.mxu0 0
      %960 = vmatprep.subr.bf16.mxu0 0
      %961 = vmatpush1.bf16.msra.mxu0 0
      %962 = vmatprep.subr.bf16.mxu0 0
      %963 = vmatpush1.bf16.msra.mxu0 0
      %964 = vmatprep.subr.bf16.mxu0 0
      %965 = vmatpush1.bf16.msra.mxu0 0
      %966 = vmatprep.mubr.bf16.mxu0 0
      %967 = vmatmul.mubr.bf16.gmra.mrb[0].mxu0 %v876
      %v968 = vpop.f32.mrb[0].mxu0
      %v969 = vadd.f32 %v916, %v968
      %v970 = vpop.f32.mrb[0].mxu0
      %v971 = vadd.f32 %v918, %v970
      %v972 = vpop.f32.mrb[0].mxu0
      %v973 = vadd.f32 %v920, %v972
      %v974 = vpop.f32.mrb[0].mxu0
      %v975 = vadd.f32 %v922, %v974
      %976 = vmatprep.mubr.bf16.mxu0 0
      %977 = vmatmul.mubr.bf16.gmra.mrb[0].mxu0 %v879
      %v978 = vpop.f32.mrb[0].mxu0
      %v979 = vadd.f32 %v926, %v978
      %v980 = vpop.f32.mrb[0].mxu0
      %v981 = vadd.f32 %v928, %v980
      %v982 = vpop.f32.mrb[0].mxu0
      %v983 = vadd.f32 %v930, %v982
      %v984 = vpop.f32.mrb[0].mxu0
      %v985 = vadd.f32 %v932, %v984
      %986 = vdwg.mxu0
      %987 = vmatprep.subr.bf16.mxu0 %v677
      %988 = vmatpush1.bf16.msra.mxu0 %v676
      %989 = vmatprep.subr.bf16.mxu0 %v682
      %990 = vmatpush1.bf16.msra.mxu0 %v681
      %991 = vmatprep.subr.bf16.mxu0 %v687
      %992 = vmatpush1.bf16.msra.mxu0 %v686
      %993 = vmatprep.subr.bf16.mxu0 %v692
      %994 = vmatpush1.bf16.msra.mxu0 %v691
      %995 = vmatprep.subr.bf16.mxu0 %v697
      %996 = vmatpush1.bf16.msra.mxu0 %v696
      %997 = vmatprep.subr.bf16.mxu0 %v702
      %998 = vmatpush1.bf16.msra.mxu0 %v701
      %999 = vmatprep.subr.bf16.mxu0 %v707
      %1000 = vmatpush1.bf16.msra.mxu0 %v706
      %1001 = vmatprep.subr.bf16.mxu0 %v712
      %1002 = vmatpush1.bf16.msra.mxu0 %v711
      %1003 = vmatprep.subr.bf16.mxu0 %v717
      %1004 = vmatpush1.bf16.msra.mxu0 %v716
      %1005 = vmatprep.subr.bf16.mxu0 %v722
      %1006 = vmatpush1.bf16.msra.mxu0 %v721
      %1007 = vmatprep.subr.bf16.mxu0 %v727
      %1008 = vmatpush1.bf16.msra.mxu0 %v726
      %1009 = vmatprep.subr.bf16.mxu0 %v732
      %1010 = vmatpush1.bf16.msra.mxu0 %v731
      %1011 = vmatprep.subr.bf16.mxu0 %v737
      %1012 = vmatpush1.bf16.msra.mxu0 %v736
      %1013 = vmatprep.subr.bf16.mxu0 %v742
      %1014 = vmatpush1.bf16.msra.mxu0 %v741
      %1015 = vmatprep.subr.bf16.mxu0 %v747
      %1016 = vmatpush1.bf16.msra.mxu0 %v746
      %1017 = vmatprep.subr.bf16.mxu0 %v752
      %1018 = vmatpush1.bf16.msra.mxu0 %v751
      %1019 = vmatprep.mubr.bf16.mxu0 %v345
      %1020 = vmatmul.mubr.bf16.gmra.mrb[0].mxu0 %v344
      %v1021 = vpop.f32.mrb[0].mxu0
      %v1022 = vadd.f32 %v307, %v1021
      %v1023 = vpop.f32.mrb[0].mxu0
      %v1024 = vadd.f32 %v307, %v1023
      %v1025 = vpop.f32.mrb[0].mxu0
      %v1026 = vadd.f32 %v312, %v1025
      %v1027 = vpop.f32.mrb[0].mxu0
      %v1028 = vadd.f32 %v312, %v1027
      %1029 = vmatprep.mubr.bf16.mxu0 %v348
      %1030 = vmatmul.mubr.bf16.gmra.mrb[0].mxu0 %v347
      %v1031 = vpop.f32.mrb[0].mxu0
      %v1032 = vadd.f32 %v317, %v1031
      %v1033 = vpop.f32.mrb[0].mxu0
      %v1034 = vadd.f32 %v317, %v1033
      %v1035 = vpop.f32.mrb[0].mxu0
      %v1036 = vadd.f32 %v322, %v1035
      %v1037 = vpop.f32.mrb[0].mxu0
      %v1038 = vadd.f32 %v322, %v1037
      %1039 = vdwg.mxu0
      %1040 = vmatprep.subr.bf16.mxu0 %v757
      %1041 = vmatpush1.bf16.msra.mxu0 %v756
      %1042 = vmatprep.subr.bf16.mxu0 %v762
      %1043 = vmatpush1.bf16.msra.mxu0 %v761
      %1044 = vmatprep.subr.bf16.mxu0 %v767
      %1045 = vmatpush1.bf16.msra.mxu0 %v766
      %1046 = vmatprep.subr.bf16.mxu0 %v772
      %1047 = vmatpush1.bf16.msra.mxu0 %v771
      %1048 = vmatprep.subr.bf16.mxu0 0
      %1049 = vmatpush1.bf16.msra.mxu0 0
      %1050 = vmatprep.subr.bf16.mxu0 0
      %1051 = vmatpush1.bf16.msra.mxu0 0
      %1052 = vmatprep.subr.bf16.mxu0 0
      %1053 = vmatpush1.bf16.msra.mxu0 0
      %1054 = vmatprep.subr.bf16.mxu0 0
      %1055 = vmatpush1.bf16.msra.mxu0 0
      %1056 = vmatprep.subr.bf16.mxu0 0
      %1057 = vmatpush1.bf16.msra.mxu0 0
      %1058 = vmatprep.subr.bf16.mxu0 0
      %1059 = vmatpush1.bf16.msra.mxu0 0
      %1060 = vmatprep.subr.bf16.mxu0 0
      %1061 = vmatpush1.bf16.msra.mxu0 0
      %1062 = vmatprep.subr.bf16.mxu0 0
      %1063 = vmatpush1.bf16.msra.mxu0 0
      %1064 = vmatprep.subr.bf16.mxu0 0
      %1065 = vmatpush1.bf16.msra.mxu0 0
      %1066 = vmatprep.subr.bf16.mxu0 0
      %1067 = vmatpush1.bf16.msra.mxu0 0
      %1068 = vmatprep.subr.bf16.mxu0 0
      %1069 = vmatpush1.bf16.msra.mxu0 0
      %1070 = vmatprep.subr.bf16.mxu0 0
      %1071 = vmatpush1.bf16.msra.mxu0 0
      %1072 = vmatprep.mubr.bf16.mxu0 0
      %1073 = vmatmul.mubr.bf16.gmra.mrb[0].mxu0 %v876
      %v1074 = vpop.f32.mrb[0].mxu0
      %v1075 = vadd.f32 %v1022, %v1074
      %v1076 = vpop.f32.mrb[0].mxu0
      %v1077 = vadd.f32 %v1024, %v1076
      %v1078 = vpop.f32.mrb[0].mxu0
      %v1079 = vadd.f32 %v1026, %v1078
      %v1080 = vpop.f32.mrb[0].mxu0
      %v1081 = vadd.f32 %v1028, %v1080
      %1082 = vmatprep.mubr.bf16.mxu0 0
      %1083 = vmatmul.mubr.bf16.gmra.mrb[0].mxu0 %v879
      %v1084 = vpop.f32.mrb[0].mxu0
      %v1085 = vadd.f32 %v1032, %v1084
      %v1086 = vpop.f32.mrb[0].mxu0
      %v1087 = vadd.f32 %v1034, %v1086
      %v1088 = vpop.f32.mrb[0].mxu0
      %v1089 = vadd.f32 %v1036, %v1088
      %v1090 = vpop.f32.mrb[0].mxu0
      %v1091 = vadd.f32 %v1038, %v1090
      %1092 = vdwg.mxu0
      %1093 = vmatprep.subr.bf16.mxu0 0
      %1094 = vmatpush1.bf16.msra.mxu0 %v678
      %1095 = vmatprep.subr.bf16.mxu0 0
      %1096 = vmatpush1.bf16.msra.mxu0 %v683
      %1097 = vmatprep.subr.bf16.mxu0 0
      %1098 = vmatpush1.bf16.msra.mxu0 %v688
      %1099 = vmatprep.subr.bf16.mxu0 0
      %1100 = vmatpush1.bf16.msra.mxu0 %v693
      %1101 = vmatprep.subr.bf16.mxu0 0
      %1102 = vmatpush1.bf16.msra.mxu0 %v698
      %1103 = vmatprep.subr.bf16.mxu0 0
      %1104 = vmatpush1.bf16.msra.mxu0 %v703
      %1105 = vmatprep.subr.bf16.mxu0 0
      %1106 = vmatpush1.bf16.msra.mxu0 %v708
      %1107 = vmatprep.subr.bf16.mxu0 0
      %1108 = vmatpush1.bf16.msra.mxu0 %v713
      %1109 = vmatprep.subr.bf16.mxu0 0
      %1110 = vmatpush1.bf16.msra.mxu0 %v718
      %1111 = vmatprep.subr.bf16.mxu0 0
      %1112 = vmatpush1.bf16.msra.mxu0 %v723
      %1113 = vmatprep.subr.bf16.mxu0 0
      %1114 = vmatpush1.bf16.msra.mxu0 %v728
      %1115 = vmatprep.subr.bf16.mxu0 0
      %1116 = vmatpush1.bf16.msra.mxu0 %v733
      %1117 = vmatprep.subr.bf16.mxu0 0
      %1118 = vmatpush1.bf16.msra.mxu0 %v738
      %1119 = vmatprep.subr.bf16.mxu0 0
      %1120 = vmatpush1.bf16.msra.mxu0 %v743
      %1121 = vmatprep.subr.bf16.mxu0 0
      %1122 = vmatpush1.bf16.msra.mxu0 %v748
      %1123 = vmatprep.subr.bf16.mxu0 0
      %1124 = vmatpush1.bf16.msra.mxu0 %v753
      %1125 = vmatprep.mubr.bf16.mxu0 %v345
      %1126 = vmatmul.mubr.bf16.gmra.mrb[0].mxu0 %v344
      %v1127 = vpop.f32.mrb[0].mxu0
      %v1128 = vadd.f32 %v307, %v1127
      %v1129 = vpop.f32.mrb[0].mxu0
      %v1130 = vpop.f32.mrb[0].mxu0
      %v1131 = vadd.f32 %v312, %v1130
      %v1132 = vpop.f32.mrb[0].mxu0
      %1133 = vmatprep.mubr.bf16.mxu0 %v348
      %1134 = vmatmul.mubr.bf16.gmra.mrb[0].mxu0 %v347
      %v1135 = vpop.f32.mrb[0].mxu0
      %v1136 = vadd.f32 %v317, %v1135
      %v1137 = vpop.f32.mrb[0].mxu0
      %v1138 = vpop.f32.mrb[0].mxu0
      %v1139 = vadd.f32 %v322, %v1138
      %v1140 = vpop.f32.mrb[0].mxu0
      %1141 = vdwg.mxu0
      %1142 = vmatprep.subr.bf16.mxu0 0
      %1143 = vmatpush1.bf16.msra.mxu0 %v758
      %1144 = vmatprep.subr.bf16.mxu0 0
      %1145 = vmatpush1.bf16.msra.mxu0 %v763
      %1146 = vmatprep.subr.bf16.mxu0 0
      %1147 = vmatpush1.bf16.msra.mxu0 %v768
      %1148 = vmatprep.subr.bf16.mxu0 0
      %1149 = vmatpush1.bf16.msra.mxu0 %v773
      %1150 = vmatprep.subr.bf16.mxu0 0
      %1151 = vmatpush1.bf16.msra.mxu0 0
      %1152 = vmatprep.subr.bf16.mxu0 0
      %1153 = vmatpush1.bf16.msra.mxu0 0
      %1154 = vmatprep.subr.bf16.mxu0 0
      %1155 = vmatpush1.bf16.msra.mxu0 0
      %1156 = vmatprep.subr.bf16.mxu0 0
      %1157 = vmatpush1.bf16.msra.mxu0 0
      %1158 = vmatprep.subr.bf16.mxu0 0
      %1159 = vmatpush1.bf16.msra.mxu0 0
      %1160 = vmatprep.subr.bf16.mxu0 0
      %1161 = vmatpush1.bf16.msra.mxu0 0
      %1162 = vmatprep.subr.bf16.mxu0 0
      %1163 = vmatpush1.bf16.msra.mxu0 0
      %1164 = vmatprep.subr.bf16.mxu0 0
      %1165 = vmatpush1.bf16.msra.mxu0 0
      %1166 = vmatprep.subr.bf16.mxu0 0
      %1167 = vmatpush1.bf16.msra.mxu0 0
      %1168 = vmatprep.subr.bf16.mxu0 0
      %1169 = vmatpush1.bf16.msra.mxu0 0
      %1170 = vmatprep.subr.bf16.mxu0 0
      %1171 = vmatpush1.bf16.msra.mxu0 0
      %1172 = vmatprep.subr.bf16.mxu0 0
      %1173 = vmatpush1.bf16.msra.mxu0 0
      %1174 = vmatprep.mubr.bf16.mxu0 0
      %1175 = vmatmul.mubr.bf16.gmra.mrb[0].mxu0 %v876
      %v1176 = vpop.f32.mrb[0].mxu0
      %v1177 = vadd.f32 %v1128, %v1176
      %v1178 = vpop.f32.mrb[0].mxu0
      %v1179 = vpop.f32.mrb[0].mxu0
      %v1180 = vadd.f32 %v1131, %v1179
      %v1181 = vpop.f32.mrb[0].mxu0
      %1182 = vmatprep.mubr.bf16.mxu0 0
      %1183 = vmatmul.mubr.bf16.gmra.mrb[0].mxu0 %v879
      %v1184 = vpop.f32.mrb[0].mxu0
      %v1185 = vadd.f32 %v1136, %v1184
      %v1186 = vpop.f32.mrb[0].mxu0
      %v1187 = vpop.f32.mrb[0].mxu0
      %v1188 = vadd.f32 %v1139, %v1187
      %v1189 = vpop.f32.mrb[0].mxu0
      %1190 = vdwg.mxu0
      %v1191 = vmax.f32 %v969, 0.0
      %v1192 = vmax.f32 %v971, 0.0
      %v1193 = vmax.f32 %v1075, 0.0
      %v1194 = vmax.f32 %v1077, 0.0
      %v1195 = vmax.f32 %v1177, 0.0
      %v1196 = vmax.f32 %v973, 0.0
      %v1197 = vmax.f32 %v975, 0.0
      %v1198 = vmax.f32 %v1079, 0.0
      %v1199 = vmax.f32 %v1081, 0.0
      %v1200 = vmax.f32 %v1180, 0.0
      %v1201 = vmax.f32 %v979, 0.0
      %v1202 = vmax.f32 %v981, 0.0
      %v1203 = vmax.f32 %v1085, 0.0
      %v1204 = vmax.f32 %v1087, 0.0
      %v1205 = vmax.f32 %v1185, 0.0
      %v1206 = vmax.f32 %v983, 0.0
      %v1207 = vmax.f32 %v985, 0.0
      %v1208 = vmax.f32 %v1089, 0.0
      %v1209 = vmax.f32 %v1091, 0.0
      %v1210 = vmax.f32 %v1188, 0.0
      %v1211 = vlaneseq
      %v1212 = vand.u32 %v1211, 127
      %v1213 = vadd.s32 %v1212, 128
      %v1214 = vadd.s32 %v1212, 256
      %v1215 = vadd.s32 %v1212, 384
      %v1216 = vadd.s32 %v1212, 512
      %vm1217 = vcmp.lt.s32.totalorder %v1212, 576
      %vm1218 = vcmp.lt.s32.totalorder %v1213, 576
      %vm1219 = vcmp.lt.s32.totalorder %v1214, 576
      %vm1220 = vcmp.lt.s32.totalorder %v1215, 576
      %vm1221 = vcmp.lt.s32.totalorder %v1216, 576
      %v1222 = vsel %vm1217, %v1191, 0.0
      %v1223 = vsel %vm1218, %v1192, 0.0
      %v1224 = vsel %vm1219, %v1193, 0.0
      %v1225 = vsel %vm1220, %v1194, 0.0
      %v1226 = vsel %vm1221, %v1195, 0.0
      %v1227 = vsel %vm1217, %v1196, 0.0
      %v1228 = vsel %vm1218, %v1197, 0.0
      %v1229 = vsel %vm1219, %v1198, 0.0
      %v1230 = vsel %vm1220, %v1199, 0.0
      %v1231 = vsel %vm1221, %v1200, 0.0
      %v1232 = vsel %vm1217, %v1201, 0.0
      %v1233 = vsel %vm1218, %v1202, 0.0
      %v1234 = vsel %vm1219, %v1203, 0.0
      %v1235 = vsel %vm1220, %v1204, 0.0
      %v1236 = vsel %vm1221, %v1205, 0.0
      %v1237 = vsel %vm1217, %v1206, 0.0
      %v1238 = vsel %vm1218, %v1207, 0.0
      %v1239 = vsel %vm1219, %v1208, 0.0
      %v1240 = vsel %vm1220, %v1209, 0.0
      %v1241 = vsel %vm1221, %v1210, 0.0
      %v1242 = vadd.f32 %v1222, %v1223
      %v1243 = vadd.f32 %v1242, %v1224
      %v1244 = vadd.f32 %v1243, %v1225
      %v1245 = vadd.f32 %v1244, %v1226
      %1246 = vadd.xlane.f32.xlu0 %v1245
      %v1247 = vpop.xlane.xlu0 %1246
      %v1248 = vadd.f32 %v1227, %v1228
      %v1249 = vadd.f32 %v1248, %v1229
      %v1250 = vadd.f32 %v1249, %v1230
      %v1251 = vadd.f32 %v1250, %v1231
      %1252 = vadd.xlane.f32.xlu0 %v1251
      %v1253 = vpop.xlane.xlu0 %1252
      %v1254 = vadd.f32 %v1232, %v1233
      %v1255 = vadd.f32 %v1254, %v1234
      %v1256 = vadd.f32 %v1255, %v1235
      %v1257 = vadd.f32 %v1256, %v1236
      %1258 = vadd.xlane.f32.xlu0 %v1257
      %v1259 = vpop.xlane.xlu0 %1258
      %v1260 = vadd.f32 %v1237, %v1238
      %v1261 = vadd.f32 %v1260, %v1239
      %v1262 = vadd.f32 %v1261, %v1240
      %v1263 = vadd.f32 %v1262, %v1241
      %1264 = vadd.xlane.f32.xlu0 %v1263
      %v1265 = vpop.xlane.xlu0 %1264
      %v1266 = vmul.f32 %v1222, %v1222
      %v1267 = vmul.f32 %v1223, %v1223
      %v1268 = vmul.f32 %v1224, %v1224
      %v1269 = vmul.f32 %v1225, %v1225
      %v1270 = vmul.f32 %v1226, %v1226
      %v1271 = vmul.f32 %v1227, %v1227
      %v1272 = vmul.f32 %v1228, %v1228
      %v1273 = vmul.f32 %v1229, %v1229
      %v1274 = vmul.f32 %v1230, %v1230
      %v1275 = vmul.f32 %v1231, %v1231
      %v1276 = vmul.f32 %v1232, %v1232
      %v1277 = vmul.f32 %v1233, %v1233
      %v1278 = vmul.f32 %v1234, %v1234
      %v1279 = vmul.f32 %v1235, %v1235
      %v1280 = vmul.f32 %v1236, %v1236
      %v1281 = vmul.f32 %v1237, %v1237
      %v1282 = vmul.f32 %v1238, %v1238
      %v1283 = vmul.f32 %v1239, %v1239
      %v1284 = vmul.f32 %v1240, %v1240
      %v1285 = vmul.f32 %v1241, %v1241
      %v1286 = vadd.f32 %v1266, %v1267
      %v1287 = vadd.f32 %v1286, %v1268
      %v1288 = vadd.f32 %v1287, %v1269
      %v1289 = vadd.f32 %v1288, %v1270
      %1290 = vadd.xlane.f32.xlu0 %v1289
      %v1291 = vpop.xlane.xlu0 %1290
      %v1292 = vadd.f32 %v1271, %v1272
      %v1293 = vadd.f32 %v1292, %v1273
      %v1294 = vadd.f32 %v1293, %v1274
      %v1295 = vadd.f32 %v1294, %v1275
      %1296 = vadd.xlane.f32.xlu0 %v1295
      %v1297 = vpop.xlane.xlu0 %1296
      %v1298 = vadd.f32 %v1276, %v1277
      %v1299 = vadd.f32 %v1298, %v1278
      %v1300 = vadd.f32 %v1299, %v1279
      %v1301 = vadd.f32 %v1300, %v1280
      %1302 = vadd.xlane.f32.xlu0 %v1301
      %v1303 = vpop.xlane.xlu0 %1302
      %v1304 = vadd.f32 %v1281, %v1282
      %v1305 = vadd.f32 %v1304, %v1283
      %v1306 = vadd.f32 %v1305, %v1284
      %v1307 = vadd.f32 %v1306, %v1285
      %1308 = vadd.xlane.f32.xlu0 %v1307
      %v1309 = vpop.xlane.xlu0 %1308
      %v1310 = vmul.f32 %v1247, 0.0017361111
      %v1311 = vmul.f32 %v1253, 0.0017361111
      %v1312 = vmul.f32 %v1259, 0.0017361111
      %v1313 = vmul.f32 %v1265, 0.0017361111
      %v1314 = vmul.f32 %v1291, 0.0017361111
      %v1315 = vmul.f32 %v1297, 0.0017361111
      %v1316 = vmul.f32 %v1303, 0.0017361111
      %v1317 = vmul.f32 %v1309, 0.0017361111
      %v1318 = vmul.f32 %v1310, %v1310
      %v1319 = vmul.f32 %v1311, %v1311
      %v1320 = vmul.f32 %v1312, %v1312
      %v1321 = vmul.f32 %v1313, %v1313
      %v1322 = vsub.f32 %v1314, %v1318
      %v1323 = vsub.f32 %v1315, %v1319
      %v1324 = vsub.f32 %v1316, %v1320
      %v1325 = vsub.f32 %v1317, %v1321
      %v1326 = vmax.f32 %v1322, 0.0
      %v1327 = vmax.f32 %v1323, 0.0
      %v1328 = vmax.f32 %v1324, 0.0
      %v1329 = vmax.f32 %v1325, 0.0
      %v1330 = vsub.f32 %v1191, %v1310
      %v1331 = vsub.f32 %v1192, %v1310
      %v1332 = vsub.f32 %v1193, %v1310
      %v1333 = vsub.f32 %v1194, %v1310
      %v1334 = vsub.f32 %v1195, %v1310
      %v1335 = vsub.f32 %v1196, %v1311
      %v1336 = vsub.f32 %v1197, %v1311
      %v1337 = vsub.f32 %v1198, %v1311
      %v1338 = vsub.f32 %v1199, %v1311
      %v1339 = vsub.f32 %v1200, %v1311
      %v1340 = vsub.f32 %v1201, %v1312
      %v1341 = vsub.f32 %v1202, %v1312
      %v1342 = vsub.f32 %v1203, %v1312
      %v1343 = vsub.f32 %v1204, %v1312
      %v1344 = vsub.f32 %v1205, %v1312
      %v1345 = vsub.f32 %v1206, %v1313
      %v1346 = vsub.f32 %v1207, %v1313
      %v1347 = vsub.f32 %v1208, %v1313
      %v1348 = vsub.f32 %v1209, %v1313
      %v1349 = vsub.f32 %v1210, %v1313
      %v1350 = vadd.f32 %v1326, 1e-05
      %v1351 = vadd.f32 %v1327, 1e-05
      %v1352 = vadd.f32 %v1328, 1e-05
      %v1353 = vadd.f32 %v1329, 1e-05
      %v1354 = vrsqrt.pop %v1350
      %v1355 = vrsqrt.pop %v1351
      %v1356 = vrsqrt.pop %v1352
      %v1357 = vrsqrt.pop %v1353
      %v1358 = vmul.f32 %v1330, %v1354
      %v1359 = vmul.f32 %v1331, %v1354
      %v1360 = vmul.f32 %v1332, %v1354
      %v1361 = vmul.f32 %v1333, %v1354
      %v1362 = vmul.f32 %v1334, %v1354
      %v1363 = vmul.f32 %v1335, %v1355
      %v1364 = vmul.f32 %v1336, %v1355
      %v1365 = vmul.f32 %v1337, %v1355
      %v1366 = vmul.f32 %v1338, %v1355
      %v1367 = vmul.f32 %v1339, %v1355
      %v1368 = vmul.f32 %v1340, %v1356
      %v1369 = vmul.f32 %v1341, %v1356
      %v1370 = vmul.f32 %v1342, %v1356
      %v1371 = vmul.f32 %v1343, %v1356
      %v1372 = vmul.f32 %v1344, %v1356
      %v1373 = vmul.f32 %v1345, %v1357
      %v1374 = vmul.f32 %v1346, %v1357
      %v1375 = vmul.f32 %v1347, %v1357
      %v1376 = vmul.f32 %v1348, %v1357
      %v1377 = vmul.f32 %v1349, %v1357
      %v1378 = vpack.c.bf16 %v1363, %v1358
      %v1379 = vpack.c.bf16 %v1364, %v1359
      %v1380 = vpack.c.bf16 %v1365, %v1360
      %v1381 = vpack.c.bf16 %v1366, %v1361
      %v1382 = vpack.c.bf16 %v1367, %v1362
      %v1383 = vpack.c.bf16 %v1373, %v1368
      %v1384 = vpack.c.bf16 %v1374, %v1369
      %v1385 = vpack.c.bf16 %v1375, %v1370
      %v1386 = vpack.c.bf16 %v1376, %v1371
      %v1387 = vpack.c.bf16 %v1377, %v1372
      %v1398 = vunpack.c.l.b16 %v1378
      %v1399 = vunpack.c.l.b16 %v1379
      %v1400 = vunpack.c.l.b16 %v1380
      %v1401 = vunpack.c.l.b16 %v1381
      %v1402 = vunpack.c.l.b16 %v1382
      %v1403 = vunpack.c.h.b16 %v1378
      %v1404 = vunpack.c.h.b16 %v1379
      %v1405 = vunpack.c.h.b16 %v1380
      %v1406 = vunpack.c.h.b16 %v1381
      %v1407 = vunpack.c.h.b16 %v1382
      %v1408 = vunpack.c.l.b16 %v1383
      %v1409 = vunpack.c.l.b16 %v1384
      %v1410 = vunpack.c.l.b16 %v1385
      %v1411 = vunpack.c.l.b16 %v1386
      %v1412 = vunpack.c.l.b16 %v1387
      %v1413 = vunpack.c.h.b16 %v1383
      %v1414 = vunpack.c.h.b16 %v1384
      %v1415 = vunpack.c.h.b16 %v1385
      %v1416 = vunpack.c.h.b16 %v1386
      %v1417 = vunpack.c.h.b16 %v1387
      %v1418 = vpack.c.b16 %v1399, %v1398
      %v1419 = vpack.c.b16 %v1401, %v1400
      %v1420 = vpack.c.b16 %v1402, %v1402
      %v1421 = vpack.c.b16 %v1404, %v1403
      %v1422 = vpack.c.b16 %v1406, %v1405
      %v1423 = vpack.c.b16 %v1407, %v1407
      %v1424 = vpack.c.b16 %v1409, %v1408
      %v1425 = vpack.c.b16 %v1411, %v1410
      %v1426 = vpack.c.b16 %v1412, %v1412
      %v1427 = vpack.c.b16 %v1414, %v1413
      %v1428 = vpack.c.b16 %v1416, %v1415
      %v1429 = vpack.c.b16 %v1417, %v1417
      %1442 = vst [vmem:[%s170] sm:$0xff] %v1418
      %1443 = vst [vmem:[%s170 + $0x8] sm:$0xff] %v1419
      %1444 = vst [vmem:[%s170 + $0x10] sm:$0xf] %v1420
      %1445 = vst [vmem:[%s170 + $0x14] sm:$0xff] %v1421
      %1446 = vst [vmem:[%s170 + $0x1c] sm:$0xff] %v1422
      %1447 = vst [vmem:[%s170 + $0x24] sm:$0xf] %v1423
      %1448 = vst [vmem:[%s170 + $0x28] sm:$0xff] %v1424
      %1449 = vst [vmem:[%s170 + $0x30] sm:$0xff] %v1425
      %1450 = vst [vmem:[%s170 + $0x38] sm:$0xf] %v1426
      %1451 = vst [vmem:[%s170 + $0x3c] sm:$0xff] %v1427
      %1452 = vst [vmem:[%s170 + $0x44] sm:$0xff] %v1428
      %1453 = vst [vmem:[%s170 + $0x4c] sm:$0xf] %v1429
      %p1454 = scmp.lt.s32.totalorder %s14, 1
      %s1455 = scalar_select %p1454, %s14, 1
      %s1456 = smul.addr %s1455, 20
      %s1457 = smul.addr %s1456, 4
      %s1458 = scalar_lea.vmem %s3, %s1457
      // Predicated region
      $region33: #{_lambda_.4} parent=31 // pred_check
        %p1459 = pneg %p100
      $region34: #{_lambda_.4} parent=31 // pred_check_branch
        %1461 = sbr.rel (%p1459) target = $region36
      $region35: #{_lambda_.4} parent=31 // pred_region
        _
      $region36: #{_lambda_.4} parent=31 // pred_fallthru
        _
    $region32: #{_lambda_.4} parent=5 // pred_fallthru
      _
    %p1462 = scmp.le.s32.totalorder 2, %s9
    // Predicated region
    $region37: #{_lambda_.4} parent=5 // pred_check
      %p1463 = pneg %p1462
    $region38: #{_lambda_.4} parent=5 // pred_check_branch
      %1465 = sbr.rel (%p1463) target = $region40
    $region39: #{_lambda_.4} parent=5 // pred_region
      %s1466 = ssub.s32 %s9, 2
      // Predicated region
      $region41: #{_lambda_.4} parent=39 // pred_check
        %p1467 = pneg %p106
      $region42: #{_lambda_.4} parent=39 // pred_check_branch
        %1469 = sbr.rel (%p1467) target = $region44
      $region43: #{_lambda_.4} parent=39 // pred_region
        %p1470 = scmp.lt.s32.totalorder %s15, 1
        %s1471 = scalar_select %p1470, %s15, 1
        %s1472 = smul.addr %s1471, 20
        %s1473 = smul.addr %s1472, 4
        %s1474 = scalar_lea.vmem %s3, %s1473
      $region44: #{_lambda_.4} parent=39 // pred_fallthru
        _
    $region40: #{_lambda_.4} parent=5 // pred_fallthru
      _
  $region6: #{_lambda_.4} parent=0 // loop_footer
    %s13 = sadd.s32 1, %s9
  $region7: #{_lambda_.4} parent=0 // loop_footer_branch
    %8 = sbr.rel target = $region3
  $region8: #{_lambda_.4} parent=0 // loop_exit
    _

// kernel: _lambda_.5
$region0: #{_lambda_.5}
  #allocation0 [shape = 'u32[]', space=smem, size = 0x4, offset = 0x4, fixed_abs, tag = 'smem constant byte address 0x4 - core index']
  #allocation1 [shape = 'u32[144,128]{1,0:T(1,128)}', space=vmem, size = 0x12000, scoped, tag = 'internal scratch']
  %s0 = inlined_call_operand.vmem [shape: bf16[2,512,128], index: 0, kind: input, shape index: {}]
  %s1 = inlined_call_operand.vmem [shape: bf16[64,512], index: 1, kind: input, shape index: {}]
  %s2 = inlined_call_operand.vmem [shape: f32[64,1], index: 2, kind: input, shape index: {}]
  %s3 = inlined_call_operand.vmem [shape: bf16[2,64,128], index: 3, kind: output, shape index: {}]
  %s4 = sld [smem:[#allocation0]]
  $region45: #{_lambda_.5} parent=0
    _
  %s6 = ssub.s32 1, %s4
  %s7 = scalar_select 0, %s6, %s4
  loop: start=0, step=1, limit=4
  $region2: #{_lambda_.5} parent=0 // loop_pre_header
    _
  $region3: #{_lambda_.5} parent=0 // loop_header
    %s9 = sphi 0, %s13
    %p10 = scmp.ge.s32.totalorder %s9, 4
    %s19 = sphi 0, %s21
    %s22 = sphi 0, %s19
    %s23 = sphi 0, %s22
    %s39 = sphi 0, %s23
    %s43 = sphi 0, %s43
    %s45 = sphi 0, %s43
    %s46 = sphi 0, %s45
    %s60 = sphi 0, %s46
    %s64 = sphi 0, %s64
    %s66 = sphi 0, %s64
    %s67 = sphi 0, %s66
    %s81 = sphi 0, %s67
    %s87 = sphi 0, %s89
    %s90 = sphi 0, %s87
    %s91 = sphi 0, %s90
    %s107 = sphi 0, %s91
  $region4: #{_lambda_.5} parent=0 // loop_header_branch
    %12 = sbr.rel (%p10) target = $region8
  $region5: #{_lambda_.5} parent=0 // loop_body
    %s14 = ssub.s32 %s9, 1
    %s15 = ssub.s32 %s9, 2
    %s16 = sadd.s32 %s9, 1
    %s17 = ssub.s32 %s9, %s16
    %p18 = scmp.eq.s32.totalorder %s17, 0
    %s20 = sadd.s32 %s19, 1
    %s21 = scalar_select %p18, %s19, %s20
    %p24 = pneg %p18
    %p25 = scmp.eq.s32.totalorder %s9, 1
    %p26 = por %p24, %p25
    %p27 = scmp.ne.s32.totalorder %s19, %s22
    %p28 = scmp.eq.s32.totalorder %s9, 0
    %p29 = por %p27, %p28
    %p30 = scmp.ne.s32.totalorder %s19, %s22
    %p31 = scmp.eq.s32.totalorder %s14, 1
    %p32 = por %p30, %p31
    %p33 = scmp.ne.s32.totalorder %s22, %s23
    %p34 = scmp.eq.s32.totalorder %s14, 0
    %p35 = por %p33, %p34
    %p36 = scmp.ne.s32.totalorder %s22, %s23
    %p37 = scmp.eq.s32.totalorder %s15, 1
    %p38 = por %p36, %p37
    %p40 = scmp.ne.s32.totalorder %s23, %s39
    %p41 = scmp.eq.s32.totalorder %s15, 0
    %p42 = por %p40, %p41
    %s44 = sadd.s32 %s43, 1
    %p47 = scmp.eq.s32.totalorder %s9, 1
    %p48 = scmp.ne.s32.totalorder %s43, %s45
    %p49 = scmp.eq.s32.totalorder %s9, 0
    %p50 = por %p48, %p49
    %p51 = scmp.ne.s32.totalorder %s43, %s45
    %p52 = scmp.eq.s32.totalorder %s14, 1
    %p53 = por %p51, %p52
    %p54 = scmp.ne.s32.totalorder %s45, %s46
    %p55 = scmp.eq.s32.totalorder %s14, 0
    %p56 = por %p54, %p55
    %p57 = scmp.ne.s32.totalorder %s45, %s46
    %p58 = scmp.eq.s32.totalorder %s15, 1
    %p59 = por %p57, %p58
    %p61 = scmp.ne.s32.totalorder %s46, %s60
    %p62 = scmp.eq.s32.totalorder %s15, 0
    %p63 = por %p61, %p62
    %s65 = sadd.s32 %s64, 1
    %p68 = scmp.eq.s32.totalorder %s9, 1
    %p69 = scmp.ne.s32.totalorder %s64, %s66
    %p70 = scmp.eq.s32.totalorder %s9, 0
    %p71 = por %p69, %p70
    %p72 = scmp.ne.s32.totalorder %s64, %s66
    %p73 = scmp.eq.s32.totalorder %s14, 1
    %p74 = por %p72, %p73
    %p75 = scmp.ne.s32.totalorder %s66, %s67
    %p76 = scmp.eq.s32.totalorder %s14, 0
    %p77 = por %p75, %p76
    %p78 = scmp.ne.s32.totalorder %s66, %s67
    %p79 = scmp.eq.s32.totalorder %s15, 1
    %p80 = por %p78, %p79
    %p82 = scmp.ne.s32.totalorder %s67, %s81
    %p83 = scmp.eq.s32.totalorder %s15, 0
    %p84 = por %p82, %p83
    %s85 = ssub.s32 %s9, %s16
    %p86 = scmp.eq.s32.totalorder %s85, 0
    %s88 = sadd.s32 %s87, 1
    %s89 = scalar_select %p86, %s87, %s88
    %p92 = pneg %p86
    %p93 = scmp.eq.s32.totalorder %s9, 1
    %p94 = por %p92, %p93
    %p95 = scmp.ne.s32.totalorder %s87, %s90
    %p96 = scmp.eq.s32.totalorder %s9, 0
    %p97 = por %p95, %p96
    %p98 = scmp.ne.s32.totalorder %s87, %s90
    %p99 = scmp.eq.s32.totalorder %s14, 1
    %p100 = por %p98, %p99
    %p101 = scmp.ne.s32.totalorder %s90, %s91
    %p102 = scmp.eq.s32.totalorder %s14, 0
    %p103 = por %p101, %p102
    %p104 = scmp.ne.s32.totalorder %s90, %s91
    %p105 = scmp.eq.s32.totalorder %s15, 1
    %p106 = por %p104, %p105
    %p108 = scmp.ne.s32.totalorder %s91, %s107
    %p109 = scmp.eq.s32.totalorder %s15, 0
    %p110 = por %p108, %p109
    %p111 = scmp.le.s32.totalorder 1, %s9
    %p112 = scmp.lt.s32.totalorder %s9, 3
    %p113 = pnand %p111, %p112
    %p114 = pneg %p113
    // Predicated region
    $region9: #{_lambda_.5} parent=5 // pred_check
      _
    $region10: #{_lambda_.5} parent=5 // pred_check_branch
      %116 = sbr.rel (%p113) target = $region12
    $region11: #{_lambda_.5} parent=5 // pred_region
      %s117 = ssub.s32 %s9, 1
      // Predicated region
      $region13: #{_lambda_.5} parent=11 // pred_check
        %p118 = pneg %p56
      $region14: #{_lambda_.5} parent=11 // pred_check_branch
        %120 = sbr.rel (%p118) target = $region16
      $region15: #{_lambda_.5} parent=11 // pred_region
        _
      $region16: #{_lambda_.5} parent=11 // pred_fallthru
        _
      // Predicated region
      $region17: #{_lambda_.5} parent=11 // pred_check
        %p121 = pneg %p77
      $region18: #{_lambda_.5} parent=11 // pred_check_branch
        %123 = sbr.rel (%p121) target = $region20
      $region19: #{_lambda_.5} parent=11 // pred_region
        _
      $region20: #{_lambda_.5} parent=11 // pred_fallthru
        _
    $region12: #{_lambda_.5} parent=5 // pred_fallthru
      _
    %p124 = scmp.lt.s32.totalorder %s9, 2
    // Predicated region
    $region21: #{_lambda_.5} parent=5 // pred_check
      %p125 = pneg %p124
    $region22: #{_lambda_.5} parent=5 // pred_check_branch
      %127 = sbr.rel (%p125) target = $region24
    $region23: #{_lambda_.5} parent=5 // pred_region
      // Predicated region
      $region25: #{_lambda_.5} parent=23 // pred_check
        %p128 = pneg %p29
      $region26: #{_lambda_.5} parent=23 // pred_check_branch
        %130 = sbr.rel (%p128) target = $region28
      $region27: #{_lambda_.5} parent=23 // pred_region
        %p131 = scmp.lt.s32.totalorder %s9, 1
        %s132 = scalar_select %p131, %s9, 1
        %s133 = smul.addr %s132, 64
        %s134 = smul.addr %s133, 4
        %s135 = scalar_lea.vmem %s0, %s134
      $region28: #{_lambda_.5} parent=23 // pred_fallthru
        _
    $region24: #{_lambda_.5} parent=5 // pred_fallthru
      _
    %p136 = scmp.le.s32.totalorder 1, %s9
    %p137 = scmp.lt.s32.totalorder %s9, 3
    %p138 = pnand %p136, %p137
    %p139 = pneg %p138
    // Predicated region
    $region29: #{_lambda_.5} parent=5 // pred_check
      _
    $region30: #{_lambda_.5} parent=5 // pred_check_branch
      %141 = sbr.rel (%p138) target = $region32
    $region31: #{_lambda_.5} parent=5 // pred_region
      %s142 = ssub.s32 %s9, 1
      %p143 = scmp.lt.s32.totalorder %s14, 1
      %s144 = scalar_select %p143, %s14, 1
      %s145 = smul.addr %s144, 64
      %s146 = smul.addr %s145, 4
      %s147 = scalar_lea.vmem %s0, %s146
      %p148 = pneg %p35
      %p149 = pneg %p32
      %p150 = pneg %p56
      %p151 = pneg %p53
      %p152 = pneg %p77
      %p153 = pneg %p74
      %p154 = pneg %p103
      %p155 = pneg %p100
      %p156 = scmp.lt.s32.totalorder %s14, 1
      %s157 = scalar_select %p156, %s14, 1
      %s158 = smul.addr %s157, 8
      %s159 = smul.addr %s158, 4
      %s160 = scalar_lea.vmem %s3, %s159
      %p161 = scmp.lt.s32.totalorder %s14, 1
      %s162 = scalar_select %p161, %s14, 1
      %s163 = smul.addr %s162, 64
      %s164 = smul.addr %s163, 4
      %s165 = scalar_lea.vmem %s0, %s164
      %p166 = scmp.lt.s32.totalorder %s14, 1
      %s167 = scalar_select %p166, %s14, 1
      %s168 = smul.addr %s167, 8
      %s169 = smul.addr %s168, 4
      %s170 = scalar_lea.vmem %s3, %s169
      %v172 = vld [vmem:[%s1] sm:$0xff]
      %v173 = vld [vmem:[%s1 + $0x8] sm:$0xff]
      %v174 = vld [vmem:[%s1 + $0x10] sm:$0xff]
      %v175 = vld [vmem:[%s1 + $0x18] sm:$0xff]
      %v176 = vld [vmem:[%s1 + $0x20] sm:$0xff]
      %v177 = vld [vmem:[%s1 + $0x28] sm:$0xff]
      %v178 = vld [vmem:[%s1 + $0x30] sm:$0xff]
      %v179 = vld [vmem:[%s1 + $0x38] sm:$0xff]
      %v180 = vld [vmem:[%s1 + $0x40] sm:$0xff]
      %v181 = vld [vmem:[%s1 + $0x48] sm:$0xff]
      %v182 = vld [vmem:[%s1 + $0x50] sm:$0xff]
      %v183 = vld [vmem:[%s1 + $0x58] sm:$0xff]
      %v184 = vld [vmem:[%s1 + $0x60] sm:$0xff]
      %v185 = vld [vmem:[%s1 + $0x68] sm:$0xff]
      %v186 = vld [vmem:[%s1 + $0x70] sm:$0xff]
      %v187 = vld [vmem:[%s1 + $0x78] sm:$0xff]
      %v188 = vld [vmem:[%s165] sm:$0xf]
      %v189 = vld [vmem:[%s165 + $0x4] sm:$0xf]
      %v190 = vld [vmem:[%s165 + $0x8] sm:$0xf]
      %v191 = vld [vmem:[%s165 + $0xc] sm:$0xf]
      %v192 = vld [vmem:[%s165 + $0x10] sm:$0xf]
      %v193 = vld [vmem:[%s165 + $0x14] sm:$0xf]
      %v194 = vld [vmem:[%s165 + $0x18] sm:$0xf]
      %v195 = vld [vmem:[%s165 + $0x1c] sm:$0xf]
      %v196 = vld [vmem:[%s165 + $0x20] sm:$0xf]
      %v197 = vld [vmem:[%s165 + $0x24] sm:$0xf]
      %v198 = vld [vmem:[%s165 + $0x28] sm:$0xf]
      %v199 = vld [vmem:[%s165 + $0x2c] sm:$0xf]
      %v200 = vld [vmem:[%s165 + $0x30] sm:$0xf]
      %v201 = vld [vmem:[%s165 + $0x34] sm:$0xf]
      %v202 = vld [vmem:[%s165 + $0x38] sm:$0xf]
      %v203 = vld [vmem:[%s165 + $0x3c] sm:$0xf]
      %v204 = vld [vmem:[%s165 + $0x40] sm:$0xf]
      %v205 = vld [vmem:[%s165 + $0x44] sm:$0xf]
      %v206 = vld [vmem:[%s165 + $0x48] sm:$0xf]
      %v207 = vld [vmem:[%s165 + $0x4c] sm:$0xf]
      %v208 = vld [vmem:[%s165 + $0x50] sm:$0xf]
      %v209 = vld [vmem:[%s165 + $0x54] sm:$0xf]
      %v210 = vld [vmem:[%s165 + $0x58] sm:$0xf]
      %v211 = vld [vmem:[%s165 + $0x5c] sm:$0xf]
      %v212 = vld [vmem:[%s165 + $0x60] sm:$0xf]
      %v213 = vld [vmem:[%s165 + $0x64] sm:$0xf]
      %v214 = vld [vmem:[%s165 + $0x68] sm:$0xf]
      %v215 = vld [vmem:[%s165 + $0x6c] sm:$0xf]
      %v216 = vld [vmem:[%s165 + $0x70] sm:$0xf]
      %v217 = vld [vmem:[%s165 + $0x74] sm:$0xf]
      %v218 = vld [vmem:[%s165 + $0x78] sm:$0xf]
      %v219 = vld [vmem:[%s165 + $0x7c] sm:$0xf]
      %v220 = vld [vmem:[%s165 + $0x80] sm:$0xf]
      %v221 = vld [vmem:[%s165 + $0x84] sm:$0xf]
      %v222 = vld [vmem:[%s165 + $0x88] sm:$0xf]
      %v223 = vld [vmem:[%s165 + $0x8c] sm:$0xf]
      %v224 = vld [vmem:[%s165 + $0x90] sm:$0xf]
      %v225 = vld [vmem:[%s165 + $0x94] sm:$0xf]
      %v226 = vld [vmem:[%s165 + $0x98] sm:$0xf]
      %v227 = vld [vmem:[%s165 + $0x9c] sm:$0xf]
      %v228 = vld [vmem:[%s165 + $0xa0] sm:$0xf]
      %v229 = vld [vmem:[%s165 + $0xa4] sm:$0xf]
      %v230 = vld [vmem:[%s165 + $0xa8] sm:$0xf]
      %v231 = vld [vmem:[%s165 + $0xac] sm:$0xf]
      %v232 = vld [vmem:[%s165 + $0xb0] sm:$0xf]
      %v233 = vld [vmem:[%s165 + $0xb4] sm:$0xf]
      %v234 = vld [vmem:[%s165 + $0xb8] sm:$0xf]
      %v235 = vld [vmem:[%s165 + $0xbc] sm:$0xf]
      %v236 = vld [vmem:[%s165 + $0xc0] sm:$0xf]
      %v237 = vld [vmem:[%s165 + $0xc4] sm:$0xf]
      %v238 = vld [vmem:[%s165 + $0xc8] sm:$0xf]
      %v239 = vld [vmem:[%s165 + $0xcc] sm:$0xf]
      %v240 = vld [vmem:[%s165 + $0xd0] sm:$0xf]
      %v241 = vld [vmem:[%s165 + $0xd4] sm:$0xf]
      %v242 = vld [vmem:[%s165 + $0xd8] sm:$0xf]
      %v243 = vld [vmem:[%s165 + $0xdc] sm:$0xf]
      %v244 = vld [vmem:[%s165 + $0xe0] sm:$0xf]
      %v245 = vld [vmem:[%s165 + $0xe4] sm:$0xf]
      %v246 = vld [vmem:[%s165 + $0xe8] sm:$0xf]
      %v247 = vld [vmem:[%s165 + $0xec] sm:$0xf]
      %v248 = vld [vmem:[%s165 + $0xf0] sm:$0xf]
      %v249 = vld [vmem:[%s165 + $0xf4] sm:$0xf]
      %v250 = vld [vmem:[%s165 + $0xf8] sm:$0xf]
      %v251 = vld [vmem:[%s165 + $0xfc] sm:$0xf]
      %v252 = vld [vmem:[%s2] sm:$0xff]
      %v253 = vld [vmem:[%s2 + $0x8] sm:$0xff]
      %v254 = vld [vmem:[%s2 + $0x10] sm:$0xff]
      %v255 = vld [vmem:[%s2 + $0x18] sm:$0xff]
      %v256 = vld [vmem:[%s2 + $0x20] sm:$0xff]
      %v257 = vld [vmem:[%s2 + $0x28] sm:$0xff]
      %v258 = vld [vmem:[%s2 + $0x30] sm:$0xff]
      %v259 = vld [vmem:[%s2 + $0x38] sm:$0xff]
      %261 = vset.pattern.permute.xlu0 0
      %262 = vperm.xlu0 %261, %v252
      %v263 = vpop.permute.xlu0 %262
      %266 = vset.pattern.permute.xlu0 0
      %267 = vperm.xlu0 %266, %v253
      %v268 = vpop.permute.xlu0 %267
      %271 = vset.pattern.permute.xlu0 0
      %272 = vperm.xlu0 %271, %v254
      %v273 = vpop.permute.xlu0 %272
      %276 = vset.pattern.permute.xlu0 0
      %277 = vperm.xlu0 %276, %v255
      %v278 = vpop.permute.xlu0 %277
      %281 = vset.pattern.permute.xlu0 0
      %282 = vperm.xlu0 %281, %v256
      %v283 = vpop.permute.xlu0 %282
      %286 = vset.pattern.permute.xlu0 0
      %287 = vperm.xlu0 %286, %v257
      %v288 = vpop.permute.xlu0 %287
      %291 = vset.pattern.permute.xlu0 0
      %292 = vperm.xlu0 %291, %v258
      %v293 = vpop.permute.xlu0 %292
      %296 = vset.pattern.permute.xlu0 0
      %297 = vperm.xlu0 %296, %v259
      %v298 = vpop.permute.xlu0 %297
      %v316 = vunpack.c.l.b16 %v172
      %v317 = vunpack.c.h.b16 %v172
      %v318 = vunpack.c.l.b16 %v173
      %v319 = vunpack.c.h.b16 %v173
      %v320 = vunpack.c.l.b16 %v174
      %v321 = vunpack.c.h.b16 %v174
      %v322 = vunpack.c.l.b16 %v175
      %v323 = vunpack.c.h.b16 %v175
      %v324 = vunpack.c.l.b16 %v176
      %v325 = vunpack.c.h.b16 %v176
      %v326 = vunpack.c.l.b16 %v177
      %v327 = vunpack.c.h.b16 %v177
      %v328 = vunpack.c.l.b16 %v178
      %v329 = vunpack.c.h.b16 %v178
      %v330 = vunpack.c.l.b16 %v179
      %v331 = vunpack.c.h.b16 %v179
      %v332 = vunpack.c.l.b16 %v180
      %v333 = vunpack.c.h.b16 %v180
      %v334 = vunpack.c.l.b16 %v181
      %v335 = vunpack.c.h.b16 %v181
      %v336 = vunpack.c.l.b16 %v182
      %v337 = vunpack.c.h.b16 %v182
      %v338 = vunpack.c.l.b16 %v183
      %v339 = vunpack.c.h.b16 %v183
      %v340 = vunpack.c.l.b16 %v184
      %v341 = vunpack.c.h.b16 %v184
      %v342 = vunpack.c.l.b16 %v185
      %v343 = vunpack.c.h.b16 %v185
      %v344 = vunpack.c.l.b16 %v186
      %v345 = vunpack.c.h.b16 %v186
      %v346 = vunpack.c.l.b16 %v187
      %v347 = vunpack.c.h.b16 %v187
      %v348 = vpack.c.b16 %v320, %v316
      %v349 = vpack.c.b16 %v321, %v317
      %v350 = vpack.c.b16 %v322, %v318
      %v351 = vpack.c.b16 %v323, %v319
      %v352 = vpack.c.b16 %v328, %v324
      %v353 = vpack.c.b16 %v329, %v325
      %v354 = vpack.c.b16 %v330, %v326
      %v355 = vpack.c.b16 %v331, %v327
      %v356 = vpack.c.b16 %v336, %v332
      %v357 = vpack.c.b16 %v337, %v333
      %v358 = vpack.c.b16 %v338, %v334
      %v359 = vpack.c.b16 %v339, %v335
      %v360 = vpack.c.b16 %v344, %v340
      %v361 = vpack.c.b16 %v345, %v341
      %v362 = vpack.c.b16 %v346, %v342
      %v363 = vpack.c.b16 %v347, %v343
      %v444 = vunpack.c.l.b16 %v188
      %v445 = vunpack.c.l.b16 %v189
      %v446 = vunpack.c.l.b16 %v190
      %v447 = vunpack.c.l.b16 %v191
      %v448 = vunpack.c.l.b16 %v192
      %v449 = vunpack.c.l.b16 %v193
      %v450 = vunpack.c.l.b16 %v194
      %v451 = vunpack.c.l.b16 %v195
      %v452 = vunpack.c.l.b16 %v196
      %v453 = vunpack.c.l.b16 %v197
      %v454 = vunpack.c.l.b16 %v198
      %v455 = vunpack.c.l.b16 %v199
      %v456 = vunpack.c.l.b16 %v200
      %v457 = vunpack.c.l.b16 %v201
      %v458 = vunpack.c.l.b16 %v202
      %v459 = vunpack.c.l.b16 %v203
      %v460 = vunpack.c.l.b16 %v204
      %v461 = vunpack.c.l.b16 %v205
      %v462 = vunpack.c.l.b16 %v206
      %v463 = vunpack.c.l.b16 %v207
      %v464 = vunpack.c.l.b16 %v208
      %v465 = vunpack.c.l.b16 %v209
      %v466 = vunpack.c.l.b16 %v210
      %v467 = vunpack.c.l.b16 %v211
      %v468 = vunpack.c.l.b16 %v212
      %v469 = vunpack.c.l.b16 %v213
      %v470 = vunpack.c.l.b16 %v214
      %v471 = vunpack.c.l.b16 %v215
      %v472 = vunpack.c.l.b16 %v216
      %v473 = vunpack.c.l.b16 %v217
      %v474 = vunpack.c.l.b16 %v218
      %v475 = vunpack.c.l.b16 %v219
      %v476 = vunpack.c.l.b16 %v220
      %v477 = vunpack.c.l.b16 %v221
      %v478 = vunpack.c.l.b16 %v222
      %v479 = vunpack.c.l.b16 %v223
      %v480 = vunpack.c.l.b16 %v224
      %v481 = vunpack.c.l.b16 %v225
      %v482 = vunpack.c.l.b16 %v226
      %v483 = vunpack.c.l.b16 %v227
      %v484 = vunpack.c.l.b16 %v228
      %v485 = vunpack.c.l.b16 %v229
      %v486 = vunpack.c.l.b16 %v230
      %v487 = vunpack.c.l.b16 %v231
      %v488 = vunpack.c.l.b16 %v232
      %v489 = vunpack.c.l.b16 %v233
      %v490 = vunpack.c.l.b16 %v234
      %v491 = vunpack.c.l.b16 %v235
      %v492 = vunpack.c.l.b16 %v236
      %v493 = vunpack.c.l.b16 %v237
      %v494 = vunpack.c.l.b16 %v238
      %v495 = vunpack.c.l.b16 %v239
      %v496 = vunpack.c.l.b16 %v240
      %v497 = vunpack.c.l.b16 %v241
      %v498 = vunpack.c.l.b16 %v242
      %v499 = vunpack.c.l.b16 %v243
      %v500 = vunpack.c.l.b16 %v244
      %v501 = vunpack.c.l.b16 %v245
      %v502 = vunpack.c.l.b16 %v246
      %v503 = vunpack.c.l.b16 %v247
      %v504 = vunpack.c.l.b16 %v248
      %v505 = vunpack.c.l.b16 %v249
      %v506 = vunpack.c.l.b16 %v250
      %v507 = vunpack.c.l.b16 %v251
      %v508 = vpack.c.b16 %v445, %v444
      %v509 = vpack.c.b16 %v447, %v446
      %v510 = vpack.c.b16 %v449, %v448
      %v511 = vpack.c.b16 %v451, %v450
      %v512 = vpack.c.b16 %v453, %v452
      %v513 = vpack.c.b16 %v455, %v454
      %v514 = vpack.c.b16 %v457, %v456
      %v515 = vpack.c.b16 %v459, %v458
      %v516 = vpack.c.b16 %v461, %v460
      %v517 = vpack.c.b16 %v463, %v462
      %v518 = vpack.c.b16 %v465, %v464
      %v519 = vpack.c.b16 %v467, %v466
      %v520 = vpack.c.b16 %v469, %v468
      %v521 = vpack.c.b16 %v471, %v470
      %v522 = vpack.c.b16 %v473, %v472
      %v523 = vpack.c.b16 %v475, %v474
      %v524 = vpack.c.b16 %v477, %v476
      %v525 = vpack.c.b16 %v479, %v478
      %v526 = vpack.c.b16 %v481, %v480
      %v527 = vpack.c.b16 %v483, %v482
      %v528 = vpack.c.b16 %v485, %v484
      %v529 = vpack.c.b16 %v487, %v486
      %v530 = vpack.c.b16 %v489, %v488
      %v531 = vpack.c.b16 %v491, %v490
      %v532 = vpack.c.b16 %v493, %v492
      %v533 = vpack.c.b16 %v495, %v494
      %v534 = vpack.c.b16 %v497, %v496
      %v535 = vpack.c.b16 %v499, %v498
      %v536 = vpack.c.b16 %v501, %v500
      %v537 = vpack.c.b16 %v503, %v502
      %v538 = vpack.c.b16 %v505, %v504
      %v539 = vpack.c.b16 %v507, %v506
      %572 = vmatprep.subr.bf16.mxu0 0
      %573 = vmatpush1.bf16.msra.mxu0 %v508
      %574 = vmatprep.subr.bf16.mxu0 0
      %575 = vmatpush1.bf16.msra.mxu0 %v509
      %576 = vmatprep.subr.bf16.mxu0 0
      %577 = vmatpush1.bf16.msra.mxu0 %v510
      %578 = vmatprep.subr.bf16.mxu0 0
      %579 = vmatpush1.bf16.msra.mxu0 %v511
      %580 = vmatprep.subr.bf16.mxu0 0
      %581 = vmatpush1.bf16.msra.mxu0 %v512
      %582 = vmatprep.subr.bf16.mxu0 0
      %583 = vmatpush1.bf16.msra.mxu0 %v513
      %584 = vmatprep.subr.bf16.mxu0 0
      %585 = vmatpush1.bf16.msra.mxu0 %v514
      %586 = vmatprep.subr.bf16.mxu0 0
      %587 = vmatpush1.bf16.msra.mxu0 %v515
      %588 = vmatprep.subr.bf16.mxu0 0
      %589 = vmatpush1.bf16.msra.mxu0 %v516
      %590 = vmatprep.subr.bf16.mxu0 0
      %591 = vmatpush1.bf16.msra.mxu0 %v517
      %592 = vmatprep.subr.bf16.mxu0 0
      %593 = vmatpush1.bf16.msra.mxu0 %v518
      %594 = vmatprep.subr.bf16.mxu0 0
      %595 = vmatpush1.bf16.msra.mxu0 %v519
      %596 = vmatprep.subr.bf16.mxu0 0
      %597 = vmatpush1.bf16.msra.mxu0 %v520
      %598 = vmatprep.subr.bf16.mxu0 0
      %599 = vmatpush1.bf16.msra.mxu0 %v521
      %600 = vmatprep.subr.bf16.mxu0 0
      %601 = vmatpush1.bf16.msra.mxu0 %v522
      %602 = vmatprep.subr.bf16.mxu0 0
      %603 = vmatpush1.bf16.msra.mxu0 %v523
      %604 = vmatprep.mubr.bf16.mxu0 %v349
      %605 = vmatmul.mubr.bf16.gmra.mrb[0].mxu0 %v348
      %v606 = vpop.f32.mrb[0].mxu0
      %v607 = vadd.f32 %v263, %v606
      %v608 = vpop.f32.mrb[0].mxu0
      %v609 = vpop.f32.mrb[0].mxu0
      %v610 = vadd.f32 %v268, %v609
      %v611 = vpop.f32.mrb[0].mxu0
      %612 = vmatprep.mubr.bf16.mxu0 %v353
      %613 = vmatmul.mubr.bf16.gmra.mrb[0].mxu0 %v352
      %v614 = vpop.f32.mrb[0].mxu0
      %v615 = vadd.f32 %v273, %v614
      %v616 = vpop.f32.mrb[0].mxu0
      %v617 = vpop.f32.mrb[0].mxu0
      %v618 = vadd.f32 %v278, %v617
      %v619 = vpop.f32.mrb[0].mxu0
      %620 = vmatprep.mubr.bf16.mxu0 %v357
      %621 = vmatmul.mubr.bf16.gmra.mrb[0].mxu0 %v356
      %v622 = vpop.f32.mrb[0].mxu0
      %v623 = vadd.f32 %v283, %v622
      %v624 = vpop.f32.mrb[0].mxu0
      %v625 = vpop.f32.mrb[0].mxu0
      %v626 = vadd.f32 %v288, %v625
      %v627 = vpop.f32.mrb[0].mxu0
      %628 = vmatprep.mubr.bf16.mxu0 %v361
      %629 = vmatmul.mubr.bf16.gmra.mrb[0].mxu0 %v360
      %v630 = vpop.f32.mrb[0].mxu0
      %v631 = vadd.f32 %v293, %v630
      %v632 = vpop.f32.mrb[0].mxu0
      %v633 = vpop.f32.mrb[0].mxu0
      %v634 = vadd.f32 %v298, %v633
      %v635 = vpop.f32.mrb[0].mxu0
      %636 = vdwg.mxu0
      %637 = vmatprep.subr.bf16.mxu0 0
      %638 = vmatpush1.bf16.msra.mxu0 %v524
      %639 = vmatprep.subr.bf16.mxu0 0
      %640 = vmatpush1.bf16.msra.mxu0 %v525
      %641 = vmatprep.subr.bf16.mxu0 0
      %642 = vmatpush1.bf16.msra.mxu0 %v526
      %643 = vmatprep.subr.bf16.mxu0 0
      %644 = vmatpush1.bf16.msra.mxu0 %v527
      %645 = vmatprep.subr.bf16.mxu0 0
      %646 = vmatpush1.bf16.msra.mxu0 %v528
      %647 = vmatprep.subr.bf16.mxu0 0
      %648 = vmatpush1.bf16.msra.mxu0 %v529
      %649 = vmatprep.subr.bf16.mxu0 0
      %650 = vmatpush1.bf16.msra.mxu0 %v530
      %651 = vmatprep.subr.bf16.mxu0 0
      %652 = vmatpush1.bf16.msra.mxu0 %v531
      %653 = vmatprep.subr.bf16.mxu0 0
      %654 = vmatpush1.bf16.msra.mxu0 %v532
      %655 = vmatprep.subr.bf16.mxu0 0
      %656 = vmatpush1.bf16.msra.mxu0 %v533
      %657 = vmatprep.subr.bf16.mxu0 0
      %658 = vmatpush1.bf16.msra.mxu0 %v534
      %659 = vmatprep.subr.bf16.mxu0 0
      %660 = vmatpush1.bf16.msra.mxu0 %v535
      %661 = vmatprep.subr.bf16.mxu0 0
      %662 = vmatpush1.bf16.msra.mxu0 %v536
      %663 = vmatprep.subr.bf16.mxu0 0
      %664 = vmatpush1.bf16.msra.mxu0 %v537
      %665 = vmatprep.subr.bf16.mxu0 0
      %666 = vmatpush1.bf16.msra.mxu0 %v538
      %667 = vmatprep.subr.bf16.mxu0 0
      %668 = vmatpush1.bf16.msra.mxu0 %v539
      %669 = vmatprep.mubr.bf16.mxu0 %v351
      %670 = vmatmul.mubr.bf16.gmra.mrb[0].mxu0 %v350
      %v671 = vpop.f32.mrb[0].mxu0
      %v672 = vadd.f32 %v607, %v671
      %v673 = vpop.f32.mrb[0].mxu0
      %v674 = vpop.f32.mrb[0].mxu0
      %v675 = vadd.f32 %v610, %v674
      %v676 = vpop.f32.mrb[0].mxu0
      %677 = vmatprep.mubr.bf16.mxu0 %v355
      %678 = vmatmul.mubr.bf16.gmra.mrb[0].mxu0 %v354
      %v679 = vpop.f32.mrb[0].mxu0
      %v680 = vadd.f32 %v615, %v679
      %v681 = vpop.f32.mrb[0].mxu0
      %v682 = vpop.f32.mrb[0].mxu0
      %v683 = vadd.f32 %v618, %v682
      %v684 = vpop.f32.mrb[0].mxu0
      %685 = vmatprep.mubr.bf16.mxu0 %v359
      %686 = vmatmul.mubr.bf16.gmra.mrb[0].mxu0 %v358
      %v687 = vpop.f32.mrb[0].mxu0
      %v688 = vadd.f32 %v623, %v687
      %v689 = vpop.f32.mrb[0].mxu0
      %v690 = vpop.f32.mrb[0].mxu0
      %v691 = vadd.f32 %v626, %v690
      %v692 = vpop.f32.mrb[0].mxu0
      %693 = vmatprep.mubr.bf16.mxu0 %v363
      %694 = vmatmul.mubr.bf16.gmra.mrb[0].mxu0 %v362
      %v695 = vpop.f32.mrb[0].mxu0
      %v696 = vadd.f32 %v631, %v695
      %v697 = vpop.f32.mrb[0].mxu0
      %v698 = vpop.f32.mrb[0].mxu0
      %v699 = vadd.f32 %v634, %v698
      %v700 = vpop.f32.mrb[0].mxu0
      %701 = vdwg.mxu0
      %v702 = vmax.f32 %v672, 0.0
      %v703 = vmax.f32 %v675, 0.0
      %v704 = vmax.f32 %v680, 0.0
      %v705 = vmax.f32 %v683, 0.0
      %v706 = vmax.f32 %v688, 0.0
      %v707 = vmax.f32 %v691, 0.0
      %v708 = vmax.f32 %v696, 0.0
      %v709 = vmax.f32 %v699, 0.0
      %v710 = vlaneseq
      %v711 = vand.u32 %v710, 127
      %vm712 = vcmp.lt.s32.totalorder %v711, 121
      %v713 = vsel %vm712, %v702, 0.0
      %v714 = vsel %vm712, %v703, 0.0
      %v715 = vsel %vm712, %v704, 0.0
      %v716 = vsel %vm712, %v705, 0.0
      %v717 = vsel %vm712, %v706, 0.0
      %v718 = vsel %vm712, %v707, 0.0
      %v719 = vsel %vm712, %v708, 0.0
      %v720 = vsel %vm712, %v709, 0.0
      %721 = vadd.xlane.f32.xlu0 %v713
      %v722 = vpop.xlane.xlu0 %721
      %723 = vadd.xlane.f32.xlu0 %v714
      %v724 = vpop.xlane.xlu0 %723
      %725 = vadd.xlane.f32.xlu0 %v715
      %v726 = vpop.xlane.xlu0 %725
      %727 = vadd.xlane.f32.xlu0 %v716
      %v728 = vpop.xlane.xlu0 %727
      %729 = vadd.xlane.f32.xlu0 %v717
      %v730 = vpop.xlane.xlu0 %729
      %731 = vadd.xlane.f32.xlu0 %v718
      %v732 = vpop.xlane.xlu0 %731
      %733 = vadd.xlane.f32.xlu0 %v719
      %v734 = vpop.xlane.xlu0 %733
      %735 = vadd.xlane.f32.xlu0 %v720
      %v736 = vpop.xlane.xlu0 %735
      %v737 = vmul.f32 %v713, %v713
      %v738 = vmul.f32 %v714, %v714
      %v739 = vmul.f32 %v715, %v715
      %v740 = vmul.f32 %v716, %v716
      %v741 = vmul.f32 %v717, %v717
      %v742 = vmul.f32 %v718, %v718
      %v743 = vmul.f32 %v719, %v719
      %v744 = vmul.f32 %v720, %v720
      %745 = vadd.xlane.f32.xlu0 %v737
      %v746 = vpop.xlane.xlu0 %745
      %747 = vadd.xlane.f32.xlu0 %v738
      %v748 = vpop.xlane.xlu0 %747
      %749 = vadd.xlane.f32.xlu0 %v739
      %v750 = vpop.xlane.xlu0 %749
      %751 = vadd.xlane.f32.xlu0 %v740
      %v752 = vpop.xlane.xlu0 %751
      %753 = vadd.xlane.f32.xlu0 %v741
      %v754 = vpop.xlane.xlu0 %753
      %755 = vadd.xlane.f32.xlu0 %v742
      %v756 = vpop.xlane.xlu0 %755
      %757 = vadd.xlane.f32.xlu0 %v743
      %v758 = vpop.xlane.xlu0 %757
      %759 = vadd.xlane.f32.xlu0 %v744
      %v760 = vpop.xlane.xlu0 %759
      %v761 = vmul.f32 %v722, 0.008264462
      %v762 = vmul.f32 %v724, 0.008264462
      %v763 = vmul.f32 %v726, 0.008264462
      %v764 = vmul.f32 %v728, 0.008264462
      %v765 = vmul.f32 %v730, 0.008264462
      %v766 = vmul.f32 %v732, 0.008264462
      %v767 = vmul.f32 %v734, 0.008264462
      %v768 = vmul.f32 %v736, 0.008264462
      %v769 = vmul.f32 %v746, 0.008264462
      %v770 = vmul.f32 %v748, 0.008264462
      %v771 = vmul.f32 %v750, 0.008264462
      %v772 = vmul.f32 %v752, 0.008264462
      %v773 = vmul.f32 %v754, 0.008264462
      %v774 = vmul.f32 %v756, 0.008264462
      %v775 = vmul.f32 %v758, 0.008264462
      %v776 = vmul.f32 %v760, 0.008264462
      %v777 = vmul.f32 %v761, %v761
      %v778 = vmul.f32 %v762, %v762
      %v779 = vmul.f32 %v763, %v763
      %v780 = vmul.f32 %v764, %v764
      %v781 = vmul.f32 %v765, %v765
      %v782 = vmul.f32 %v766, %v766
      %v783 = vmul.f32 %v767, %v767
      %v784 = vmul.f32 %v768, %v768
      %v785 = vsub.f32 %v769, %v777
      %v786 = vsub.f32 %v770, %v778
      %v787 = vsub.f32 %v771, %v779
      %v788 = vsub.f32 %v772, %v780
      %v789 = vsub.f32 %v773, %v781
      %v790 = vsub.f32 %v774, %v782
      %v791 = vsub.f32 %v775, %v783
      %v792 = vsub.f32 %v776, %v784
      %v793 = vmax.f32 %v785, 0.0
      %v794 = vmax.f32 %v786, 0.0
      %v795 = vmax.f32 %v787, 0.0
      %v796 = vmax.f32 %v788, 0.0
      %v797 = vmax.f32 %v789, 0.0
      %v798 = vmax.f32 %v790, 0.0
      %v799 = vmax.f32 %v791, 0.0
      %v800 = vmax.f32 %v792, 0.0
      %v801 = vsub.f32 %v702, %v761
      %v802 = vsub.f32 %v703, %v762
      %v803 = vsub.f32 %v704, %v763
      %v804 = vsub.f32 %v705, %v764
      %v805 = vsub.f32 %v706, %v765
      %v806 = vsub.f32 %v707, %v766
      %v807 = vsub.f32 %v708, %v767
      %v808 = vsub.f32 %v709, %v768
      %v809 = vadd.f32 %v793, 1e-05
      %v810 = vadd.f32 %v794, 1e-05
      %v811 = vadd.f32 %v795, 1e-05
      %v812 = vadd.f32 %v796, 1e-05
      %v813 = vadd.f32 %v797, 1e-05
      %v814 = vadd.f32 %v798, 1e-05
      %v815 = vadd.f32 %v799, 1e-05
      %v816 = vadd.f32 %v800, 1e-05
      %v817 = vrsqrt.pop %v809
      %v818 = vrsqrt.pop %v810
      %v819 = vrsqrt.pop %v811
      %v820 = vrsqrt.pop %v812
      %v821 = vrsqrt.pop %v813
      %v822 = vrsqrt.pop %v814
      %v823 = vrsqrt.pop %v815
      %v824 = vrsqrt.pop %v816
      %v825 = vmul.f32 %v801, %v817
      %v826 = vmul.f32 %v802, %v818
      %v827 = vmul.f32 %v803, %v819
      %v828 = vmul.f32 %v804, %v820
      %v829 = vmul.f32 %v805, %v821
      %v830 = vmul.f32 %v806, %v822
      %v831 = vmul.f32 %v807, %v823
      %v832 = vmul.f32 %v808, %v824
      %v833 = vpack.c.bf16 %v826, %v825
      %v834 = vpack.c.bf16 %v828, %v827
      %v835 = vpack.c.bf16 %v830, %v829
      %v836 = vpack.c.bf16 %v832, %v831
      %v841 = vunpack.c.l.b16 %v833
      %v842 = vunpack.c.h.b16 %v833
      %v843 = vunpack.c.l.b16 %v834
      %v844 = vunpack.c.h.b16 %v834
      %v845 = vunpack.c.l.b16 %v835
      %v846 = vunpack.c.h.b16 %v835
      %v847 = vunpack.c.l.b16 %v836
      %v848 = vunpack.c.h.b16 %v836
      %v849 = vpack.c.b16 %v841, %v841
      %v850 = vpack.c.b16 %v842, %v842
      %v851 = vpack.c.b16 %v843, %v843
      %v852 = vpack.c.b16 %v844, %v844
      %v853 = vpack.c.b16 %v845, %v845
      %v854 = vpack.c.b16 %v846, %v846
      %v855 = vpack.c.b16 %v847, %v847
      %v856 = vpack.c.b16 %v848, %v848
      %865 = vst [vmem:[%s170] sm:$0xf] %v849
      %866 = vst [vmem:[%s170 + $0x4] sm:$0xf] %v850
      %867 = vst [vmem:[%s170 + $0x8] sm:$0xf] %v851
      %868 = vst [vmem:[%s170 + $0xc] sm:$0xf] %v852
      %869 = vst [vmem:[%s170 + $0x10] sm:$0xf] %v853
      %870 = vst [vmem:[%s170 + $0x14] sm:$0xf] %v854
      %871 = vst [vmem:[%s170 + $0x18] sm:$0xf] %v855
      %872 = vst [vmem:[%s170 + $0x1c] sm:$0xf] %v856
      %p873 = scmp.lt.s32.totalorder %s14, 1
      %s874 = scalar_select %p873, %s14, 1
      %s875 = smul.addr %s874, 8
      %s876 = smul.addr %s875, 4
      %s877 = scalar_lea.vmem %s3, %s876
      // Predicated region
      $region33: #{_lambda_.5} parent=31 // pred_check
        %p878 = pneg %p100
      $region34: #{_lambda_.5} parent=31 // pred_check_branch
        %880 = sbr.rel (%p878) target = $region36
      $region35: #{_lambda_.5} parent=31 // pred_region
        _
      $region36: #{_lambda_.5} parent=31 // pred_fallthru
        _
    $region32: #{_lambda_.5} parent=5 // pred_fallthru
      _
    %p881 = scmp.le.s32.totalorder 2, %s9
    // Predicated region
    $region37: #{_lambda_.5} parent=5 // pred_check
      %p882 = pneg %p881
    $region38: #{_lambda_.5} parent=5 // pred_check_branch
      %884 = sbr.rel (%p882) target = $region40
    $region39: #{_lambda_.5} parent=5 // pred_region
      %s885 = ssub.s32 %s9, 2
      // Predicated region
      $region41: #{_lambda_.5} parent=39 // pred_check
        %p886 = pneg %p106
      $region42: #{_lambda_.5} parent=39 // pred_check_branch
        %888 = sbr.rel (%p886) target = $region44
      $region43: #{_lambda_.5} parent=39 // pred_region
        %p889 = scmp.lt.s32.totalorder %s15, 1
        %s890 = scalar_select %p889, %s15, 1
        %s891 = smul.addr %s890, 8
        %s892 = smul.addr %s891, 4
        %s893 = scalar_lea.vmem %s3, %s892
      $region44: #{_lambda_.5} parent=39 // pred_fallthru
        _
    $region40: #{_lambda_.5} parent=5 // pred_fallthru
      _
  $region6: #{_lambda_.5} parent=0 // loop_footer
    %s13 = sadd.s32 1, %s9
  $region7: #{_lambda_.5} parent=0 // loop_footer_branch
    %8 = sbr.rel target = $region3
  $region8: #{_lambda_.5} parent=0 // loop_exit
    _

// kernel: _lambda_.6
$region0: #{_lambda_.6}
  #allocation0 [shape = 'u32[]', space=smem, size = 0x4, offset = 0x4, fixed_abs, tag = 'smem constant byte address 0x4 - core index']
  #allocation1 [shape = 'u32[144,128]{1,0:T(1,128)}', space=vmem, size = 0x12000, scoped, tag = 'internal scratch']
  %s0 = inlined_call_operand.vmem [shape: bf16[2,576,128], index: 0, kind: input, shape index: {}]
  %s1 = inlined_call_operand.vmem [shape: bf16[64,576], index: 1, kind: input, shape index: {}]
  %s2 = inlined_call_operand.vmem [shape: f32[64,1], index: 2, kind: input, shape index: {}]
  %s3 = inlined_call_operand.vmem [shape: bf16[2,64,128], index: 3, kind: output, shape index: {}]
  %s4 = sld [smem:[#allocation0]]
  $region45: #{_lambda_.6} parent=0
    _
  %s6 = ssub.s32 1, %s4
  %s7 = scalar_select 0, %s6, %s4
  loop: start=0, step=1, limit=4
  $region2: #{_lambda_.6} parent=0 // loop_pre_header
    _
  $region3: #{_lambda_.6} parent=0 // loop_header
    %s9 = sphi 0, %s13
    %p10 = scmp.ge.s32.totalorder %s9, 4
    %s19 = sphi 0, %s21
    %s22 = sphi 0, %s19
    %s23 = sphi 0, %s22
    %s39 = sphi 0, %s23
    %s43 = sphi 0, %s43
    %s45 = sphi 0, %s43
    %s46 = sphi 0, %s45
    %s60 = sphi 0, %s46
    %s64 = sphi 0, %s64
    %s66 = sphi 0, %s64
    %s67 = sphi 0, %s66
    %s81 = sphi 0, %s67
    %s87 = sphi 0, %s89
    %s90 = sphi 0, %s87
    %s91 = sphi 0, %s90
    %s107 = sphi 0, %s91
  $region4: #{_lambda_.6} parent=0 // loop_header_branch
    %12 = sbr.rel (%p10) target = $region8
  $region5: #{_lambda_.6} parent=0 // loop_body
    %s14 = ssub.s32 %s9, 1
    %s15 = ssub.s32 %s9, 2
    %s16 = sadd.s32 %s9, 1
    %s17 = ssub.s32 %s9, %s16
    %p18 = scmp.eq.s32.totalorder %s17, 0
    %s20 = sadd.s32 %s19, 1
    %s21 = scalar_select %p18, %s19, %s20
    %p24 = pneg %p18
    %p25 = scmp.eq.s32.totalorder %s9, 1
    %p26 = por %p24, %p25
    %p27 = scmp.ne.s32.totalorder %s19, %s22
    %p28 = scmp.eq.s32.totalorder %s9, 0
    %p29 = por %p27, %p28
    %p30 = scmp.ne.s32.totalorder %s19, %s22
    %p31 = scmp.eq.s32.totalorder %s14, 1
    %p32 = por %p30, %p31
    %p33 = scmp.ne.s32.totalorder %s22, %s23
    %p34 = scmp.eq.s32.totalorder %s14, 0
    %p35 = por %p33, %p34
    %p36 = scmp.ne.s32.totalorder %s22, %s23
    %p37 = scmp.eq.s32.totalorder %s15, 1
    %p38 = por %p36, %p37
    %p40 = scmp.ne.s32.totalorder %s23, %s39
    %p41 = scmp.eq.s32.totalorder %s15, 0
    %p42 = por %p40, %p41
    %s44 = sadd.s32 %s43, 1
    %p47 = scmp.eq.s32.totalorder %s9, 1
    %p48 = scmp.ne.s32.totalorder %s43, %s45
    %p49 = scmp.eq.s32.totalorder %s9, 0
    %p50 = por %p48, %p49
    %p51 = scmp.ne.s32.totalorder %s43, %s45
    %p52 = scmp.eq.s32.totalorder %s14, 1
    %p53 = por %p51, %p52
    %p54 = scmp.ne.s32.totalorder %s45, %s46
    %p55 = scmp.eq.s32.totalorder %s14, 0
    %p56 = por %p54, %p55
    %p57 = scmp.ne.s32.totalorder %s45, %s46
    %p58 = scmp.eq.s32.totalorder %s15, 1
    %p59 = por %p57, %p58
    %p61 = scmp.ne.s32.totalorder %s46, %s60
    %p62 = scmp.eq.s32.totalorder %s15, 0
    %p63 = por %p61, %p62
    %s65 = sadd.s32 %s64, 1
    %p68 = scmp.eq.s32.totalorder %s9, 1
    %p69 = scmp.ne.s32.totalorder %s64, %s66
    %p70 = scmp.eq.s32.totalorder %s9, 0
    %p71 = por %p69, %p70
    %p72 = scmp.ne.s32.totalorder %s64, %s66
    %p73 = scmp.eq.s32.totalorder %s14, 1
    %p74 = por %p72, %p73
    %p75 = scmp.ne.s32.totalorder %s66, %s67
    %p76 = scmp.eq.s32.totalorder %s14, 0
    %p77 = por %p75, %p76
    %p78 = scmp.ne.s32.totalorder %s66, %s67
    %p79 = scmp.eq.s32.totalorder %s15, 1
    %p80 = por %p78, %p79
    %p82 = scmp.ne.s32.totalorder %s67, %s81
    %p83 = scmp.eq.s32.totalorder %s15, 0
    %p84 = por %p82, %p83
    %s85 = ssub.s32 %s9, %s16
    %p86 = scmp.eq.s32.totalorder %s85, 0
    %s88 = sadd.s32 %s87, 1
    %s89 = scalar_select %p86, %s87, %s88
    %p92 = pneg %p86
    %p93 = scmp.eq.s32.totalorder %s9, 1
    %p94 = por %p92, %p93
    %p95 = scmp.ne.s32.totalorder %s87, %s90
    %p96 = scmp.eq.s32.totalorder %s9, 0
    %p97 = por %p95, %p96
    %p98 = scmp.ne.s32.totalorder %s87, %s90
    %p99 = scmp.eq.s32.totalorder %s14, 1
    %p100 = por %p98, %p99
    %p101 = scmp.ne.s32.totalorder %s90, %s91
    %p102 = scmp.eq.s32.totalorder %s14, 0
    %p103 = por %p101, %p102
    %p104 = scmp.ne.s32.totalorder %s90, %s91
    %p105 = scmp.eq.s32.totalorder %s15, 1
    %p106 = por %p104, %p105
    %p108 = scmp.ne.s32.totalorder %s91, %s107
    %p109 = scmp.eq.s32.totalorder %s15, 0
    %p110 = por %p108, %p109
    %p111 = scmp.le.s32.totalorder 1, %s9
    %p112 = scmp.lt.s32.totalorder %s9, 3
    %p113 = pnand %p111, %p112
    %p114 = pneg %p113
    // Predicated region
    $region9: #{_lambda_.6} parent=5 // pred_check
      _
    $region10: #{_lambda_.6} parent=5 // pred_check_branch
      %116 = sbr.rel (%p113) target = $region12
    $region11: #{_lambda_.6} parent=5 // pred_region
      %s117 = ssub.s32 %s9, 1
      // Predicated region
      $region13: #{_lambda_.6} parent=11 // pred_check
        %p118 = pneg %p56
      $region14: #{_lambda_.6} parent=11 // pred_check_branch
        %120 = sbr.rel (%p118) target = $region16
      $region15: #{_lambda_.6} parent=11 // pred_region
        _
      $region16: #{_lambda_.6} parent=11 // pred_fallthru
        _
      // Predicated region
      $region17: #{_lambda_.6} parent=11 // pred_check
        %p121 = pneg %p77
      $region18: #{_lambda_.6} parent=11 // pred_check_branch
        %123 = sbr.rel (%p121) target = $region20
      $region19: #{_lambda_.6} parent=11 // pred_region
        _
      $region20: #{_lambda_.6} parent=11 // pred_fallthru
        _
    $region12: #{_lambda_.6} parent=5 // pred_fallthru
      _
    %p124 = scmp.lt.s32.totalorder %s9, 2
    // Predicated region
    $region21: #{_lambda_.6} parent=5 // pred_check
      %p125 = pneg %p124
    $region22: #{_lambda_.6} parent=5 // pred_check_branch
      %127 = sbr.rel (%p125) target = $region24
    $region23: #{_lambda_.6} parent=5 // pred_region
      // Predicated region
      $region25: #{_lambda_.6} parent=23 // pred_check
        %p128 = pneg %p29
      $region26: #{_lambda_.6} parent=23 // pred_check_branch
        %130 = sbr.rel (%p128) target = $region28
      $region27: #{_lambda_.6} parent=23 // pred_region
        %p131 = scmp.lt.s32.totalorder %s9, 1
        %s132 = scalar_select %p131, %s9, 1
        %s133 = smul.addr %s132, 72
        %s134 = smul.addr %s133, 4
        %s135 = scalar_lea.vmem %s0, %s134
      $region28: #{_lambda_.6} parent=23 // pred_fallthru
        _
    $region24: #{_lambda_.6} parent=5 // pred_fallthru
      _
    %p136 = scmp.le.s32.totalorder 1, %s9
    %p137 = scmp.lt.s32.totalorder %s9, 3
    %p138 = pnand %p136, %p137
    %p139 = pneg %p138
    // Predicated region
    $region29: #{_lambda_.6} parent=5 // pred_check
      _
    $region30: #{_lambda_.6} parent=5 // pred_check_branch
      %141 = sbr.rel (%p138) target = $region32
    $region31: #{_lambda_.6} parent=5 // pred_region
      %s142 = ssub.s32 %s9, 1
      %p143 = scmp.lt.s32.totalorder %s14, 1
      %s144 = scalar_select %p143, %s14, 1
      %s145 = smul.addr %s144, 72
      %s146 = smul.addr %s145, 4
      %s147 = scalar_lea.vmem %s0, %s146
      %p148 = pneg %p35
      %p149 = pneg %p32
      %p150 = pneg %p56
      %p151 = pneg %p53
      %p152 = pneg %p77
      %p153 = pneg %p74
      %p154 = pneg %p103
      %p155 = pneg %p100
      %p156 = scmp.lt.s32.totalorder %s14, 1
      %s157 = scalar_select %p156, %s14, 1
      %s158 = smul.addr %s157, 8
      %s159 = smul.addr %s158, 4
      %s160 = scalar_lea.vmem %s3, %s159
      %p161 = scmp.lt.s32.totalorder %s14, 1
      %s162 = scalar_select %p161, %s14, 1
      %s163 = smul.addr %s162, 72
      %s164 = smul.addr %s163, 4
      %s165 = scalar_lea.vmem %s0, %s164
      %p166 = scmp.lt.s32.totalorder %s14, 1
      %s167 = scalar_select %p166, %s14, 1
      %s168 = smul.addr %s167, 8
      %s169 = smul.addr %s168, 4
      %s170 = scalar_lea.vmem %s3, %s169
      %v172 = vld [vmem:[%s1] sm:$0xff]
      %v173 = vld [vmem:[%s1 + $0x8] sm:$0xff]
      %v174 = vld [vmem:[%s1 + $0x10] sm:$0xf]
      %v175 = vld [vmem:[%s1 + $0x14] sm:$0xff]
      %v176 = vld [vmem:[%s1 + $0x1c] sm:$0xff]
      %v177 = vld [vmem:[%s1 + $0x24] sm:$0xf]
      %v178 = vld [vmem:[%s1 + $0x28] sm:$0xff]
      %v179 = vld [vmem:[%s1 + $0x30] sm:$0xff]
      %v180 = vld [vmem:[%s1 + $0x38] sm:$0xf]
      %v181 = vld [vmem:[%s1 + $0x3c] sm:$0xff]
      %v182 = vld [vmem:[%s1 + $0x44] sm:$0xff]
      %v183 = vld [vmem:[%s1 + $0x4c] sm:$0xf]
      %v184 = vld [vmem:[%s1 + $0x50] sm:$0xff]
      %v185 = vld [vmem:[%s1 + $0x58] sm:$0xff]
      %v186 = vld [vmem:[%s1 + $0x60] sm:$0xf]
      %v187 = vld [vmem:[%s1 + $0x64] sm:$0xff]
      %v188 = vld [vmem:[%s1 + $0x6c] sm:$0xff]
      %v189 = vld [vmem:[%s1 + $0x74] sm:$0xf]
      %v190 = vld [vmem:[%s1 + $0x78] sm:$0xff]
      %v191 = vld [vmem:[%s1 + $0x80] sm:$0xff]
      %v192 = vld [vmem:[%s1 + $0x88] sm:$0xf]
      %v193 = vld [vmem:[%s1 + $0x8c] sm:$0xff]
      %v194 = vld [vmem:[%s1 + $0x94] sm:$0xff]
      %v195 = vld [vmem:[%s1 + $0x9c] sm:$0xf]
      %v196 = vld [vmem:[%s165] sm:$0xf]
      %v197 = vld [vmem:[%s165 + $0x4] sm:$0xf]
      %v198 = vld [vmem:[%s165 + $0x8] sm:$0xf]
      %v199 = vld [vmem:[%s165 + $0xc] sm:$0xf]
      %v200 = vld [vmem:[%s165 + $0x10] sm:$0xf]
      %v201 = vld [vmem:[%s165 + $0x14] sm:$0xf]
      %v202 = vld [vmem:[%s165 + $0x18] sm:$0xf]
      %v203 = vld [vmem:[%s165 + $0x1c] sm:$0xf]
      %v204 = vld [vmem:[%s165 + $0x20] sm:$0xf]
      %v205 = vld [vmem:[%s165 + $0x24] sm:$0xf]
      %v206 = vld [vmem:[%s165 + $0x28] sm:$0xf]
      %v207 = vld [vmem:[%s165 + $0x2c] sm:$0xf]
      %v208 = vld [vmem:[%s165 + $0x30] sm:$0xf]
      %v209 = vld [vmem:[%s165 + $0x34] sm:$0xf]
      %v210 = vld [vmem:[%s165 + $0x38] sm:$0xf]
      %v211 = vld [vmem:[%s165 + $0x3c] sm:$0xf]
      %v212 = vld [vmem:[%s165 + $0x40] sm:$0xf]
      %v213 = vld [vmem:[%s165 + $0x44] sm:$0xf]
      %v214 = vld [vmem:[%s165 + $0x48] sm:$0xf]
      %v215 = vld [vmem:[%s165 + $0x4c] sm:$0xf]
      %v216 = vld [vmem:[%s165 + $0x50] sm:$0xf]
      %v217 = vld [vmem:[%s165 + $0x54] sm:$0xf]
      %v218 = vld [vmem:[%s165 + $0x58] sm:$0xf]
      %v219 = vld [vmem:[%s165 + $0x5c] sm:$0xf]
      %v220 = vld [vmem:[%s165 + $0x60] sm:$0xf]
      %v221 = vld [vmem:[%s165 + $0x64] sm:$0xf]
      %v222 = vld [vmem:[%s165 + $0x68] sm:$0xf]
      %v223 = vld [vmem:[%s165 + $0x6c] sm:$0xf]
      %v224 = vld [vmem:[%s165 + $0x70] sm:$0xf]
      %v225 = vld [vmem:[%s165 + $0x74] sm:$0xf]
      %v226 = vld [vmem:[%s165 + $0x78] sm:$0xf]
      %v227 = vld [vmem:[%s165 + $0x7c] sm:$0xf]
      %v228 = vld [vmem:[%s165 + $0x80] sm:$0xf]
      %v229 = vld [vmem:[%s165 + $0x84] sm:$0xf]
      %v230 = vld [vmem:[%s165 + $0x88] sm:$0xf]
      %v231 = vld [vmem:[%s165 + $0x8c] sm:$0xf]
      %v232 = vld [vmem:[%s165 + $0x90] sm:$0xf]
      %v233 = vld [vmem:[%s165 + $0x94] sm:$0xf]
      %v234 = vld [vmem:[%s165 + $0x98] sm:$0xf]
      %v235 = vld [vmem:[%s165 + $0x9c] sm:$0xf]
      %v236 = vld [vmem:[%s165 + $0xa0] sm:$0xf]
      %v237 = vld [vmem:[%s165 + $0xa4] sm:$0xf]
      %v238 = vld [vmem:[%s165 + $0xa8] sm:$0xf]
      %v239 = vld [vmem:[%s165 + $0xac] sm:$0xf]
      %v240 = vld [vmem:[%s165 + $0xb0] sm:$0xf]
      %v241 = vld [vmem:[%s165 + $0xb4] sm:$0xf]
      %v242 = vld [vmem:[%s165 + $0xb8] sm:$0xf]
      %v243 = vld [vmem:[%s165 + $0xbc] sm:$0xf]
      %v244 = vld [vmem:[%s165 + $0xc0] sm:$0xf]
      %v245 = vld [vmem:[%s165 + $0xc4] sm:$0xf]
      %v246 = vld [vmem:[%s165 + $0xc8] sm:$0xf]
      %v247 = vld [vmem:[%s165 + $0xcc] sm:$0xf]
      %v248 = vld [vmem:[%s165 + $0xd0] sm:$0xf]
      %v249 = vld [vmem:[%s165 + $0xd4] sm:$0xf]
      %v250 = vld [vmem:[%s165 + $0xd8] sm:$0xf]
      %v251 = vld [vmem:[%s165 + $0xdc] sm:$0xf]
      %v252 = vld [vmem:[%s165 + $0xe0] sm:$0xf]
      %v253 = vld [vmem:[%s165 + $0xe4] sm:$0xf]
      %v254 = vld [vmem:[%s165 + $0xe8] sm:$0xf]
      %v255 = vld [vmem:[%s165 + $0xec] sm:$0xf]
      %v256 = vld [vmem:[%s165 + $0xf0] sm:$0xf]
      %v257 = vld [vmem:[%s165 + $0xf4] sm:$0xf]
      %v258 = vld [vmem:[%s165 + $0xf8] sm:$0xf]
      %v259 = vld [vmem:[%s165 + $0xfc] sm:$0xf]
      %v260 = vld [vmem:[%s165 + $0x100] sm:$0xf]
      %v261 = vld [vmem:[%s165 + $0x104] sm:$0xf]
      %v262 = vld [vmem:[%s165 + $0x108] sm:$0xf]
      %v263 = vld [vmem:[%s165 + $0x10c] sm:$0xf]
      %v264 = vld [vmem:[%s165 + $0x110] sm:$0xf]
      %v265 = vld [vmem:[%s165 + $0x114] sm:$0xf]
      %v266 = vld [vmem:[%s165 + $0x118] sm:$0xf]
      %v267 = vld [vmem:[%s165 + $0x11c] sm:$0xf]
      %v268 = vld [vmem:[%s2] sm:$0xff]
      %v269 = vld [vmem:[%s2 + $0x8] sm:$0xff]
      %v270 = vld [vmem:[%s2 + $0x10] sm:$0xff]
      %v271 = vld [vmem:[%s2 + $0x18] sm:$0xff]
      %v272 = vld [vmem:[%s2 + $0x20] sm:$0xff]
      %v273 = vld [vmem:[%s2 + $0x28] sm:$0xff]
      %v274 = vld [vmem:[%s2 + $0x30] sm:$0xff]
      %v275 = vld [vmem:[%s2 + $0x38] sm:$0xff]
      %277 = vset.pattern.permute.xlu0 0
      %278 = vperm.xlu0 %277, %v268
      %v279 = vpop.permute.xlu0 %278
      %282 = vset.pattern.permute.xlu0 0
      %283 = vperm.xlu0 %282, %v269
      %v284 = vpop.permute.xlu0 %283
      %287 = vset.pattern.permute.xlu0 0
      %288 = vperm.xlu0 %287, %v270
      %v289 = vpop.permute.xlu0 %288
      %292 = vset.pattern.permute.xlu0 0
      %293 = vperm.xlu0 %292, %v271
      %v294 = vpop.permute.xlu0 %293
      %297 = vset.pattern.permute.xlu0 0
      %298 = vperm.xlu0 %297, %v272
      %v299 = vpop.permute.xlu0 %298
      %302 = vset.pattern.permute.xlu0 0
      %303 = vperm.xlu0 %302, %v273
      %v304 = vpop.permute.xlu0 %303
      %307 = vset.pattern.permute.xlu0 0
      %308 = vperm.xlu0 %307, %v274
      %v309 = vpop.permute.xlu0 %308
      %312 = vset.pattern.permute.xlu0 0
      %313 = vperm.xlu0 %312, %v275
      %v314 = vpop.permute.xlu0 %313
      %v340 = vunpack.c.l.b16 %v172
      %v341 = vunpack.c.h.b16 %v172
      %v342 = vunpack.c.l.b16 %v173
      %v343 = vunpack.c.h.b16 %v173
      %v344 = vunpack.c.l.b16 %v174
      %v345 = vunpack.c.l.b16 %v175
      %v346 = vunpack.c.h.b16 %v175
      %v347 = vunpack.c.l.b16 %v176
      %v348 = vunpack.c.h.b16 %v176
      %v349 = vunpack.c.l.b16 %v177
      %v350 = vunpack.c.l.b16 %v178
      %v351 = vunpack.c.h.b16 %v178
      %v352 = vunpack.c.l.b16 %v179
      %v353 = vunpack.c.h.b16 %v179
      %v354 = vunpack.c.l.b16 %v180
      %v355 = vunpack.c.l.b16 %v181
      %v356 = vunpack.c.h.b16 %v181
      %v357 = vunpack.c.l.b16 %v182
      %v358 = vunpack.c.h.b16 %v182
      %v359 = vunpack.c.l.b16 %v183
      %v360 = vunpack.c.l.b16 %v184
      %v361 = vunpack.c.h.b16 %v184
      %v362 = vunpack.c.l.b16 %v185
      %v363 = vunpack.c.h.b16 %v185
      %v364 = vunpack.c.l.b16 %v186
      %v365 = vunpack.c.l.b16 %v187
      %v366 = vunpack.c.h.b16 %v187
      %v367 = vunpack.c.l.b16 %v188
      %v368 = vunpack.c.h.b16 %v188
      %v369 = vunpack.c.l.b16 %v189
      %v370 = vunpack.c.l.b16 %v190
      %v371 = vunpack.c.h.b16 %v190
      %v372 = vunpack.c.l.b16 %v191
      %v373 = vunpack.c.h.b16 %v191
      %v374 = vunpack.c.l.b16 %v192
      %v375 = vunpack.c.l.b16 %v193
      %v376 = vunpack.c.h.b16 %v193
      %v377 = vunpack.c.l.b16 %v194
      %v378 = vunpack.c.h.b16 %v194
      %v379 = vunpack.c.l.b16 %v195
      %v380 = vpack.c.b16 %v345, %v340
      %v381 = vpack.c.b16 %v346, %v341
      %v382 = vpack.c.b16 %v347, %v342
      %v383 = vpack.c.b16 %v348, %v343
      %v384 = vpack.c.b16 %v349, %v344
      %v385 = vpack.c.b16 %v355, %v350
      %v386 = vpack.c.b16 %v356, %v351
      %v387 = vpack.c.b16 %v357, %v352
      %v388 = vpack.c.b16 %v358, %v353
      %v389 = vpack.c.b16 %v359, %v354
      %v390 = vpack.c.b16 %v365, %v360
      %v391 = vpack.c.b16 %v366, %v361
      %v392 = vpack.c.b16 %v367, %v362
      %v393 = vpack.c.b16 %v368, %v363
      %v394 = vpack.c.b16 %v369, %v364
      %v395 = vpack.c.b16 %v375, %v370
      %v396 = vpack.c.b16 %v376, %v371
      %v397 = vpack.c.b16 %v377, %v372
      %v398 = vpack.c.b16 %v378, %v373
      %v399 = vpack.c.b16 %v379, %v374
      %v488 = vunpack.c.l.b16 %v196
      %v489 = vunpack.c.l.b16 %v197
      %v490 = vunpack.c.l.b16 %v198
      %v491 = vunpack.c.l.b16 %v199
      %v492 = vunpack.c.l.b16 %v200
      %v493 = vunpack.c.l.b16 %v201
      %v494 = vunpack.c.l.b16 %v202
      %v495 = vunpack.c.l.b16 %v203
      %v496 = vunpack.c.l.b16 %v204
      %v497 = vunpack.c.l.b16 %v205
      %v498 = vunpack.c.l.b16 %v206
      %v499 = vunpack.c.l.b16 %v207
      %v500 = vunpack.c.l.b16 %v208
      %v501 = vunpack.c.l.b16 %v209
      %v502 = vunpack.c.l.b16 %v210
      %v503 = vunpack.c.l.b16 %v211
      %v504 = vunpack.c.l.b16 %v212
      %v505 = vunpack.c.l.b16 %v213
      %v506 = vunpack.c.l.b16 %v214
      %v507 = vunpack.c.l.b16 %v215
      %v508 = vunpack.c.l.b16 %v216
      %v509 = vunpack.c.l.b16 %v217
      %v510 = vunpack.c.l.b16 %v218
      %v511 = vunpack.c.l.b16 %v219
      %v512 = vunpack.c.l.b16 %v220
      %v513 = vunpack.c.l.b16 %v221
      %v514 = vunpack.c.l.b16 %v222
      %v515 = vunpack.c.l.b16 %v223
      %v516 = vunpack.c.l.b16 %v224
      %v517 = vunpack.c.l.b16 %v225
      %v518 = vunpack.c.l.b16 %v226
      %v519 = vunpack.c.l.b16 %v227
      %v520 = vunpack.c.l.b16 %v228
      %v521 = vunpack.c.l.b16 %v229
      %v522 = vunpack.c.l.b16 %v230
      %v523 = vunpack.c.l.b16 %v231
      %v524 = vunpack.c.l.b16 %v232
      %v525 = vunpack.c.l.b16 %v233
      %v526 = vunpack.c.l.b16 %v234
      %v527 = vunpack.c.l.b16 %v235
      %v528 = vunpack.c.l.b16 %v236
      %v529 = vunpack.c.l.b16 %v237
      %v530 = vunpack.c.l.b16 %v238
      %v531 = vunpack.c.l.b16 %v239
      %v532 = vunpack.c.l.b16 %v240
      %v533 = vunpack.c.l.b16 %v241
      %v534 = vunpack.c.l.b16 %v242
      %v535 = vunpack.c.l.b16 %v243
      %v536 = vunpack.c.l.b16 %v244
      %v537 = vunpack.c.l.b16 %v245
      %v538 = vunpack.c.l.b16 %v246
      %v539 = vunpack.c.l.b16 %v247
      %v540 = vunpack.c.l.b16 %v248
      %v541 = vunpack.c.l.b16 %v249
      %v542 = vunpack.c.l.b16 %v250
      %v543 = vunpack.c.l.b16 %v251
      %v544 = vunpack.c.l.b16 %v252
      %v545 = vunpack.c.l.b16 %v253
      %v546 = vunpack.c.l.b16 %v254
      %v547 = vunpack.c.l.b16 %v255
      %v548 = vunpack.c.l.b16 %v256
      %v549 = vunpack.c.l.b16 %v257
      %v550 = vunpack.c.l.b16 %v258
      %v551 = vunpack.c.l.b16 %v259
      %v552 = vunpack.c.l.b16 %v260
      %v553 = vunpack.c.l.b16 %v261
      %v554 = vunpack.c.l.b16 %v262
      %v555 = vunpack.c.l.b16 %v263
      %v556 = vunpack.c.l.b16 %v264
      %v557 = vunpack.c.l.b16 %v265
      %v558 = vunpack.c.l.b16 %v266
      %v559 = vunpack.c.l.b16 %v267
      %v560 = vpack.c.b16 %v489, %v488
      %v561 = vpack.c.b16 %v491, %v490
      %v562 = vpack.c.b16 %v493, %v492
      %v563 = vpack.c.b16 %v495, %v494
      %v564 = vpack.c.b16 %v497, %v496
      %v565 = vpack.c.b16 %v499, %v498
      %v566 = vpack.c.b16 %v501, %v500
      %v567 = vpack.c.b16 %v503, %v502
      %v568 = vpack.c.b16 %v505, %v504
      %v569 = vpack.c.b16 %v507, %v506
      %v570 = vpack.c.b16 %v509, %v508
      %v571 = vpack.c.b16 %v511, %v510
      %v572 = vpack.c.b16 %v513, %v512
      %v573 = vpack.c.b16 %v515, %v514
      %v574 = vpack.c.b16 %v517, %v516
      %v575 = vpack.c.b16 %v519, %v518
      %v576 = vpack.c.b16 %v521, %v520
      %v577 = vpack.c.b16 %v523, %v522
      %v578 = vpack.c.b16 %v525, %v524
      %v579 = vpack.c.b16 %v527, %v526
      %v580 = vpack.c.b16 %v529, %v528
      %v581 = vpack.c.b16 %v531, %v530
      %v582 = vpack.c.b16 %v533, %v532
      %v583 = vpack.c.b16 %v535, %v534
      %v584 = vpack.c.b16 %v537, %v536
      %v585 = vpack.c.b16 %v539, %v538
      %v586 = vpack.c.b16 %v541, %v540
      %v587 = vpack.c.b16 %v543, %v542
      %v588 = vpack.c.b16 %v545, %v544
      %v589 = vpack.c.b16 %v547, %v546
      %v590 = vpack.c.b16 %v549, %v548
      %v591 = vpack.c.b16 %v551, %v550
      %v592 = vpack.c.b16 %v553, %v552
      %v593 = vpack.c.b16 %v555, %v554
      %v594 = vpack.c.b16 %v557, %v556
      %v595 = vpack.c.b16 %v559, %v558
      %vm632 = vcmask 523264
      %v634 = vsel %vm632, %v384, 0
      %v637 = vsel %vm632, %v389, 0
      %v640 = vsel %vm632, %v394, 0
      %v643 = vsel %vm632, %v399, 0
      %645 = vmatprep.subr.bf16.mxu0 0
      %646 = vmatpush1.bf16.msra.mxu0 %v560
      %647 = vmatprep.subr.bf16.mxu0 0
      %648 = vmatpush1.bf16.msra.mxu0 %v561
      %649 = vmatprep.subr.bf16.mxu0 0
      %650 = vmatpush1.bf16.msra.mxu0 %v562
      %651 = vmatprep.subr.bf16.mxu0 0
      %652 = vmatpush1.bf16.msra.mxu0 %v563
      %653 = vmatprep.subr.bf16.mxu0 0
      %654 = vmatpush1.bf16.msra.mxu0 %v564
      %655 = vmatprep.subr.bf16.mxu0 0
      %656 = vmatpush1.bf16.msra.mxu0 %v565
      %657 = vmatprep.subr.bf16.mxu0 0
      %658 = vmatpush1.bf16.msra.mxu0 %v566
      %659 = vmatprep.subr.bf16.mxu0 0
      %660 = vmatpush1.bf16.msra.mxu0 %v567
      %661 = vmatprep.subr.bf16.mxu0 0
      %662 = vmatpush1.bf16.msra.mxu0 %v568
      %663 = vmatprep.subr.bf16.mxu0 0
      %664 = vmatpush1.bf16.msra.mxu0 %v569
      %665 = vmatprep.subr.bf16.mxu0 0
      %666 = vmatpush1.bf16.msra.mxu0 %v570
      %667 = vmatprep.subr.bf16.mxu0 0
      %668 = vmatpush1.bf16.msra.mxu0 %v571
      %669 = vmatprep.subr.bf16.mxu0 0
      %670 = vmatpush1.bf16.msra.mxu0 %v572
      %671 = vmatprep.subr.bf16.mxu0 0
      %672 = vmatpush1.bf16.msra.mxu0 %v573
      %673 = vmatprep.subr.bf16.mxu0 0
      %674 = vmatpush1.bf16.msra.mxu0 %v574
      %675 = vmatprep.subr.bf16.mxu0 0
      %676 = vmatpush1.bf16.msra.mxu0 %v575
      %677 = vmatprep.mubr.bf16.mxu0 %v381
      %678 = vmatmul.mubr.bf16.gmra.mrb[0].mxu0 %v380
      %v679 = vpop.f32.mrb[0].mxu0
      %v680 = vadd.f32 %v279, %v679
      %v681 = vpop.f32.mrb[0].mxu0
      %v682 = vpop.f32.mrb[0].mxu0
      %v683 = vadd.f32 %v284, %v682
      %v684 = vpop.f32.mrb[0].mxu0
      %685 = vmatprep.mubr.bf16.mxu0 %v386
      %686 = vmatmul.mubr.bf16.gmra.mrb[0].mxu0 %v385
      %v687 = vpop.f32.mrb[0].mxu0
      %v688 = vadd.f32 %v289, %v687
      %v689 = vpop.f32.mrb[0].mxu0
      %v690 = vpop.f32.mrb[0].mxu0
      %v691 = vadd.f32 %v294, %v690
      %v692 = vpop.f32.mrb[0].mxu0
      %693 = vmatprep.mubr.bf16.mxu0 %v391
      %694 = vmatmul.mubr.bf16.gmra.mrb[0].mxu0 %v390
      %v695 = vpop.f32.mrb[0].mxu0
      %v696 = vadd.f32 %v299, %v695
      %v697 = vpop.f32.mrb[0].mxu0
      %v698 = vpop.f32.mrb[0].mxu0
      %v699 = vadd.f32 %v304, %v698
      %v700 = vpop.f32.mrb[0].mxu0
      %701 = vmatprep.mubr.bf16.mxu0 %v396
      %702 = vmatmul.mubr.bf16.gmra.mrb[0].mxu0 %v395
      %v703 = vpop.f32.mrb[0].mxu0
      %v704 = vadd.f32 %v309, %v703
      %v705 = vpop.f32.mrb[0].mxu0
      %v706 = vpop.f32.mrb[0].mxu0
      %v707 = vadd.f32 %v314, %v706
      %v708 = vpop.f32.mrb[0].mxu0
      %709 = vdwg.mxu0
      %710 = vmatprep.subr.bf16.mxu0 0
      %711 = vmatpush1.bf16.msra.mxu0 %v576
      %712 = vmatprep.subr.bf16.mxu0 0
      %713 = vmatpush1.bf16.msra.mxu0 %v577
      %714 = vmatprep.subr.bf16.mxu0 0
      %715 = vmatpush1.bf16.msra.mxu0 %v578
      %716 = vmatprep.subr.bf16.mxu0 0
      %717 = vmatpush1.bf16.msra.mxu0 %v579
      %718 = vmatprep.subr.bf16.mxu0 0
      %719 = vmatpush1.bf16.msra.mxu0 %v580
      %720 = vmatprep.subr.bf16.mxu0 0
      %721 = vmatpush1.bf16.msra.mxu0 %v581
      %722 = vmatprep.subr.bf16.mxu0 0
      %723 = vmatpush1.bf16.msra.mxu0 %v582
      %724 = vmatprep.subr.bf16.mxu0 0
      %725 = vmatpush1.bf16.msra.mxu0 %v583
      %726 = vmatprep.subr.bf16.mxu0 0
      %727 = vmatpush1.bf16.msra.mxu0 %v584
      %728 = vmatprep.subr.bf16.mxu0 0
      %729 = vmatpush1.bf16.msra.mxu0 %v585
      %730 = vmatprep.subr.bf16.mxu0 0
      %731 = vmatpush1.bf16.msra.mxu0 %v586
      %732 = vmatprep.subr.bf16.mxu0 0
      %733 = vmatpush1.bf16.msra.mxu0 %v587
      %734 = vmatprep.subr.bf16.mxu0 0
      %735 = vmatpush1.bf16.msra.mxu0 %v588
      %736 = vmatprep.subr.bf16.mxu0 0
      %737 = vmatpush1.bf16.msra.mxu0 %v589
      %738 = vmatprep.subr.bf16.mxu0 0
      %739 = vmatpush1.bf16.msra.mxu0 %v590
      %740 = vmatprep.subr.bf16.mxu0 0
      %741 = vmatpush1.bf16.msra.mxu0 %v591
      %742 = vmatprep.mubr.bf16.mxu0 %v383
      %743 = vmatmul.mubr.bf16.gmra.mrb[0].mxu0 %v382
      %v744 = vpop.f32.mrb[0].mxu0
      %v745 = vadd.f32 %v680, %v744
      %v746 = vpop.f32.mrb[0].mxu0
      %v747 = vpop.f32.mrb[0].mxu0
      %v748 = vadd.f32 %v683, %v747
      %v749 = vpop.f32.mrb[0].mxu0
      %750 = vmatprep.mubr.bf16.mxu0 %v388
      %751 = vmatmul.mubr.bf16.gmra.mrb[0].mxu0 %v387
      %v752 = vpop.f32.mrb[0].mxu0
      %v753 = vadd.f32 %v688, %v752
      %v754 = vpop.f32.mrb[0].mxu0
      %v755 = vpop.f32.mrb[0].mxu0
      %v756 = vadd.f32 %v691, %v755
      %v757 = vpop.f32.mrb[0].mxu0
      %758 = vmatprep.mubr.bf16.mxu0 %v393
      %759 = vmatmul.mubr.bf16.gmra.mrb[0].mxu0 %v392
      %v760 = vpop.f32.mrb[0].mxu0
      %v761 = vadd.f32 %v696, %v760
      %v762 = vpop.f32.mrb[0].mxu0
      %v763 = vpop.f32.mrb[0].mxu0
      %v764 = vadd.f32 %v699, %v763
      %v765 = vpop.f32.mrb[0].mxu0
      %766 = vmatprep.mubr.bf16.mxu0 %v398
      %767 = vmatmul.mubr.bf16.gmra.mrb[0].mxu0 %v397
      %v768 = vpop.f32.mrb[0].mxu0
      %v769 = vadd.f32 %v704, %v768
      %v770 = vpop.f32.mrb[0].mxu0
      %v771 = vpop.f32.mrb[0].mxu0
      %v772 = vadd.f32 %v707, %v771
      %v773 = vpop.f32.mrb[0].mxu0
      %774 = vdwg.mxu0
      %775 = vmatprep.subr.bf16.mxu0 0
      %776 = vmatpush1.bf16.msra.mxu0 %v592
      %777 = vmatprep.subr.bf16.mxu0 0
      %778 = vmatpush1.bf16.msra.mxu0 %v593
      %779 = vmatprep.subr.bf16.mxu0 0
      %780 = vmatpush1.bf16.msra.mxu0 %v594
      %781 = vmatprep.subr.bf16.mxu0 0
      %782 = vmatpush1.bf16.msra.mxu0 %v595
      %783 = vmatprep.subr.bf16.mxu0 0
      %784 = vmatpush1.bf16.msra.mxu0 0
      %785 = vmatprep.subr.bf16.mxu0 0
      %786 = vmatpush1.bf16.msra.mxu0 0
      %787 = vmatprep.subr.bf16.mxu0 0
      %788 = vmatpush1.bf16.msra.mxu0 0
      %789 = vmatprep.subr.bf16.mxu0 0
      %790 = vmatpush1.bf16.msra.mxu0 0
      %791 = vmatprep.subr.bf16.mxu0 0
      %792 = vmatpush1.bf16.msra.mxu0 0
      %793 = vmatprep.subr.bf16.mxu0 0
      %794 = vmatpush1.bf16.msra.mxu0 0
      %795 = vmatprep.subr.bf16.mxu0 0
      %796 = vmatpush1.bf16.msra.mxu0 0
      %797 = vmatprep.subr.bf16.mxu0 0
      %798 = vmatpush1.bf16.msra.mxu0 0
      %799 = vmatprep.subr.bf16.mxu0 0
      %800 = vmatpush1.bf16.msra.mxu0 0
      %801 = vmatprep.subr.bf16.mxu0 0
      %802 = vmatpush1.bf16.msra.mxu0 0
      %803 = vmatprep.subr.bf16.mxu0 0
      %804 = vmatpush1.bf16.msra.mxu0 0
      %805 = vmatprep.subr.bf16.mxu0 0
      %806 = vmatpush1.bf16.msra.mxu0 0
      %807 = vmatprep.mubr.bf16.mxu0 0
      %808 = vmatmul.mubr.bf16.gmra.mrb[0].mxu0 %v634
      %v809 = vpop.f32.mrb[0].mxu0
      %v810 = vadd.f32 %v745, %v809
      %v811 = vpop.f32.mrb[0].mxu0
      %v812 = vpop.f32.mrb[0].mxu0
      %v813 = vadd.f32 %v748, %v812
      %v814 = vpop.f32.mrb[0].mxu0
      %815 = vmatprep.mubr.bf16.mxu0 0
      %816 = vmatmul.mubr.bf16.gmra.mrb[0].mxu0 %v637
      %v817 = vpop.f32.mrb[0].mxu0
      %v818 = vadd.f32 %v753, %v817
      %v819 = vpop.f32.mrb[0].mxu0
      %v820 = vpop.f32.mrb[0].mxu0
      %v821 = vadd.f32 %v756, %v820
      %v822 = vpop.f32.mrb[0].mxu0
      %823 = vmatprep.mubr.bf16.mxu0 0
      %824 = vmatmul.mubr.bf16.gmra.mrb[0].mxu0 %v640
      %v825 = vpop.f32.mrb[0].mxu0
      %v826 = vadd.f32 %v761, %v825
      %v827 = vpop.f32.mrb[0].mxu0
      %v828 = vpop.f32.mrb[0].mxu0
      %v829 = vadd.f32 %v764, %v828
      %v830 = vpop.f32.mrb[0].mxu0
      %831 = vmatprep.mubr.bf16.mxu0 0
      %832 = vmatmul.mubr.bf16.gmra.mrb[0].mxu0 %v643
      %v833 = vpop.f32.mrb[0].mxu0
      %v834 = vadd.f32 %v769, %v833
      %v835 = vpop.f32.mrb[0].mxu0
      %v836 = vpop.f32.mrb[0].mxu0
      %v837 = vadd.f32 %v772, %v836
      %v838 = vpop.f32.mrb[0].mxu0
      %839 = vdwg.mxu0
      %v840 = vmax.f32 %v810, 0.0
      %v841 = vmax.f32 %v813, 0.0
      %v842 = vmax.f32 %v818, 0.0
      %v843 = vmax.f32 %v821, 0.0
      %v844 = vmax.f32 %v826, 0.0
      %v845 = vmax.f32 %v829, 0.0
      %v846 = vmax.f32 %v834, 0.0
      %v847 = vmax.f32 %v837, 0.0
      %v848 = vlaneseq
      %v849 = vand.u32 %v848, 127
      %vm850 = vcmp.lt.s32.totalorder %v849, 81
      %v851 = vsel %vm850, %v840, 0.0
      %v852 = vsel %vm850, %v841, 0.0
      %v853 = vsel %vm850, %v842, 0.0
      %v854 = vsel %vm850, %v843, 0.0
      %v855 = vsel %vm850, %v844, 0.0
      %v856 = vsel %vm850, %v845, 0.0
      %v857 = vsel %vm850, %v846, 0.0
      %v858 = vsel %vm850, %v847, 0.0
      %859 = vadd.xlane.f32.xlu0 %v851
      %v860 = vpop.xlane.xlu0 %859
      %861 = vadd.xlane.f32.xlu0 %v852
      %v862 = vpop.xlane.xlu0 %861
      %863 = vadd.xlane.f32.xlu0 %v853
      %v864 = vpop.xlane.xlu0 %863
      %865 = vadd.xlane.f32.xlu0 %v854
      %v866 = vpop.xlane.xlu0 %865
      %867 = vadd.xlane.f32.xlu0 %v855
      %v868 = vpop.xlane.xlu0 %867
      %869 = vadd.xlane.f32.xlu0 %v856
      %v870 = vpop.xlane.xlu0 %869
      %871 = vadd.xlane.f32.xlu0 %v857
      %v872 = vpop.xlane.xlu0 %871
      %873 = vadd.xlane.f32.xlu0 %v858
      %v874 = vpop.xlane.xlu0 %873
      %v875 = vmul.f32 %v851, %v851
      %v876 = vmul.f32 %v852, %v852
      %v877 = vmul.f32 %v853, %v853
      %v878 = vmul.f32 %v854, %v854
      %v879 = vmul.f32 %v855, %v855
      %v880 = vmul.f32 %v856, %v856
      %v881 = vmul.f32 %v857, %v857
      %v882 = vmul.f32 %v858, %v858
      %883 = vadd.xlane.f32.xlu0 %v875
      %v884 = vpop.xlane.xlu0 %883
      %885 = vadd.xlane.f32.xlu0 %v876
      %v886 = vpop.xlane.xlu0 %885
      %887 = vadd.xlane.f32.xlu0 %v877
      %v888 = vpop.xlane.xlu0 %887
      %889 = vadd.xlane.f32.xlu0 %v878
      %v890 = vpop.xlane.xlu0 %889
      %891 = vadd.xlane.f32.xlu0 %v879
      %v892 = vpop.xlane.xlu0 %891
      %893 = vadd.xlane.f32.xlu0 %v880
      %v894 = vpop.xlane.xlu0 %893
      %895 = vadd.xlane.f32.xlu0 %v881
      %v896 = vpop.xlane.xlu0 %895
      %897 = vadd.xlane.f32.xlu0 %v882
      %v898 = vpop.xlane.xlu0 %897
      %v899 = vmul.f32 %v860, 0.012345679
      %v900 = vmul.f32 %v862, 0.012345679
      %v901 = vmul.f32 %v864, 0.012345679
      %v902 = vmul.f32 %v866, 0.012345679
      %v903 = vmul.f32 %v868, 0.012345679
      %v904 = vmul.f32 %v870, 0.012345679
      %v905 = vmul.f32 %v872, 0.012345679
      %v906 = vmul.f32 %v874, 0.012345679
      %v907 = vmul.f32 %v884, 0.012345679
      %v908 = vmul.f32 %v886, 0.012345679
      %v909 = vmul.f32 %v888, 0.012345679
      %v910 = vmul.f32 %v890, 0.012345679
      %v911 = vmul.f32 %v892, 0.012345679
      %v912 = vmul.f32 %v894, 0.012345679
      %v913 = vmul.f32 %v896, 0.012345679
      %v914 = vmul.f32 %v898, 0.012345679
      %v915 = vmul.f32 %v899, %v899
      %v916 = vmul.f32 %v900, %v900
      %v917 = vmul.f32 %v901, %v901
      %v918 = vmul.f32 %v902, %v902
      %v919 = vmul.f32 %v903, %v903
      %v920 = vmul.f32 %v904, %v904
      %v921 = vmul.f32 %v905, %v905
      %v922 = vmul.f32 %v906, %v906
      %v923 = vsub.f32 %v907, %v915
      %v924 = vsub.f32 %v908, %v916
      %v925 = vsub.f32 %v909, %v917
      %v926 = vsub.f32 %v910, %v918
      %v927 = vsub.f32 %v911, %v919
      %v928 = vsub.f32 %v912, %v920
      %v929 = vsub.f32 %v913, %v921
      %v930 = vsub.f32 %v914, %v922
      %v931 = vmax.f32 %v923, 0.0
      %v932 = vmax.f32 %v924, 0.0
      %v933 = vmax.f32 %v925, 0.0
      %v934 = vmax.f32 %v926, 0.0
      %v935 = vmax.f32 %v927, 0.0
      %v936 = vmax.f32 %v928, 0.0
      %v937 = vmax.f32 %v929, 0.0
      %v938 = vmax.f32 %v930, 0.0
      %v939 = vsub.f32 %v840, %v899
      %v940 = vsub.f32 %v841, %v900
      %v941 = vsub.f32 %v842, %v901
      %v942 = vsub.f32 %v843, %v902
      %v943 = vsub.f32 %v844, %v903
      %v944 = vsub.f32 %v845, %v904
      %v945 = vsub.f32 %v846, %v905
      %v946 = vsub.f32 %v847, %v906
      %v947 = vadd.f32 %v931, 1e-05
      %v948 = vadd.f32 %v932, 1e-05
      %v949 = vadd.f32 %v933, 1e-05
      %v950 = vadd.f32 %v934, 1e-05
      %v951 = vadd.f32 %v935, 1e-05
      %v952 = vadd.f32 %v936, 1e-05
      %v953 = vadd.f32 %v937, 1e-05
      %v954 = vadd.f32 %v938, 1e-05
      %v955 = vrsqrt.pop %v947
      %v956 = vrsqrt.pop %v948
      %v957 = vrsqrt.pop %v949
      %v958 = vrsqrt.pop %v950
      %v959 = vrsqrt.pop %v951
      %v960 = vrsqrt.pop %v952
      %v961 = vrsqrt.pop %v953
      %v962 = vrsqrt.pop %v954
      %v963 = vmul.f32 %v939, %v955
      %v964 = vmul.f32 %v940, %v956
      %v965 = vmul.f32 %v941, %v957
      %v966 = vmul.f32 %v942, %v958
      %v967 = vmul.f32 %v943, %v959
      %v968 = vmul.f32 %v944, %v960
      %v969 = vmul.f32 %v945, %v961
      %v970 = vmul.f32 %v946, %v962
      %v971 = vpack.c.bf16 %v964, %v963
      %v972 = vpack.c.bf16 %v966, %v965
      %v973 = vpack.c.bf16 %v968, %v967
      %v974 = vpack.c.bf16 %v970, %v969
      %v979 = vunpack.c.l.b16 %v971
      %v980 = vunpack.c.h.b16 %v971
      %v981 = vunpack.c.l.b16 %v972
      %v982 = vunpack.c.h.b16 %v972
      %v983 = vunpack.c.l.b16 %v973
      %v984 = vunpack.c.h.b16 %v973
      %v985 = vunpack.c.l.b16 %v974
      %v986 = vunpack.c.h.b16 %v974
      %v987 = vpack.c.b16 %v979, %v979
      %v988 = vpack.c.b16 %v980, %v980
      %v989 = vpack.c.b16 %v981, %v981
      %v990 = vpack.c.b16 %v982, %v982
      %v991 = vpack.c.b16 %v983, %v983
      %v992 = vpack.c.b16 %v984, %v984
      %v993 = vpack.c.b16 %v985, %v985
      %v994 = vpack.c.b16 %v986, %v986
      %1003 = vst [vmem:[%s170] sm:$0xf] %v987
      %1004 = vst [vmem:[%s170 + $0x4] sm:$0xf] %v988
      %1005 = vst [vmem:[%s170 + $0x8] sm:$0xf] %v989
      %1006 = vst [vmem:[%s170 + $0xc] sm:$0xf] %v990
      %1007 = vst [vmem:[%s170 + $0x10] sm:$0xf] %v991
      %1008 = vst [vmem:[%s170 + $0x14] sm:$0xf] %v992
      %1009 = vst [vmem:[%s170 + $0x18] sm:$0xf] %v993
      %1010 = vst [vmem:[%s170 + $0x1c] sm:$0xf] %v994
      %p1011 = scmp.lt.s32.totalorder %s14, 1
      %s1012 = scalar_select %p1011, %s14, 1
      %s1013 = smul.addr %s1012, 8
      %s1014 = smul.addr %s1013, 4
      %s1015 = scalar_lea.vmem %s3, %s1014
      // Predicated region
      $region33: #{_lambda_.6} parent=31 // pred_check
        %p1016 = pneg %p100
      $region34: #{_lambda_.6} parent=31 // pred_check_branch
        %1018 = sbr.rel (%p1016) target = $region36
      $region35: #{_lambda_.6} parent=31 // pred_region
        _
      $region36: #{_lambda_.6} parent=31 // pred_fallthru
        _
    $region32: #{_lambda_.6} parent=5 // pred_fallthru
      _
    %p1019 = scmp.le.s32.totalorder 2, %s9
    // Predicated region
    $region37: #{_lambda_.6} parent=5 // pred_check
      %p1020 = pneg %p1019
    $region38: #{_lambda_.6} parent=5 // pred_check_branch
      %1022 = sbr.rel (%p1020) target = $region40
    $region39: #{_lambda_.6} parent=5 // pred_region
      %s1023 = ssub.s32 %s9, 2
      // Predicated region
      $region41: #{_lambda_.6} parent=39 // pred_check
        %p1024 = pneg %p106
      $region42: #{_lambda_.6} parent=39 // pred_check_branch
        %1026 = sbr.rel (%p1024) target = $region44
      $region43: #{_lambda_.6} parent=39 // pred_region
        %p1027 = scmp.lt.s32.totalorder %s15, 1
        %s1028 = scalar_select %p1027, %s15, 1
        %s1029 = smul.addr %s1028, 8
        %s1030 = smul.addr %s1029, 4
        %s1031 = scalar_lea.vmem %s3, %s1030
      $region44: #{_lambda_.6} parent=39 // pred_fallthru
        _
    $region40: #{_lambda_.6} parent=5 // pred_fallthru
      _
  $region6: #{_lambda_.6} parent=0 // loop_footer
    %s13 = sadd.s32 1, %s9
  $region7: #{_lambda_.6} parent=0 // loop_footer_branch
    %8 = sbr.rel target = $region3
  $region8: #{_lambda_.6} parent=0 // loop_exit
    _

// kernel: _lambda_.7
$region0: #{_lambda_.7}
  #allocation0 [shape = 'u32[]', space=smem, size = 0x4, offset = 0x4, fixed_abs, tag = 'smem constant byte address 0x4 - core index']
  #allocation1 [shape = 'u32[144,128]{1,0:T(1,128)}', space=vmem, size = 0x12000, scoped, tag = 'internal scratch']
  #allocation2 [shape = 'f32[2,512]{1,0:T(2,128)}', space=vmem, size = 0x1000, scoped, tag = 'scratch operand']
  #allocation3 [shape = 'f32[1,1]{1,0:T(1,128)S(1)}', space=vmem, size = 0x200, scoped, tag = 'scoped memory for _lambda_.7']
  %s0 = inlined_call_operand.vmem [shape: bf16[2,5376], index: 0, kind: input, shape index: {}]
  %s1 = inlined_call_operand.vmem [shape: bf16[5376,512], index: 1, kind: input, shape index: {}]
  %s2 = inlined_call_operand.vmem [shape: f32[1,512], index: 2, kind: input, shape index: {}]
  %s3 = inlined_call_operand.vmem [shape: f32[1,512], index: 3, kind: input, shape index: {}]
  %s4 = inlined_call_operand.<no memory space> [shape: f32[1,1], index: 4, kind: input, shape index: {}]
  %s5 = inlined_call_operand.vmem [shape: f32[2,1], index: 5, kind: output, shape index: {}]
  %s6 = sld [smem:[#allocation0]]
  $region61: #{_lambda_.7} parent=0
    _
  %s8 = ssub.s32 1, %s6
  %s9 = scalar_select 0, %s8, %s6
  %v10 = vstv %s4
  %11 = vst [vmem:[#allocation3] sm:$0x1] %v10
  loop: start=0, step=1, limit=5
  $region2: #{_lambda_.7} parent=0 // loop_pre_header
    _
  $region3: #{_lambda_.7} parent=0 // loop_header
    %s13 = sphi 0, %s17
    %p14 = scmp.ge.s32.totalorder %s13, 5
    %s23 = sphi 0, %s25
    %s26 = sphi 0, %s23
    %s27 = sphi 0, %s26
    %s43 = sphi 0, %s27
    %s49 = sphi 0, %s51
    %s52 = sphi 0, %s49
    %s53 = sphi 0, %s52
    %s69 = sphi 0, %s53
    %s73 = sphi 0, %s73
    %s75 = sphi 0, %s73
    %s76 = sphi 0, %s75
    %s90 = sphi 0, %s76
    %s94 = sphi 0, %s94
    %s96 = sphi 0, %s94
    %s97 = sphi 0, %s96
    %s111 = sphi 0, %s97
    %s115 = sphi 0, %s115
    %s117 = sphi 0, %s115
    %s118 = sphi 0, %s117
    %s132 = sphi 0, %s118
    %s136 = sphi 0, %s136
    %s138 = sphi 0, %s136
    %s139 = sphi 0, %s138
    %s153 = sphi 0, %s139
  $region4: #{_lambda_.7} parent=0 // loop_header_branch
    %16 = sbr.rel (%p14) target = $region8
  $region5: #{_lambda_.7} parent=0 // loop_body
    %s18 = ssub.s32 %s13, 1
    %s19 = ssub.s32 %s13, 2
    %s20 = sadd.s32 %s13, 1
    %s21 = ssub.s32 %s13, %s20
    %p22 = scmp.eq.s32.totalorder %s21, 0
    %s24 = sadd.s32 %s23, 1
    %s25 = scalar_select %p22, %s23, %s24
    %p28 = pneg %p22
    %p29 = scmp.eq.s32.totalorder %s13, 2
    %p30 = por %p28, %p29
    %p31 = scmp.ne.s32.totalorder %s23, %s26
    %p32 = scmp.eq.s32.totalorder %s13, 0
    %p33 = por %p31, %p32
    %p34 = scmp.ne.s32.totalorder %s23, %s26
    %p35 = scmp.eq.s32.totalorder %s18, 2
    %p36 = por %p34, %p35
    %p37 = scmp.ne.s32.totalorder %s26, %s27
    %p38 = scmp.eq.s32.totalorder %s18, 0
    %p39 = por %p37, %p38
    %p40 = scmp.ne.s32.totalorder %s26, %s27
    %p41 = scmp.eq.s32.totalorder %s19, 2
    %p42 = por %p40, %p41
    %p44 = scmp.ne.s32.totalorder %s27, %s43
    %p45 = scmp.eq.s32.totalorder %s19, 0
    %p46 = por %p44, %p45
    %s47 = ssub.s32 %s13, %s20
    %p48 = scmp.eq.s32.totalorder %s47, 0
    %s50 = sadd.s32 %s49, 1
    %s51 = scalar_select %p48, %s49, %s50
    %p54 = pneg %p48
    %p55 = scmp.eq.s32.totalorder %s13, 2
    %p56 = por %p54, %p55
    %p57 = scmp.ne.s32.totalorder %s49, %s52
    %p58 = scmp.eq.s32.totalorder %s13, 0
    %p59 = por %p57, %p58
    %p60 = scmp.ne.s32.totalorder %s49, %s52
    %p61 = scmp.eq.s32.totalorder %s18, 2
    %p62 = por %p60, %p61
    %p63 = scmp.ne.s32.totalorder %s52, %s53
    %p64 = scmp.eq.s32.totalorder %s18, 0
    %p65 = por %p63, %p64
    %p66 = scmp.ne.s32.totalorder %s52, %s53
    %p67 = scmp.eq.s32.totalorder %s19, 2
    %p68 = por %p66, %p67
    %p70 = scmp.ne.s32.totalorder %s53, %s69
    %p71 = scmp.eq.s32.totalorder %s19, 0
    %p72 = por %p70, %p71
    %s74 = sadd.s32 %s73, 1
    %p77 = scmp.eq.s32.totalorder %s13, 2
    %p78 = scmp.ne.s32.totalorder %s73, %s75
    %p79 = scmp.eq.s32.totalorder %s13, 0
    %p80 = por %p78, %p79
    %p81 = scmp.ne.s32.totalorder %s73, %s75
    %p82 = scmp.eq.s32.totalorder %s18, 2
    %p83 = por %p81, %p82
    %p84 = scmp.ne.s32.totalorder %s75, %s76
    %p85 = scmp.eq.s32.totalorder %s18, 0
    %p86 = por %p84, %p85
    %p87 = scmp.ne.s32.totalorder %s75, %s76
    %p88 = scmp.eq.s32.totalorder %s19, 2
    %p89 = por %p87, %p88
    %p91 = scmp.ne.s32.totalorder %s76, %s90
    %p92 = scmp.eq.s32.totalorder %s19, 0
    %p93 = por %p91, %p92
    %s95 = sadd.s32 %s94, 1
    %p98 = scmp.eq.s32.totalorder %s13, 2
    %p99 = scmp.ne.s32.totalorder %s94, %s96
    %p100 = scmp.eq.s32.totalorder %s13, 0
    %p101 = por %p99, %p100
    %p102 = scmp.ne.s32.totalorder %s94, %s96
    %p103 = scmp.eq.s32.totalorder %s18, 2
    %p104 = por %p102, %p103
    %p105 = scmp.ne.s32.totalorder %s96, %s97
    %p106 = scmp.eq.s32.totalorder %s18, 0
    %p107 = por %p105, %p106
    %p108 = scmp.ne.s32.totalorder %s96, %s97
    %p109 = scmp.eq.s32.totalorder %s19, 2
    %p110 = por %p108, %p109
    %p112 = scmp.ne.s32.totalorder %s97, %s111
    %p113 = scmp.eq.s32.totalorder %s19, 0
    %p114 = por %p112, %p113
    %s116 = sadd.s32 %s115, 1
    %p119 = scmp.eq.s32.totalorder %s13, 2
    %p120 = scmp.ne.s32.totalorder %s115, %s117
    %p121 = scmp.eq.s32.totalorder %s13, 0
    %p122 = por %p120, %p121
    %p123 = scmp.ne.s32.totalorder %s115, %s117
    %p124 = scmp.eq.s32.totalorder %s18, 2
    %p125 = por %p123, %p124
    %p126 = scmp.ne.s32.totalorder %s117, %s118
    %p127 = scmp.eq.s32.totalorder %s18, 0
    %p128 = por %p126, %p127
    %p129 = scmp.ne.s32.totalorder %s117, %s118
    %p130 = scmp.eq.s32.totalorder %s19, 2
    %p131 = por %p129, %p130
    %p133 = scmp.ne.s32.totalorder %s118, %s132
    %p134 = scmp.eq.s32.totalorder %s19, 0
    %p135 = por %p133, %p134
    %s137 = sadd.s32 %s136, 1
    %p140 = scmp.eq.s32.totalorder %s13, 2
    %p141 = scmp.ne.s32.totalorder %s136, %s138
    %p142 = scmp.eq.s32.totalorder %s13, 0
    %p143 = por %p141, %p142
    %p144 = scmp.ne.s32.totalorder %s136, %s138
    %p145 = scmp.eq.s32.totalorder %s18, 2
    %p146 = por %p144, %p145
    %p147 = scmp.ne.s32.totalorder %s138, %s139
    %p148 = scmp.eq.s32.totalorder %s18, 0
    %p149 = por %p147, %p148
    %p150 = scmp.ne.s32.totalorder %s138, %s139
    %p151 = scmp.eq.s32.totalorder %s19, 2
    %p152 = por %p150, %p151
    %p154 = scmp.ne.s32.totalorder %s139, %s153
    %p155 = scmp.eq.s32.totalorder %s19, 0
    %p156 = por %p154, %p155
    %p157 = scmp.le.s32.totalorder 1, %s13
    %p158 = scmp.lt.s32.totalorder %s13, 4
    %p159 = pnand %p157, %p158
    %p160 = pneg %p159
    // Predicated region
    $region9: #{_lambda_.7} parent=5 // pred_check
      _
    $region10: #{_lambda_.7} parent=5 // pred_check_branch
      %162 = sbr.rel (%p159) target = $region12
    $region11: #{_lambda_.7} parent=5 // pred_region
      %s163 = ssub.s32 %s13, 1
      // Predicated region
      $region13: #{_lambda_.7} parent=11 // pred_check
        %p164 = pneg %p86
      $region14: #{_lambda_.7} parent=11 // pred_check_branch
        %166 = sbr.rel (%p164) target = $region16
      $region15: #{_lambda_.7} parent=11 // pred_region
        _
      $region16: #{_lambda_.7} parent=11 // pred_fallthru
        _
      // Predicated region
      $region17: #{_lambda_.7} parent=11 // pred_check
        %p167 = pneg %p107
      $region18: #{_lambda_.7} parent=11 // pred_check_branch
        %169 = sbr.rel (%p167) target = $region20
      $region19: #{_lambda_.7} parent=11 // pred_region
        _
      $region20: #{_lambda_.7} parent=11 // pred_fallthru
        _
      // Predicated region
      $region21: #{_lambda_.7} parent=11 // pred_check
        %p170 = pneg %p128
      $region22: #{_lambda_.7} parent=11 // pred_check_branch
        %172 = sbr.rel (%p170) target = $region24
      $region23: #{_lambda_.7} parent=11 // pred_region
        _
      $region24: #{_lambda_.7} parent=11 // pred_fallthru
        _
    $region12: #{_lambda_.7} parent=5 // pred_fallthru
      _
    %p173 = scmp.lt.s32.totalorder %s13, 3
    // Predicated region
    $region25: #{_lambda_.7} parent=5 // pred_check
      %p174 = pneg %p173
    $region26: #{_lambda_.7} parent=5 // pred_check_branch
      %176 = sbr.rel (%p174) target = $region28
    $region27: #{_lambda_.7} parent=5 // pred_region
      // Predicated region
      $region29: #{_lambda_.7} parent=27 // pred_check
        %p177 = pneg %p33
      $region30: #{_lambda_.7} parent=27 // pred_check_branch
        %179 = sbr.rel (%p177) target = $region32
      $region31: #{_lambda_.7} parent=27 // pred_region
        %s180 = smul.u32 14, %s13
        %p181 = scmp.lt.s32.totalorder %s180, 41
        %s182 = scalar_select %p181, %s180, 41
        %s183 = scalar_lea.vmem %s0, %s182
        %s184 = smul.u32 14, %s13
      $region32: #{_lambda_.7} parent=27 // pred_fallthru
        _
      // Predicated region
      $region33: #{_lambda_.7} parent=27 // pred_check
        %p185 = pneg %p59
      $region34: #{_lambda_.7} parent=27 // pred_check_branch
        %187 = sbr.rel (%p185) target = $region36
      $region35: #{_lambda_.7} parent=27 // pred_region
        %s188 = smul.u32 224, %s13
        %p189 = scmp.lt.s32.totalorder %s188, 671
        %s190 = scalar_select %p189, %s188, 671
        %s191 = smul.addr %s190, 4
        %s192 = smul.addr %s191, 4
        %s193 = scalar_lea.vmem %s1, %s192
        %s194 = smul.u32 224, %s13
      $region36: #{_lambda_.7} parent=27 // pred_fallthru
        _
    $region28: #{_lambda_.7} parent=5 // pred_fallthru
      _
    %p195 = scmp.le.s32.totalorder 1, %s13
    %p196 = scmp.lt.s32.totalorder %s13, 4
    %p197 = pnand %p195, %p196
    %p198 = pneg %p197
    // Predicated region
    $region37: #{_lambda_.7} parent=5 // pred_check
      _
    $region38: #{_lambda_.7} parent=5 // pred_check_branch
      %200 = sbr.rel (%p197) target = $region40
    $region39: #{_lambda_.7} parent=5 // pred_region
      %s201 = ssub.s32 %s13, 1
      %s202 = smul.u32 14, %s18
      %p203 = scmp.lt.s32.totalorder %s202, 41
      %s204 = scalar_select %p203, %s202, 41
      %s205 = scalar_lea.vmem %s0, %s204
      %p206 = pneg %p39
      %p207 = pneg %p36
      %s208 = smul.u32 224, %s18
      %p209 = scmp.lt.s32.totalorder %s208, 671
      %s210 = scalar_select %p209, %s208, 671
      %s211 = smul.addr %s210, 4
      %s212 = smul.addr %s211, 4
      %s213 = scalar_lea.vmem %s1, %s212
      %p214 = pneg %p65
      %p215 = pneg %p62
      %p216 = pneg %p86
      %p217 = pneg %p83
      %p218 = pneg %p107
      %p219 = pneg %p104
      %p220 = pneg %p128
      %p221 = pneg %p125
      %p222 = pneg %p149
      %p223 = pneg %p146
      %s224 = smul.u32 14, %s18
      %p225 = scmp.lt.s32.totalorder %s224, 41
      %s226 = scalar_select %p225, %s224, 41
      %s227 = scalar_lea.vmem %s0, %s226
      %s228 = smul.u32 14, %s18
      %s229 = smul.u32 224, %s18
      %p230 = scmp.lt.s32.totalorder %s229, 671
      %s231 = scalar_select %p230, %s229, 671
      %s232 = smul.addr %s231, 4
      %s233 = smul.addr %s232, 4
      %s234 = scalar_lea.vmem %s1, %s233
      %s235 = smul.u32 224, %s18
      %p236 = scmp.eq.s32.totalorder %s18, 0
      // Predicated region
      $region41: #{_lambda_.7} parent=39 // pred_check
        %p237 = pneg %p236
      $region42: #{_lambda_.7} parent=39 // pred_check_branch
        %239 = sbr.rel (%p237) target = $region44
      $region43: #{_lambda_.7} parent=39 // pred_region
        %240 = vst [vmem:[#allocation2] sm:$0xff] 0.0
      $region44: #{_lambda_.7} parent=39 // pred_fallthru
        _
      %v241 = vld [vmem:[#allocation2] sm:$0xff]
      %v242 = vld [vmem:[%s227] sm:$0xff]
      %v243 = vld [vmem:[%s227 + $0x8] sm:$0x3f]
      %v244 = vld [vmem:[%s234] sm:$0xff]
      %v245 = vld [vmem:[%s234 + $0x8] sm:$0xff]
      %v246 = vld [vmem:[%s234 + $0x10] sm:$0xff]
      %v247 = vld [vmem:[%s234 + $0x18] sm:$0xff]
      %v248 = vld [vmem:[%s234 + $0x20] sm:$0xff]
      %v249 = vld [vmem:[%s234 + $0x28] sm:$0xff]
      %v250 = vld [vmem:[%s234 + $0x30] sm:$0xff]
      %v251 = vld [vmem:[%s234 + $0x38] sm:$0xff]
      %v252 = vld [vmem:[%s234 + $0x40] sm:$0xff]
      %v253 = vld [vmem:[%s234 + $0x48] sm:$0xff]
      %v254 = vld [vmem:[%s234 + $0x50] sm:$0xff]
      %v255 = vld [vmem:[%s234 + $0x58] sm:$0xff]
      %v256 = vld [vmem:[%s234 + $0x60] sm:$0xff]
      %v257 = vld [vmem:[%s234 + $0x68] sm:$0xff]
      %v258 = vld [vmem:[%s234 + $0x70] sm:$0xff]
      %v259 = vld [vmem:[%s234 + $0x78] sm:$0xff]
      %v260 = vld [vmem:[%s234 + $0x80] sm:$0xff]
      %v261 = vld [vmem:[%s234 + $0x88] sm:$0xff]
      %v262 = vld [vmem:[%s234 + $0x90] sm:$0xff]
      %v263 = vld [vmem:[%s234 + $0x98] sm:$0xff]
      %v264 = vld [vmem:[%s234 + $0xa0] sm:$0xff]
      %v265 = vld [vmem:[%s234 + $0xa8] sm:$0xff]
      %v266 = vld [vmem:[%s234 + $0xb0] sm:$0xff]
      %v267 = vld [vmem:[%s234 + $0xb8] sm:$0xff]
      %v268 = vld [vmem:[%s234 + $0xc0] sm:$0xff]
      %v269 = vld [vmem:[%s234 + $0xc8] sm:$0xff]
      %v270 = vld [vmem:[%s234 + $0xd0] sm:$0xff]
      %v271 = vld [vmem:[%s234 + $0xd8] sm:$0xff]
      %v272 = vld [vmem:[%s234 + $0xe0] sm:$0xff]
      %v273 = vld [vmem:[%s234 + $0xe8] sm:$0xff]
      %v274 = vld [vmem:[%s234 + $0xf0] sm:$0xff]
      %v275 = vld [vmem:[%s234 + $0xf8] sm:$0xff]
      %v276 = vld [vmem:[%s234 + $0x100] sm:$0xff]
      %v277 = vld [vmem:[%s234 + $0x108] sm:$0xff]
      %v278 = vld [vmem:[%s234 + $0x110] sm:$0xff]
      %v279 = vld [vmem:[%s234 + $0x118] sm:$0xff]
      %v280 = vld [vmem:[%s234 + $0x120] sm:$0xff]
      %v281 = vld [vmem:[%s234 + $0x128] sm:$0xff]
      %v282 = vld [vmem:[%s234 + $0x130] sm:$0xff]
      %v283 = vld [vmem:[%s234 + $0x138] sm:$0xff]
      %v284 = vld [vmem:[%s234 + $0x140] sm:$0xff]
      %v285 = vld [vmem:[%s234 + $0x148] sm:$0xff]
      %v286 = vld [vmem:[%s234 + $0x150] sm:$0xff]
      %v287 = vld [vmem:[%s234 + $0x158] sm:$0xff]
      %v288 = vld [vmem:[%s234 + $0x160] sm:$0xff]
      %v289 = vld [vmem:[%s234 + $0x168] sm:$0xff]
      %v290 = vld [vmem:[%s234 + $0x170] sm:$0xff]
      %v291 = vld [vmem:[%s234 + $0x178] sm:$0xff]
      %v292 = vld [vmem:[%s234 + $0x180] sm:$0xff]
      %v293 = vld [vmem:[%s234 + $0x188] sm:$0xff]
      %v294 = vld [vmem:[%s234 + $0x190] sm:$0xff]
      %v295 = vld [vmem:[%s234 + $0x198] sm:$0xff]
      %v296 = vld [vmem:[%s234 + $0x1a0] sm:$0xff]
      %v297 = vld [vmem:[%s234 + $0x1a8] sm:$0xff]
      %v298 = vld [vmem:[%s234 + $0x1b0] sm:$0xff]
      %v299 = vld [vmem:[%s234 + $0x1b8] sm:$0xff]
      %v300 = vld [vmem:[%s234 + $0x1c0] sm:$0xff]
      %v301 = vld [vmem:[%s234 + $0x1c8] sm:$0xff]
      %v302 = vld [vmem:[%s234 + $0x1d0] sm:$0xff]
      %v303 = vld [vmem:[%s234 + $0x1d8] sm:$0xff]
      %v304 = vld [vmem:[%s234 + $0x1e0] sm:$0xff]
      %v305 = vld [vmem:[%s234 + $0x1e8] sm:$0xff]
      %v306 = vld [vmem:[%s234 + $0x1f0] sm:$0xff]
      %v307 = vld [vmem:[%s234 + $0x1f8] sm:$0xff]
      %v308 = vld [vmem:[%s234 + $0x200] sm:$0xff]
      %v309 = vld [vmem:[%s234 + $0x208] sm:$0xff]
      %v310 = vld [vmem:[%s234 + $0x210] sm:$0xff]
      %v311 = vld [vmem:[%s234 + $0x218] sm:$0xff]
      %v312 = vld [vmem:[%s234 + $0x220] sm:$0xff]
      %v313 = vld [vmem:[%s234 + $0x228] sm:$0xff]
      %v314 = vld [vmem:[%s234 + $0x230] sm:$0xff]
      %v315 = vld [vmem:[%s234 + $0x238] sm:$0xff]
      %v316 = vld [vmem:[%s234 + $0x240] sm:$0xff]
      %v317 = vld [vmem:[%s234 + $0x248] sm:$0xff]
      %v318 = vld [vmem:[%s234 + $0x250] sm:$0xff]
      %v319 = vld [vmem:[%s234 + $0x258] sm:$0xff]
      %v320 = vld [vmem:[%s234 + $0x260] sm:$0xff]
      %v321 = vld [vmem:[%s234 + $0x268] sm:$0xff]
      %v322 = vld [vmem:[%s234 + $0x270] sm:$0xff]
      %v323 = vld [vmem:[%s234 + $0x278] sm:$0xff]
      %v324 = vld [vmem:[%s234 + $0x280] sm:$0xff]
      %v325 = vld [vmem:[%s234 + $0x288] sm:$0xff]
      %v326 = vld [vmem:[%s234 + $0x290] sm:$0xff]
      %v327 = vld [vmem:[%s234 + $0x298] sm:$0xff]
      %v328 = vld [vmem:[%s234 + $0x2a0] sm:$0xff]
      %v329 = vld [vmem:[%s234 + $0x2a8] sm:$0xff]
      %v330 = vld [vmem:[%s234 + $0x2b0] sm:$0xff]
      %v331 = vld [vmem:[%s234 + $0x2b8] sm:$0xff]
      %v332 = vld [vmem:[%s234 + $0x2c0] sm:$0xff]
      %v333 = vld [vmem:[%s234 + $0x2c8] sm:$0xff]
      %v334 = vld [vmem:[%s234 + $0x2d0] sm:$0xff]
      %v335 = vld [vmem:[%s234 + $0x2d8] sm:$0xff]
      %v336 = vld [vmem:[%s234 + $0x2e0] sm:$0xff]
      %v337 = vld [vmem:[%s234 + $0x2e8] sm:$0xff]
      %v338 = vld [vmem:[%s234 + $0x2f0] sm:$0xff]
      %v339 = vld [vmem:[%s234 + $0x2f8] sm:$0xff]
      %v340 = vld [vmem:[%s234 + $0x300] sm:$0xff]
      %v341 = vld [vmem:[%s234 + $0x308] sm:$0xff]
      %v342 = vld [vmem:[%s234 + $0x310] sm:$0xff]
      %v343 = vld [vmem:[%s234 + $0x318] sm:$0xff]
      %v344 = vld [vmem:[%s234 + $0x320] sm:$0xff]
      %v345 = vld [vmem:[%s234 + $0x328] sm:$0xff]
      %v346 = vld [vmem:[%s234 + $0x330] sm:$0xff]
      %v347 = vld [vmem:[%s234 + $0x338] sm:$0xff]
      %v348 = vld [vmem:[%s234 + $0x340] sm:$0xff]
      %v349 = vld [vmem:[%s234 + $0x348] sm:$0xff]
      %v350 = vld [vmem:[%s234 + $0x350] sm:$0xff]
      %v351 = vld [vmem:[%s234 + $0x358] sm:$0xff]
      %v352 = vld [vmem:[%s234 + $0x360] sm:$0xff]
      %v353 = vld [vmem:[%s234 + $0x368] sm:$0xff]
      %v354 = vld [vmem:[%s234 + $0x370] sm:$0xff]
      %v355 = vld [vmem:[%s234 + $0x378] sm:$0xff]
      %v356 = vld [vmem:[%s234 + $0x380] sm:$0xff]
      %v357 = vld [vmem:[%s234 + $0x388] sm:$0xff]
      %v358 = vld [vmem:[%s234 + $0x390] sm:$0xff]
      %v359 = vld [vmem:[%s234 + $0x398] sm:$0xff]
      %v360 = vld [vmem:[%s234 + $0x3a0] sm:$0xff]
      %v361 = vld [vmem:[%s234 + $0x3a8] sm:$0xff]
      %v362 = vld [vmem:[%s234 + $0x3b0] sm:$0xff]
      %v363 = vld [vmem:[%s234 + $0x3b8] sm:$0xff]
      %v364 = vld [vmem:[%s234 + $0x3c0] sm:$0xff]
      %v365 = vld [vmem:[%s234 + $0x3c8] sm:$0xff]
      %v366 = vld [vmem:[%s234 + $0x3d0] sm:$0xff]
      %v367 = vld [vmem:[%s234 + $0x3d8] sm:$0xff]
      %v368 = vld [vmem:[%s234 + $0x3e0] sm:$0xff]
      %v369 = vld [vmem:[%s234 + $0x3e8] sm:$0xff]
      %v370 = vld [vmem:[%s234 + $0x3f0] sm:$0xff]
      %v371 = vld [vmem:[%s234 + $0x3f8] sm:$0xff]
      %v372 = vld [vmem:[%s234 + $0x400] sm:$0xff]
      %v373 = vld [vmem:[%s234 + $0x408] sm:$0xff]
      %v374 = vld [vmem:[%s234 + $0x410] sm:$0xff]
      %v375 = vld [vmem:[%s234 + $0x418] sm:$0xff]
      %v376 = vld [vmem:[%s234 + $0x420] sm:$0xff]
      %v377 = vld [vmem:[%s234 + $0x428] sm:$0xff]
      %v378 = vld [vmem:[%s234 + $0x430] sm:$0xff]
      %v379 = vld [vmem:[%s234 + $0x438] sm:$0xff]
      %v380 = vld [vmem:[%s234 + $0x440] sm:$0xff]
      %v381 = vld [vmem:[%s234 + $0x448] sm:$0xff]
      %v382 = vld [vmem:[%s234 + $0x450] sm:$0xff]
      %v383 = vld [vmem:[%s234 + $0x458] sm:$0xff]
      %v384 = vld [vmem:[%s234 + $0x460] sm:$0xff]
      %v385 = vld [vmem:[%s234 + $0x468] sm:$0xff]
      %v386 = vld [vmem:[%s234 + $0x470] sm:$0xff]
      %v387 = vld [vmem:[%s234 + $0x478] sm:$0xff]
      %v388 = vld [vmem:[%s234 + $0x480] sm:$0xff]
      %v389 = vld [vmem:[%s234 + $0x488] sm:$0xff]
      %v390 = vld [vmem:[%s234 + $0x490] sm:$0xff]
      %v391 = vld [vmem:[%s234 + $0x498] sm:$0xff]
      %v392 = vld [vmem:[%s234 + $0x4a0] sm:$0xff]
      %v393 = vld [vmem:[%s234 + $0x4a8] sm:$0xff]
      %v394 = vld [vmem:[%s234 + $0x4b0] sm:$0xff]
      %v395 = vld [vmem:[%s234 + $0x4b8] sm:$0xff]
      %v396 = vld [vmem:[%s234 + $0x4c0] sm:$0xff]
      %v397 = vld [vmem:[%s234 + $0x4c8] sm:$0xff]
      %v398 = vld [vmem:[%s234 + $0x4d0] sm:$0xff]
      %v399 = vld [vmem:[%s234 + $0x4d8] sm:$0xff]
      %v400 = vld [vmem:[%s234 + $0x4e0] sm:$0xff]
      %v401 = vld [vmem:[%s234 + $0x4e8] sm:$0xff]
      %v402 = vld [vmem:[%s234 + $0x4f0] sm:$0xff]
      %v403 = vld [vmem:[%s234 + $0x4f8] sm:$0xff]
      %v404 = vld [vmem:[%s234 + $0x500] sm:$0xff]
      %v405 = vld [vmem:[%s234 + $0x508] sm:$0xff]
      %v406 = vld [vmem:[%s234 + $0x510] sm:$0xff]
      %v407 = vld [vmem:[%s234 + $0x518] sm:$0xff]
      %v408 = vld [vmem:[%s234 + $0x520] sm:$0xff]
      %v409 = vld [vmem:[%s234 + $0x528] sm:$0xff]
      %v410 = vld [vmem:[%s234 + $0x530] sm:$0xff]
      %v411 = vld [vmem:[%s234 + $0x538] sm:$0xff]
      %v412 = vld [vmem:[%s234 + $0x540] sm:$0xff]
      %v413 = vld [vmem:[%s234 + $0x548] sm:$0xff]
      %v414 = vld [vmem:[%s234 + $0x550] sm:$0xff]
      %v415 = vld [vmem:[%s234 + $0x558] sm:$0xff]
      %v416 = vld [vmem:[%s234 + $0x560] sm:$0xff]
      %v417 = vld [vmem:[%s234 + $0x568] sm:$0xff]
      %v418 = vld [vmem:[%s234 + $0x570] sm:$0xff]
      %v419 = vld [vmem:[%s234 + $0x578] sm:$0xff]
      %v420 = vld [vmem:[%s234 + $0x580] sm:$0xff]
      %v421 = vld [vmem:[%s234 + $0x588] sm:$0xff]
      %v422 = vld [vmem:[%s234 + $0x590] sm:$0xff]
      %v423 = vld [vmem:[%s234 + $0x598] sm:$0xff]
      %v424 = vld [vmem:[%s234 + $0x5a0] sm:$0xff]
      %v425 = vld [vmem:[%s234 + $0x5a8] sm:$0xff]
      %v426 = vld [vmem:[%s234 + $0x5b0] sm:$0xff]
      %v427 = vld [vmem:[%s234 + $0x5b8] sm:$0xff]
      %v428 = vld [vmem:[%s234 + $0x5c0] sm:$0xff]
      %v429 = vld [vmem:[%s234 + $0x5c8] sm:$0xff]
      %v430 = vld [vmem:[%s234 + $0x5d0] sm:$0xff]
      %v431 = vld [vmem:[%s234 + $0x5d8] sm:$0xff]
      %v432 = vld [vmem:[%s234 + $0x5e0] sm:$0xff]
      %v433 = vld [vmem:[%s234 + $0x5e8] sm:$0xff]
      %v434 = vld [vmem:[%s234 + $0x5f0] sm:$0xff]
      %v435 = vld [vmem:[%s234 + $0x5f8] sm:$0xff]
      %v436 = vld [vmem:[%s234 + $0x600] sm:$0xff]
      %v437 = vld [vmem:[%s234 + $0x608] sm:$0xff]
      %v438 = vld [vmem:[%s234 + $0x610] sm:$0xff]
      %v439 = vld [vmem:[%s234 + $0x618] sm:$0xff]
      %v440 = vld [vmem:[%s234 + $0x620] sm:$0xff]
      %v441 = vld [vmem:[%s234 + $0x628] sm:$0xff]
      %v442 = vld [vmem:[%s234 + $0x630] sm:$0xff]
      %v443 = vld [vmem:[%s234 + $0x638] sm:$0xff]
      %v444 = vld [vmem:[%s234 + $0x640] sm:$0xff]
      %v445 = vld [vmem:[%s234 + $0x648] sm:$0xff]
      %v446 = vld [vmem:[%s234 + $0x650] sm:$0xff]
      %v447 = vld [vmem:[%s234 + $0x658] sm:$0xff]
      %v448 = vld [vmem:[%s234 + $0x660] sm:$0xff]
      %v449 = vld [vmem:[%s234 + $0x668] sm:$0xff]
      %v450 = vld [vmem:[%s234 + $0x670] sm:$0xff]
      %v451 = vld [vmem:[%s234 + $0x678] sm:$0xff]
      %v452 = vld [vmem:[%s234 + $0x680] sm:$0xff]
      %v453 = vld [vmem:[%s234 + $0x688] sm:$0xff]
      %v454 = vld [vmem:[%s234 + $0x690] sm:$0xff]
      %v455 = vld [vmem:[%s234 + $0x698] sm:$0xff]
      %v456 = vld [vmem:[%s234 + $0x6a0] sm:$0xff]
      %v457 = vld [vmem:[%s234 + $0x6a8] sm:$0xff]
      %v458 = vld [vmem:[%s234 + $0x6b0] sm:$0xff]
      %v459 = vld [vmem:[%s234 + $0x6b8] sm:$0xff]
      %v460 = vld [vmem:[%s234 + $0x6c0] sm:$0xff]
      %v461 = vld [vmem:[%s234 + $0x6c8] sm:$0xff]
      %v462 = vld [vmem:[%s234 + $0x6d0] sm:$0xff]
      %v463 = vld [vmem:[%s234 + $0x6d8] sm:$0xff]
      %v464 = vld [vmem:[%s234 + $0x6e0] sm:$0xff]
      %v465 = vld [vmem:[%s234 + $0x6e8] sm:$0xff]
      %v466 = vld [vmem:[%s234 + $0x6f0] sm:$0xff]
      %v467 = vld [vmem:[%s234 + $0x6f8] sm:$0xff]
      %v468 = vld [vmem:[%s234 + $0x700] sm:$0xff]
      %v469 = vld [vmem:[%s234 + $0x708] sm:$0xff]
      %v470 = vld [vmem:[%s234 + $0x710] sm:$0xff]
      %v471 = vld [vmem:[%s234 + $0x718] sm:$0xff]
      %v472 = vld [vmem:[%s234 + $0x720] sm:$0xff]
      %v473 = vld [vmem:[%s234 + $0x728] sm:$0xff]
      %v474 = vld [vmem:[%s234 + $0x730] sm:$0xff]
      %v475 = vld [vmem:[%s234 + $0x738] sm:$0xff]
      %v476 = vld [vmem:[%s234 + $0x740] sm:$0xff]
      %v477 = vld [vmem:[%s234 + $0x748] sm:$0xff]
      %v478 = vld [vmem:[%s234 + $0x750] sm:$0xff]
      %v479 = vld [vmem:[%s234 + $0x758] sm:$0xff]
      %v480 = vld [vmem:[%s234 + $0x760] sm:$0xff]
      %v481 = vld [vmem:[%s234 + $0x768] sm:$0xff]
      %v482 = vld [vmem:[%s234 + $0x770] sm:$0xff]
      %v483 = vld [vmem:[%s234 + $0x778] sm:$0xff]
      %v484 = vld [vmem:[%s234 + $0x780] sm:$0xff]
      %v485 = vld [vmem:[%s234 + $0x788] sm:$0xff]
      %v486 = vld [vmem:[%s234 + $0x790] sm:$0xff]
      %v487 = vld [vmem:[%s234 + $0x798] sm:$0xff]
      %v488 = vld [vmem:[%s234 + $0x7a0] sm:$0xff]
      %v489 = vld [vmem:[%s234 + $0x7a8] sm:$0xff]
      %v490 = vld [vmem:[%s234 + $0x7b0] sm:$0xff]
      %v491 = vld [vmem:[%s234 + $0x7b8] sm:$0xff]
      %v492 = vld [vmem:[%s234 + $0x7c0] sm:$0xff]
      %v493 = vld [vmem:[%s234 + $0x7c8] sm:$0xff]
      %v494 = vld [vmem:[%s234 + $0x7d0] sm:$0xff]
      %v495 = vld [vmem:[%s234 + $0x7d8] sm:$0xff]
      %v496 = vld [vmem:[%s234 + $0x7e0] sm:$0xff]
      %v497 = vld [vmem:[%s234 + $0x7e8] sm:$0xff]
      %v498 = vld [vmem:[%s234 + $0x7f0] sm:$0xff]
      %v499 = vld [vmem:[%s234 + $0x7f8] sm:$0xff]
      %v500 = vld [vmem:[%s234 + $0x800] sm:$0xff]
      %v501 = vld [vmem:[%s234 + $0x808] sm:$0xff]
      %v502 = vld [vmem:[%s234 + $0x810] sm:$0xff]
      %v503 = vld [vmem:[%s234 + $0x818] sm:$0xff]
      %v504 = vld [vmem:[%s234 + $0x820] sm:$0xff]
      %v505 = vld [vmem:[%s234 + $0x828] sm:$0xff]
      %v506 = vld [vmem:[%s234 + $0x830] sm:$0xff]
      %v507 = vld [vmem:[%s234 + $0x838] sm:$0xff]
      %v508 = vld [vmem:[%s234 + $0x840] sm:$0xff]
      %v509 = vld [vmem:[%s234 + $0x848] sm:$0xff]
      %v510 = vld [vmem:[%s234 + $0x850] sm:$0xff]
      %v511 = vld [vmem:[%s234 + $0x858] sm:$0xff]
      %v512 = vld [vmem:[%s234 + $0x860] sm:$0xff]
      %v513 = vld [vmem:[%s234 + $0x868] sm:$0xff]
      %v514 = vld [vmem:[%s234 + $0x870] sm:$0xff]
      %v515 = vld [vmem:[%s234 + $0x878] sm:$0xff]
      %v516 = vld [vmem:[%s234 + $0x880] sm:$0xff]
      %v517 = vld [vmem:[%s234 + $0x888] sm:$0xff]
      %v518 = vld [vmem:[%s234 + $0x890] sm:$0xff]
      %v519 = vld [vmem:[%s234 + $0x898] sm:$0xff]
      %v520 = vld [vmem:[%s234 + $0x8a0] sm:$0xff]
      %v521 = vld [vmem:[%s234 + $0x8a8] sm:$0xff]
      %v522 = vld [vmem:[%s234 + $0x8b0] sm:$0xff]
      %v523 = vld [vmem:[%s234 + $0x8b8] sm:$0xff]
      %v524 = vld [vmem:[%s234 + $0x8c0] sm:$0xff]
      %v525 = vld [vmem:[%s234 + $0x8c8] sm:$0xff]
      %v526 = vld [vmem:[%s234 + $0x8d0] sm:$0xff]
      %v527 = vld [vmem:[%s234 + $0x8d8] sm:$0xff]
      %v528 = vld [vmem:[%s234 + $0x8e0] sm:$0xff]
      %v529 = vld [vmem:[%s234 + $0x8e8] sm:$0xff]
      %v530 = vld [vmem:[%s234 + $0x8f0] sm:$0xff]
      %v531 = vld [vmem:[%s234 + $0x8f8] sm:$0xff]
      %v532 = vld [vmem:[%s234 + $0x900] sm:$0xff]
      %v533 = vld [vmem:[%s234 + $0x908] sm:$0xff]
      %v534 = vld [vmem:[%s234 + $0x910] sm:$0xff]
      %v535 = vld [vmem:[%s234 + $0x918] sm:$0xff]
      %v536 = vld [vmem:[%s234 + $0x920] sm:$0xff]
      %v537 = vld [vmem:[%s234 + $0x928] sm:$0xff]
      %v538 = vld [vmem:[%s234 + $0x930] sm:$0xff]
      %v539 = vld [vmem:[%s234 + $0x938] sm:$0xff]
      %v540 = vld [vmem:[%s234 + $0x940] sm:$0xff]
      %v541 = vld [vmem:[%s234 + $0x948] sm:$0xff]
      %v542 = vld [vmem:[%s234 + $0x950] sm:$0xff]
      %v543 = vld [vmem:[%s234 + $0x958] sm:$0xff]
      %v544 = vld [vmem:[%s234 + $0x960] sm:$0xff]
      %v545 = vld [vmem:[%s234 + $0x968] sm:$0xff]
      %v546 = vld [vmem:[%s234 + $0x970] sm:$0xff]
      %v547 = vld [vmem:[%s234 + $0x978] sm:$0xff]
      %v548 = vld [vmem:[%s234 + $0x980] sm:$0xff]
      %v549 = vld [vmem:[%s234 + $0x988] sm:$0xff]
      %v550 = vld [vmem:[%s234 + $0x990] sm:$0xff]
      %v551 = vld [vmem:[%s234 + $0x998] sm:$0xff]
      %v552 = vld [vmem:[%s234 + $0x9a0] sm:$0xff]
      %v553 = vld [vmem:[%s234 + $0x9a8] sm:$0xff]
      %v554 = vld [vmem:[%s234 + $0x9b0] sm:$0xff]
      %v555 = vld [vmem:[%s234 + $0x9b8] sm:$0xff]
      %v556 = vld [vmem:[%s234 + $0x9c0] sm:$0xff]
      %v557 = vld [vmem:[%s234 + $0x9c8] sm:$0xff]
      %v558 = vld [vmem:[%s234 + $0x9d0] sm:$0xff]
      %v559 = vld [vmem:[%s234 + $0x9d8] sm:$0xff]
      %v560 = vld [vmem:[%s234 + $0x9e0] sm:$0xff]
      %v561 = vld [vmem:[%s234 + $0x9e8] sm:$0xff]
      %v562 = vld [vmem:[%s234 + $0x9f0] sm:$0xff]
      %v563 = vld [vmem:[%s234 + $0x9f8] sm:$0xff]
      %v564 = vld [vmem:[%s234 + $0xa00] sm:$0xff]
      %v565 = vld [vmem:[%s234 + $0xa08] sm:$0xff]
      %v566 = vld [vmem:[%s234 + $0xa10] sm:$0xff]
      %v567 = vld [vmem:[%s234 + $0xa18] sm:$0xff]
      %v568 = vld [vmem:[%s234 + $0xa20] sm:$0xff]
      %v569 = vld [vmem:[%s234 + $0xa28] sm:$0xff]
      %v570 = vld [vmem:[%s234 + $0xa30] sm:$0xff]
      %v571 = vld [vmem:[%s234 + $0xa38] sm:$0xff]
      %v572 = vld [vmem:[%s234 + $0xa40] sm:$0xff]
      %v573 = vld [vmem:[%s234 + $0xa48] sm:$0xff]
      %v574 = vld [vmem:[%s234 + $0xa50] sm:$0xff]
      %v575 = vld [vmem:[%s234 + $0xa58] sm:$0xff]
      %v576 = vld [vmem:[%s234 + $0xa60] sm:$0xff]
      %v577 = vld [vmem:[%s234 + $0xa68] sm:$0xff]
      %v578 = vld [vmem:[%s234 + $0xa70] sm:$0xff]
      %v579 = vld [vmem:[%s234 + $0xa78] sm:$0xff]
      %v580 = vld [vmem:[%s234 + $0xa80] sm:$0xff]
      %v581 = vld [vmem:[%s234 + $0xa88] sm:$0xff]
      %v582 = vld [vmem:[%s234 + $0xa90] sm:$0xff]
      %v583 = vld [vmem:[%s234 + $0xa98] sm:$0xff]
      %v584 = vld [vmem:[%s234 + $0xaa0] sm:$0xff]
      %v585 = vld [vmem:[%s234 + $0xaa8] sm:$0xff]
      %v586 = vld [vmem:[%s234 + $0xab0] sm:$0xff]
      %v587 = vld [vmem:[%s234 + $0xab8] sm:$0xff]
      %v588 = vld [vmem:[%s234 + $0xac0] sm:$0xff]
      %v589 = vld [vmem:[%s234 + $0xac8] sm:$0xff]
      %v590 = vld [vmem:[%s234 + $0xad0] sm:$0xff]
      %v591 = vld [vmem:[%s234 + $0xad8] sm:$0xff]
      %v592 = vld [vmem:[%s234 + $0xae0] sm:$0xff]
      %v593 = vld [vmem:[%s234 + $0xae8] sm:$0xff]
      %v594 = vld [vmem:[%s234 + $0xaf0] sm:$0xff]
      %v595 = vld [vmem:[%s234 + $0xaf8] sm:$0xff]
      %v596 = vld [vmem:[%s234 + $0xb00] sm:$0xff]
      %v597 = vld [vmem:[%s234 + $0xb08] sm:$0xff]
      %v598 = vld [vmem:[%s234 + $0xb10] sm:$0xff]
      %v599 = vld [vmem:[%s234 + $0xb18] sm:$0xff]
      %v600 = vld [vmem:[%s234 + $0xb20] sm:$0xff]
      %v601 = vld [vmem:[%s234 + $0xb28] sm:$0xff]
      %v602 = vld [vmem:[%s234 + $0xb30] sm:$0xff]
      %v603 = vld [vmem:[%s234 + $0xb38] sm:$0xff]
      %v604 = vld [vmem:[%s234 + $0xb40] sm:$0xff]
      %v605 = vld [vmem:[%s234 + $0xb48] sm:$0xff]
      %v606 = vld [vmem:[%s234 + $0xb50] sm:$0xff]
      %v607 = vld [vmem:[%s234 + $0xb58] sm:$0xff]
      %v608 = vld [vmem:[%s234 + $0xb60] sm:$0xff]
      %v609 = vld [vmem:[%s234 + $0xb68] sm:$0xff]
      %v610 = vld [vmem:[%s234 + $0xb70] sm:$0xff]
      %v611 = vld [vmem:[%s234 + $0xb78] sm:$0xff]
      %v612 = vld [vmem:[%s234 + $0xb80] sm:$0xff]
      %v613 = vld [vmem:[%s234 + $0xb88] sm:$0xff]
      %v614 = vld [vmem:[%s234 + $0xb90] sm:$0xff]
      %v615 = vld [vmem:[%s234 + $0xb98] sm:$0xff]
      %v616 = vld [vmem:[%s234 + $0xba0] sm:$0xff]
      %v617 = vld [vmem:[%s234 + $0xba8] sm:$0xff]
      %v618 = vld [vmem:[%s234 + $0xbb0] sm:$0xff]
      %v619 = vld [vmem:[%s234 + $0xbb8] sm:$0xff]
      %v620 = vld [vmem:[%s234 + $0xbc0] sm:$0xff]
      %v621 = vld [vmem:[%s234 + $0xbc8] sm:$0xff]
      %v622 = vld [vmem:[%s234 + $0xbd0] sm:$0xff]
      %v623 = vld [vmem:[%s234 + $0xbd8] sm:$0xff]
      %v624 = vld [vmem:[%s234 + $0xbe0] sm:$0xff]
      %v625 = vld [vmem:[%s234 + $0xbe8] sm:$0xff]
      %v626 = vld [vmem:[%s234 + $0xbf0] sm:$0xff]
      %v627 = vld [vmem:[%s234 + $0xbf8] sm:$0xff]
      %v628 = vld [vmem:[%s234 + $0xc00] sm:$0xff]
      %v629 = vld [vmem:[%s234 + $0xc08] sm:$0xff]
      %v630 = vld [vmem:[%s234 + $0xc10] sm:$0xff]
      %v631 = vld [vmem:[%s234 + $0xc18] sm:$0xff]
      %v632 = vld [vmem:[%s234 + $0xc20] sm:$0xff]
      %v633 = vld [vmem:[%s234 + $0xc28] sm:$0xff]
      %v634 = vld [vmem:[%s234 + $0xc30] sm:$0xff]
      %v635 = vld [vmem:[%s234 + $0xc38] sm:$0xff]
      %v636 = vld [vmem:[%s234 + $0xc40] sm:$0xff]
      %v637 = vld [vmem:[%s234 + $0xc48] sm:$0xff]
      %v638 = vld [vmem:[%s234 + $0xc50] sm:$0xff]
      %v639 = vld [vmem:[%s234 + $0xc58] sm:$0xff]
      %v640 = vld [vmem:[%s234 + $0xc60] sm:$0xff]
      %v641 = vld [vmem:[%s234 + $0xc68] sm:$0xff]
      %v642 = vld [vmem:[%s234 + $0xc70] sm:$0xff]
      %v643 = vld [vmem:[%s234 + $0xc78] sm:$0xff]
      %v644 = vld [vmem:[%s234 + $0xc80] sm:$0xff]
      %v645 = vld [vmem:[%s234 + $0xc88] sm:$0xff]
      %v646 = vld [vmem:[%s234 + $0xc90] sm:$0xff]
      %v647 = vld [vmem:[%s234 + $0xc98] sm:$0xff]
      %v648 = vld [vmem:[%s234 + $0xca0] sm:$0xff]
      %v649 = vld [vmem:[%s234 + $0xca8] sm:$0xff]
      %v650 = vld [vmem:[%s234 + $0xcb0] sm:$0xff]
      %v651 = vld [vmem:[%s234 + $0xcb8] sm:$0xff]
      %v652 = vld [vmem:[%s234 + $0xcc0] sm:$0xff]
      %v653 = vld [vmem:[%s234 + $0xcc8] sm:$0xff]
      %v654 = vld [vmem:[%s234 + $0xcd0] sm:$0xff]
      %v655 = vld [vmem:[%s234 + $0xcd8] sm:$0xff]
      %v656 = vld [vmem:[%s234 + $0xce0] sm:$0xff]
      %v657 = vld [vmem:[%s234 + $0xce8] sm:$0xff]
      %v658 = vld [vmem:[%s234 + $0xcf0] sm:$0xff]
      %v659 = vld [vmem:[%s234 + $0xcf8] sm:$0xff]
      %v660 = vld [vmem:[%s234 + $0xd00] sm:$0xff]
      %v661 = vld [vmem:[%s234 + $0xd08] sm:$0xff]
      %v662 = vld [vmem:[%s234 + $0xd10] sm:$0xff]
      %v663 = vld [vmem:[%s234 + $0xd18] sm:$0xff]
      %v664 = vld [vmem:[%s234 + $0xd20] sm:$0xff]
      %v665 = vld [vmem:[%s234 + $0xd28] sm:$0xff]
      %v666 = vld [vmem:[%s234 + $0xd30] sm:$0xff]
      %v667 = vld [vmem:[%s234 + $0xd38] sm:$0xff]
      %v668 = vld [vmem:[%s234 + $0xd40] sm:$0xff]
      %v669 = vld [vmem:[%s234 + $0xd48] sm:$0xff]
      %v670 = vld [vmem:[%s234 + $0xd50] sm:$0xff]
      %v671 = vld [vmem:[%s234 + $0xd58] sm:$0xff]
      %v672 = vld [vmem:[%s234 + $0xd60] sm:$0xff]
      %v673 = vld [vmem:[%s234 + $0xd68] sm:$0xff]
      %v674 = vld [vmem:[%s234 + $0xd70] sm:$0xff]
      %v675 = vld [vmem:[%s234 + $0xd78] sm:$0xff]
      %v676 = vld [vmem:[%s234 + $0xd80] sm:$0xff]
      %v677 = vld [vmem:[%s234 + $0xd88] sm:$0xff]
      %v678 = vld [vmem:[%s234 + $0xd90] sm:$0xff]
      %v679 = vld [vmem:[%s234 + $0xd98] sm:$0xff]
      %v680 = vld [vmem:[%s234 + $0xda0] sm:$0xff]
      %v681 = vld [vmem:[%s234 + $0xda8] sm:$0xff]
      %v682 = vld [vmem:[%s234 + $0xdb0] sm:$0xff]
      %v683 = vld [vmem:[%s234 + $0xdb8] sm:$0xff]
      %v684 = vld [vmem:[%s234 + $0xdc0] sm:$0xff]
      %v685 = vld [vmem:[%s234 + $0xdc8] sm:$0xff]
      %v686 = vld [vmem:[%s234 + $0xdd0] sm:$0xff]
      %v687 = vld [vmem:[%s234 + $0xdd8] sm:$0xff]
      %v688 = vld [vmem:[%s234 + $0xde0] sm:$0xff]
      %v689 = vld [vmem:[%s234 + $0xde8] sm:$0xff]
      %v690 = vld [vmem:[%s234 + $0xdf0] sm:$0xff]
      %v691 = vld [vmem:[%s234 + $0xdf8] sm:$0xff]
      %v694 = vcombine.high %v242, %v242
      %v696 = vunpack.c.l.s4 1966171168
      %v697 = vunpack.c.0.s8 %v696
      %v698 = vlaneseq
      %v699 = vshrl.u32 %v698, 7
      %v700 = vsub.s32 %v697, %v699
      %v701 = vrot.slane %v242, %v700
      %v703 = vunpack.c.l.s4 1966171168
      %v704 = vunpack.c.0.s8 %v703
      %v705 = vlaneseq
      %v706 = vshrl.u32 %v705, 7
      %v707 = vsub.s32 %v704, %v706
      %v708 = vrot.slane %v694, %v707
      %v709 = vcombine.high %v701, %v701
      %v710 = vcombine.high %v708, %v708
      %v712 = vunpack.c.l.s4 1966171168
      %v713 = vunpack.c.0.s8 %v712
      %v714 = vlaneseq
      %v715 = vshrl.u32 %v714, 7
      %v716 = vsub.s32 %v713, %v715
      %v717 = vrot.slane %v701, %v716
      %v719 = vunpack.c.l.s4 1966171168
      %v720 = vunpack.c.0.s8 %v719
      %v721 = vlaneseq
      %v722 = vshrl.u32 %v721, 7
      %v723 = vsub.s32 %v720, %v722
      %v724 = vrot.slane %v708, %v723
      %v726 = vunpack.c.l.s4 1966171168
      %v727 = vunpack.c.0.s8 %v726
      %v728 = vlaneseq
      %v729 = vshrl.u32 %v728, 7
      %v730 = vsub.s32 %v727, %v729
      %v731 = vrot.slane %v709, %v730
      %v733 = vunpack.c.l.s4 1966171168
      %v734 = vunpack.c.0.s8 %v733
      %v735 = vlaneseq
      %v736 = vshrl.u32 %v735, 7
      %v737 = vsub.s32 %v734, %v736
      %v738 = vrot.slane %v710, %v737
      %v739 = vcombine.high %v717, %v717
      %v740 = vcombine.high %v724, %v724
      %v741 = vcombine.high %v731, %v731
      %v742 = vcombine.high %v738, %v738
      %v743 = vcombine.high %v243, %v243
      %v745 = vunpack.c.l.s4 1966171168
      %v746 = vunpack.c.0.s8 %v745
      %v747 = vlaneseq
      %v748 = vshrl.u32 %v747, 7
      %v749 = vsub.s32 %v746, %v748
      %v750 = vrot.slane %v243, %v749
      %v752 = vunpack.c.l.s4 1966171168
      %v753 = vunpack.c.0.s8 %v752
      %v754 = vlaneseq
      %v755 = vshrl.u32 %v754, 7
      %v756 = vsub.s32 %v753, %v755
      %v757 = vrot.slane %v743, %v756
      %v758 = vcombine.high %v750, %v750
      %v759 = vcombine.high %v757, %v757
      %v761 = vunpack.c.l.s4 1966171168
      %v762 = vunpack.c.0.s8 %v761
      %v763 = vlaneseq
      %v764 = vshrl.u32 %v763, 7
      %v765 = vsub.s32 %v762, %v764
      %v766 = vrot.slane %v750, %v765
      %v768 = vunpack.c.l.s4 1966171168
      %v769 = vunpack.c.0.s8 %v768
      %v770 = vlaneseq
      %v771 = vshrl.u32 %v770, 7
      %v772 = vsub.s32 %v769, %v771
      %v773 = vrot.slane %v757, %v772
      %v775 = vunpack.c.l.s4 1966171168
      %v776 = vunpack.c.0.s8 %v775
      %v777 = vlaneseq
      %v778 = vshrl.u32 %v777, 7
      %v779 = vsub.s32 %v776, %v778
      %v780 = vrot.slane %v758, %v779
      %v782 = vunpack.c.l.s4 1966171168
      %v783 = vunpack.c.0.s8 %v782
      %v784 = vlaneseq
      %v785 = vshrl.u32 %v784, 7
      %v786 = vsub.s32 %v783, %v785
      %v787 = vrot.slane %v759, %v786
      %v788 = vcombine.high %v766, %v766
      %v789 = vcombine.high %v780, %v780
      %v1252 = vunpack.c.l.b16 %v244
      %v1253 = vunpack.c.h.b16 %v244
      %v1254 = vunpack.c.l.b16 %v245
      %v1255 = vunpack.c.h.b16 %v245
      %v1256 = vunpack.c.l.b16 %v246
      %v1257 = vunpack.c.h.b16 %v246
      %v1258 = vunpack.c.l.b16 %v247
      %v1259 = vunpack.c.h.b16 %v247
      %v1260 = vunpack.c.l.b16 %v248
      %v1261 = vunpack.c.h.b16 %v248
      %v1262 = vunpack.c.l.b16 %v249
      %v1263 = vunpack.c.h.b16 %v249
      %v1264 = vunpack.c.l.b16 %v250
      %v1265 = vunpack.c.h.b16 %v250
      %v1266 = vunpack.c.l.b16 %v251
      %v1267 = vunpack.c.h.b16 %v251
      %v1268 = vunpack.c.l.b16 %v252
      %v1269 = vunpack.c.h.b16 %v252
      %v1270 = vunpack.c.l.b16 %v253
      %v1271 = vunpack.c.h.b16 %v253
      %v1272 = vunpack.c.l.b16 %v254
      %v1273 = vunpack.c.h.b16 %v254
      %v1274 = vunpack.c.l.b16 %v255
      %v1275 = vunpack.c.h.b16 %v255
      %v1276 = vunpack.c.l.b16 %v256
      %v1277 = vunpack.c.h.b16 %v256
      %v1278 = vunpack.c.l.b16 %v257
      %v1279 = vunpack.c.h.b16 %v257
      %v1280 = vunpack.c.l.b16 %v258
      %v1281 = vunpack.c.h.b16 %v258
      %v1282 = vunpack.c.l.b16 %v259
      %v1283 = vunpack.c.h.b16 %v259
      %v1284 = vunpack.c.l.b16 %v260
      %v1285 = vunpack.c.h.b16 %v260
      %v1286 = vunpack.c.l.b16 %v261
      %v1287 = vunpack.c.h.b16 %v261
      %v1288 = vunpack.c.l.b16 %v262
      %v1289 = vunpack.c.h.b16 %v262
      %v1290 = vunpack.c.l.b16 %v263
      %v1291 = vunpack.c.h.b16 %v263
      %v1292 = vunpack.c.l.b16 %v264
      %v1293 = vunpack.c.h.b16 %v264
      %v1294 = vunpack.c.l.b16 %v265
      %v1295 = vunpack.c.h.b16 %v265
      %v1296 = vunpack.c.l.b16 %v266
      %v1297 = vunpack.c.h.b16 %v266
      %v1298 = vunpack.c.l.b16 %v267
      %v1299 = vunpack.c.h.b16 %v267
      %v1300 = vunpack.c.l.b16 %v268
      %v1301 = vunpack.c.h.b16 %v268
      %v1302 = vunpack.c.l.b16 %v269
      %v1303 = vunpack.c.h.b16 %v269
      %v1304 = vunpack.c.l.b16 %v270
      %v1305 = vunpack.c.h.b16 %v270
      %v1306 = vunpack.c.l.b16 %v271
      %v1307 = vunpack.c.h.b16 %v271
      %v1308 = vunpack.c.l.b16 %v272
      %v1309 = vunpack.c.h.b16 %v272
      %v1310 = vunpack.c.l.b16 %v273
      %v1311 = vunpack.c.h.b16 %v273
      %v1312 = vunpack.c.l.b16 %v274
      %v1313 = vunpack.c.h.b16 %v274
      %v1314 = vunpack.c.l.b16 %v275
      %v1315 = vunpack.c.h.b16 %v275
      %v1316 = vunpack.c.l.b16 %v276
      %v1317 = vunpack.c.h.b16 %v276
      %v1318 = vunpack.c.l.b16 %v277
      %v1319 = vunpack.c.h.b16 %v277
      %v1320 = vunpack.c.l.b16 %v278
      %v1321 = vunpack.c.h.b16 %v278
      %v1322 = vunpack.c.l.b16 %v279
      %v1323 = vunpack.c.h.b16 %v279
      %v1324 = vunpack.c.l.b16 %v280
      %v1325 = vunpack.c.h.b16 %v280
      %v1326 = vunpack.c.l.b16 %v281
      %v1327 = vunpack.c.h.b16 %v281
      %v1328 = vunpack.c.l.b16 %v282
      %v1329 = vunpack.c.h.b16 %v282
      %v1330 = vunpack.c.l.b16 %v283
      %v1331 = vunpack.c.h.b16 %v283
      %v1332 = vunpack.c.l.b16 %v284
      %v1333 = vunpack.c.h.b16 %v284
      %v1334 = vunpack.c.l.b16 %v285
      %v1335 = vunpack.c.h.b16 %v285
      %v1336 = vunpack.c.l.b16 %v286
      %v1337 = vunpack.c.h.b16 %v286
      %v1338 = vunpack.c.l.b16 %v287
      %v1339 = vunpack.c.h.b16 %v287
      %v1340 = vunpack.c.l.b16 %v288
      %v1341 = vunpack.c.h.b16 %v288
      %v1342 = vunpack.c.l.b16 %v289
      %v1343 = vunpack.c.h.b16 %v289
      %v1344 = vunpack.c.l.b16 %v290
      %v1345 = vunpack.c.h.b16 %v290
      %v1346 = vunpack.c.l.b16 %v291
      %v1347 = vunpack.c.h.b16 %v291
      %v1348 = vunpack.c.l.b16 %v292
      %v1349 = vunpack.c.h.b16 %v292
      %v1350 = vunpack.c.l.b16 %v293
      %v1351 = vunpack.c.h.b16 %v293
      %v1352 = vunpack.c.l.b16 %v294
      %v1353 = vunpack.c.h.b16 %v294
      %v1354 = vunpack.c.l.b16 %v295
      %v1355 = vunpack.c.h.b16 %v295
      %v1356 = vunpack.c.l.b16 %v296
      %v1357 = vunpack.c.h.b16 %v296
      %v1358 = vunpack.c.l.b16 %v297
      %v1359 = vunpack.c.h.b16 %v297
      %v1360 = vunpack.c.l.b16 %v298
      %v1361 = vunpack.c.h.b16 %v298
      %v1362 = vunpack.c.l.b16 %v299
      %v1363 = vunpack.c.h.b16 %v299
      %v1364 = vunpack.c.l.b16 %v300
      %v1365 = vunpack.c.h.b16 %v300
      %v1366 = vunpack.c.l.b16 %v301
      %v1367 = vunpack.c.h.b16 %v301
      %v1368 = vunpack.c.l.b16 %v302
      %v1369 = vunpack.c.h.b16 %v302
      %v1370 = vunpack.c.l.b16 %v303
      %v1371 = vunpack.c.h.b16 %v303
      %v1372 = vunpack.c.l.b16 %v304
      %v1373 = vunpack.c.h.b16 %v304
      %v1374 = vunpack.c.l.b16 %v305
      %v1375 = vunpack.c.h.b16 %v305
      %v1376 = vunpack.c.l.b16 %v306
      %v1377 = vunpack.c.h.b16 %v306
      %v1378 = vunpack.c.l.b16 %v307
      %v1379 = vunpack.c.h.b16 %v307
      %v1380 = vunpack.c.l.b16 %v308
      %v1381 = vunpack.c.h.b16 %v308
      %v1382 = vunpack.c.l.b16 %v309
      %v1383 = vunpack.c.h.b16 %v309
      %v1384 = vunpack.c.l.b16 %v310
      %v1385 = vunpack.c.h.b16 %v310
      %v1386 = vunpack.c.l.b16 %v311
      %v1387 = vunpack.c.h.b16 %v311
      %v1388 = vunpack.c.l.b16 %v312
      %v1389 = vunpack.c.h.b16 %v312
      %v1390 = vunpack.c.l.b16 %v313
      %v1391 = vunpack.c.h.b16 %v313
      %v1392 = vunpack.c.l.b16 %v314
      %v1393 = vunpack.c.h.b16 %v314
      %v1394 = vunpack.c.l.b16 %v315
      %v1395 = vunpack.c.h.b16 %v315
      %v1396 = vunpack.c.l.b16 %v316
      %v1397 = vunpack.c.h.b16 %v316
      %v1398 = vunpack.c.l.b16 %v317
      %v1399 = vunpack.c.h.b16 %v317
      %v1400 = vunpack.c.l.b16 %v318
      %v1401 = vunpack.c.h.b16 %v318
      %v1402 = vunpack.c.l.b16 %v319
      %v1403 = vunpack.c.h.b16 %v319
      %v1404 = vunpack.c.l.b16 %v320
      %v1405 = vunpack.c.h.b16 %v320
      %v1406 = vunpack.c.l.b16 %v321
      %v1407 = vunpack.c.h.b16 %v321
      %v1408 = vunpack.c.l.b16 %v322
      %v1409 = vunpack.c.h.b16 %v322
      %v1410 = vunpack.c.l.b16 %v323
      %v1411 = vunpack.c.h.b16 %v323
      %v1412 = vunpack.c.l.b16 %v324
      %v1413 = vunpack.c.h.b16 %v324
      %v1414 = vunpack.c.l.b16 %v325
      %v1415 = vunpack.c.h.b16 %v325
      %v1416 = vunpack.c.l.b16 %v326
      %v1417 = vunpack.c.h.b16 %v326
      %v1418 = vunpack.c.l.b16 %v327
      %v1419 = vunpack.c.h.b16 %v327
      %v1420 = vunpack.c.l.b16 %v328
      %v1421 = vunpack.c.h.b16 %v328
      %v1422 = vunpack.c.l.b16 %v329
      %v1423 = vunpack.c.h.b16 %v329
      %v1424 = vunpack.c.l.b16 %v330
      %v1425 = vunpack.c.h.b16 %v330
      %v1426 = vunpack.c.l.b16 %v331
      %v1427 = vunpack.c.h.b16 %v331
      %v1428 = vunpack.c.l.b16 %v332
      %v1429 = vunpack.c.h.b16 %v332
      %v1430 = vunpack.c.l.b16 %v333
      %v1431 = vunpack.c.h.b16 %v333
      %v1432 = vunpack.c.l.b16 %v334
      %v1433 = vunpack.c.h.b16 %v334
      %v1434 = vunpack.c.l.b16 %v335
      %v1435 = vunpack.c.h.b16 %v335
      %v1436 = vunpack.c.l.b16 %v336
      %v1437 = vunpack.c.h.b16 %v336
      %v1438 = vunpack.c.l.b16 %v337
      %v1439 = vunpack.c.h.b16 %v337
      %v1440 = vunpack.c.l.b16 %v338
      %v1441 = vunpack.c.h.b16 %v338
      %v1442 = vunpack.c.l.b16 %v339
      %v1443 = vunpack.c.h.b16 %v339
      %v1444 = vunpack.c.l.b16 %v340
      %v1445 = vunpack.c.h.b16 %v340
      %v1446 = vunpack.c.l.b16 %v341
      %v1447 = vunpack.c.h.b16 %v341
      %v1448 = vunpack.c.l.b16 %v342
      %v1449 = vunpack.c.h.b16 %v342
      %v1450 = vunpack.c.l.b16 %v343
      %v1451 = vunpack.c.h.b16 %v343
      %v1452 = vunpack.c.l.b16 %v344
      %v1453 = vunpack.c.h.b16 %v344
      %v1454 = vunpack.c.l.b16 %v345
      %v1455 = vunpack.c.h.b16 %v345
      %v1456 = vunpack.c.l.b16 %v346
      %v1457 = vunpack.c.h.b16 %v346
      %v1458 = vunpack.c.l.b16 %v347
      %v1459 = vunpack.c.h.b16 %v347
      %v1460 = vunpack.c.l.b16 %v348
      %v1461 = vunpack.c.h.b16 %v348
      %v1462 = vunpack.c.l.b16 %v349
      %v1463 = vunpack.c.h.b16 %v349
      %v1464 = vunpack.c.l.b16 %v350
      %v1465 = vunpack.c.h.b16 %v350
      %v1466 = vunpack.c.l.b16 %v351
      %v1467 = vunpack.c.h.b16 %v351
      %v1468 = vunpack.c.l.b16 %v352
      %v1469 = vunpack.c.h.b16 %v352
      %v1470 = vunpack.c.l.b16 %v353
      %v1471 = vunpack.c.h.b16 %v353
      %v1472 = vunpack.c.l.b16 %v354
      %v1473 = vunpack.c.h.b16 %v354
      %v1474 = vunpack.c.l.b16 %v355
      %v1475 = vunpack.c.h.b16 %v355
      %v1476 = vunpack.c.l.b16 %v356
      %v1477 = vunpack.c.h.b16 %v356
      %v1478 = vunpack.c.l.b16 %v357
      %v1479 = vunpack.c.h.b16 %v357
      %v1480 = vunpack.c.l.b16 %v358
      %v1481 = vunpack.c.h.b16 %v358
      %v1482 = vunpack.c.l.b16 %v359
      %v1483 = vunpack.c.h.b16 %v359
      %v1484 = vunpack.c.l.b16 %v360
      %v1485 = vunpack.c.h.b16 %v360
      %v1486 = vunpack.c.l.b16 %v361
      %v1487 = vunpack.c.h.b16 %v361
      %v1488 = vunpack.c.l.b16 %v362
      %v1489 = vunpack.c.h.b16 %v362
      %v1490 = vunpack.c.l.b16 %v363
      %v1491 = vunpack.c.h.b16 %v363
      %v1492 = vunpack.c.l.b16 %v364
      %v1493 = vunpack.c.h.b16 %v364
      %v1494 = vunpack.c.l.b16 %v365
      %v1495 = vunpack.c.h.b16 %v365
      %v1496 = vunpack.c.l.b16 %v366
      %v1497 = vunpack.c.h.b16 %v366
      %v1498 = vunpack.c.l.b16 %v367
      %v1499 = vunpack.c.h.b16 %v367
      %v1500 = vunpack.c.l.b16 %v368
      %v1501 = vunpack.c.h.b16 %v368
      %v1502 = vunpack.c.l.b16 %v369
      %v1503 = vunpack.c.h.b16 %v369
      %v1504 = vunpack.c.l.b16 %v370
      %v1505 = vunpack.c.h.b16 %v370
      %v1506 = vunpack.c.l.b16 %v371
      %v1507 = vunpack.c.h.b16 %v371
      %v1508 = vunpack.c.l.b16 %v372
      %v1509 = vunpack.c.h.b16 %v372
      %v1510 = vunpack.c.l.b16 %v373
      %v1511 = vunpack.c.h.b16 %v373
      %v1512 = vunpack.c.l.b16 %v374
      %v1513 = vunpack.c.h.b16 %v374
      %v1514 = vunpack.c.l.b16 %v375
      %v1515 = vunpack.c.h.b16 %v375
      %v1516 = vunpack.c.l.b16 %v376
      %v1517 = vunpack.c.h.b16 %v376
      %v1518 = vunpack.c.l.b16 %v377
      %v1519 = vunpack.c.h.b16 %v377
      %v1520 = vunpack.c.l.b16 %v378
      %v1521 = vunpack.c.h.b16 %v378
      %v1522 = vunpack.c.l.b16 %v379
      %v1523 = vunpack.c.h.b16 %v379
      %v1524 = vunpack.c.l.b16 %v380
      %v1525 = vunpack.c.h.b16 %v380
      %v1526 = vunpack.c.l.b16 %v381
      %v1527 = vunpack.c.h.b16 %v381
      %v1528 = vunpack.c.l.b16 %v382
      %v1529 = vunpack.c.h.b16 %v382
      %v1530 = vunpack.c.l.b16 %v383
      %v1531 = vunpack.c.h.b16 %v383
      %v1532 = vunpack.c.l.b16 %v384
      %v1533 = vunpack.c.h.b16 %v384
      %v1534 = vunpack.c.l.b16 %v385
      %v1535 = vunpack.c.h.b16 %v385
      %v1536 = vunpack.c.l.b16 %v386
      %v1537 = vunpack.c.h.b16 %v386
      %v1538 = vunpack.c.l.b16 %v387
      %v1539 = vunpack.c.h.b16 %v387
      %v1540 = vunpack.c.l.b16 %v388
      %v1541 = vunpack.c.h.b16 %v388
      %v1542 = vunpack.c.l.b16 %v389
      %v1543 = vunpack.c.h.b16 %v389
      %v1544 = vunpack.c.l.b16 %v390
      %v1545 = vunpack.c.h.b16 %v390
      %v1546 = vunpack.c.l.b16 %v391
      %v1547 = vunpack.c.h.b16 %v391
      %v1548 = vunpack.c.l.b16 %v392
      %v1549 = vunpack.c.h.b16 %v392
      %v1550 = vunpack.c.l.b16 %v393
      %v1551 = vunpack.c.h.b16 %v393
      %v1552 = vunpack.c.l.b16 %v394
      %v1553 = vunpack.c.h.b16 %v394
      %v1554 = vunpack.c.l.b16 %v395
      %v1555 = vunpack.c.h.b16 %v395
      %v1556 = vunpack.c.l.b16 %v396
      %v1557 = vunpack.c.h.b16 %v396
      %v1558 = vunpack.c.l.b16 %v397
      %v1559 = vunpack.c.h.b16 %v397
      %v1560 = vunpack.c.l.b16 %v398
      %v1561 = vunpack.c.h.b16 %v398
      %v1562 = vunpack.c.l.b16 %v399
      %v1563 = vunpack.c.h.b16 %v399
      %v1564 = vunpack.c.l.b16 %v400
      %v1565 = vunpack.c.h.b16 %v400
      %v1566 = vunpack.c.l.b16 %v401
      %v1567 = vunpack.c.h.b16 %v401
      %v1568 = vunpack.c.l.b16 %v402
      %v1569 = vunpack.c.h.b16 %v402
      %v1570 = vunpack.c.l.b16 %v403
      %v1571 = vunpack.c.h.b16 %v403
      %v1572 = vunpack.c.l.b16 %v404
      %v1573 = vunpack.c.h.b16 %v404
      %v1574 = vunpack.c.l.b16 %v405
      %v1575 = vunpack.c.h.b16 %v405
      %v1576 = vunpack.c.l.b16 %v406
      %v1577 = vunpack.c.h.b16 %v406
      %v1578 = vunpack.c.l.b16 %v407
      %v1579 = vunpack.c.h.b16 %v407
      %v1580 = vunpack.c.l.b16 %v408
      %v1581 = vunpack.c.h.b16 %v408
      %v1582 = vunpack.c.l.b16 %v409
      %v1583 = vunpack.c.h.b16 %v409
      %v1584 = vunpack.c.l.b16 %v410
      %v1585 = vunpack.c.h.b16 %v410
      %v1586 = vunpack.c.l.b16 %v411
      %v1587 = vunpack.c.h.b16 %v411
      %v1588 = vunpack.c.l.b16 %v412
      %v1589 = vunpack.c.h.b16 %v412
      %v1590 = vunpack.c.l.b16 %v413
      %v1591 = vunpack.c.h.b16 %v413
      %v1592 = vunpack.c.l.b16 %v414
      %v1593 = vunpack.c.h.b16 %v414
      %v1594 = vunpack.c.l.b16 %v415
      %v1595 = vunpack.c.h.b16 %v415
      %v1596 = vunpack.c.l.b16 %v416
      %v1597 = vunpack.c.h.b16 %v416
      %v1598 = vunpack.c.l.b16 %v417
      %v1599 = vunpack.c.h.b16 %v417
      %v1600 = vunpack.c.l.b16 %v418
      %v1601 = vunpack.c.h.b16 %v418
      %v1602 = vunpack.c.l.b16 %v419
      %v1603 = vunpack.c.h.b16 %v419
      %v1604 = vunpack.c.l.b16 %v420
      %v1605 = vunpack.c.h.b16 %v420
      %v1606 = vunpack.c.l.b16 %v421
      %v1607 = vunpack.c.h.b16 %v421
      %v1608 = vunpack.c.l.b16 %v422
      %v1609 = vunpack.c.h.b16 %v422
      %v1610 = vunpack.c.l.b16 %v423
      %v1611 = vunpack.c.h.b16 %v423
      %v1612 = vunpack.c.l.b16 %v424
      %v1613 = vunpack.c.h.b16 %v424
      %v1614 = vunpack.c.l.b16 %v425
      %v1615 = vunpack.c.h.b16 %v425
      %v1616 = vunpack.c.l.b16 %v426
      %v1617 = vunpack.c.h.b16 %v426
      %v1618 = vunpack.c.l.b16 %v427
      %v1619 = vunpack.c.h.b16 %v427
      %v1620 = vunpack.c.l.b16 %v428
      %v1621 = vunpack.c.h.b16 %v428
      %v1622 = vunpack.c.l.b16 %v429
      %v1623 = vunpack.c.h.b16 %v429
      %v1624 = vunpack.c.l.b16 %v430
      %v1625 = vunpack.c.h.b16 %v430
      %v1626 = vunpack.c.l.b16 %v431
      %v1627 = vunpack.c.h.b16 %v431
      %v1628 = vunpack.c.l.b16 %v432
      %v1629 = vunpack.c.h.b16 %v432
      %v1630 = vunpack.c.l.b16 %v433
      %v1631 = vunpack.c.h.b16 %v433
      %v1632 = vunpack.c.l.b16 %v434
      %v1633 = vunpack.c.h.b16 %v434
      %v1634 = vunpack.c.l.b16 %v435
      %v1635 = vunpack.c.h.b16 %v435
      %v1636 = vunpack.c.l.b16 %v436
      %v1637 = vunpack.c.h.b16 %v436
      %v1638 = vunpack.c.l.b16 %v437
      %v1639 = vunpack.c.h.b16 %v437
      %v1640 = vunpack.c.l.b16 %v438
      %v1641 = vunpack.c.h.b16 %v438
      %v1642 = vunpack.c.l.b16 %v439
      %v1643 = vunpack.c.h.b16 %v439
      %v1644 = vunpack.c.l.b16 %v440
      %v1645 = vunpack.c.h.b16 %v440
      %v1646 = vunpack.c.l.b16 %v441
      %v1647 = vunpack.c.h.b16 %v441
      %v1648 = vunpack.c.l.b16 %v442
      %v1649 = vunpack.c.h.b16 %v442
      %v1650 = vunpack.c.l.b16 %v443
      %v1651 = vunpack.c.h.b16 %v443
      %v1652 = vunpack.c.l.b16 %v444
      %v1653 = vunpack.c.h.b16 %v444
      %v1654 = vunpack.c.l.b16 %v445
      %v1655 = vunpack.c.h.b16 %v445
      %v1656 = vunpack.c.l.b16 %v446
      %v1657 = vunpack.c.h.b16 %v446
      %v1658 = vunpack.c.l.b16 %v447
      %v1659 = vunpack.c.h.b16 %v447
      %v1660 = vunpack.c.l.b16 %v448
      %v1661 = vunpack.c.h.b16 %v448
      %v1662 = vunpack.c.l.b16 %v449
      %v1663 = vunpack.c.h.b16 %v449
      %v1664 = vunpack.c.l.b16 %v450
      %v1665 = vunpack.c.h.b16 %v450
      %v1666 = vunpack.c.l.b16 %v451
      %v1667 = vunpack.c.h.b16 %v451
      %v1668 = vunpack.c.l.b16 %v452
      %v1669 = vunpack.c.h.b16 %v452
      %v1670 = vunpack.c.l.b16 %v453
      %v1671 = vunpack.c.h.b16 %v453
      %v1672 = vunpack.c.l.b16 %v454
      %v1673 = vunpack.c.h.b16 %v454
      %v1674 = vunpack.c.l.b16 %v455
      %v1675 = vunpack.c.h.b16 %v455
      %v1676 = vunpack.c.l.b16 %v456
      %v1677 = vunpack.c.h.b16 %v456
      %v1678 = vunpack.c.l.b16 %v457
      %v1679 = vunpack.c.h.b16 %v457
      %v1680 = vunpack.c.l.b16 %v458
      %v1681 = vunpack.c.h.b16 %v458
      %v1682 = vunpack.c.l.b16 %v459
      %v1683 = vunpack.c.h.b16 %v459
      %v1684 = vunpack.c.l.b16 %v460
      %v1685 = vunpack.c.h.b16 %v460
      %v1686 = vunpack.c.l.b16 %v461
      %v1687 = vunpack.c.h.b16 %v461
      %v1688 = vunpack.c.l.b16 %v462
      %v1689 = vunpack.c.h.b16 %v462
      %v1690 = vunpack.c.l.b16 %v463
      %v1691 = vunpack.c.h.b16 %v463
      %v1692 = vunpack.c.l.b16 %v464
      %v1693 = vunpack.c.h.b16 %v464
      %v1694 = vunpack.c.l.b16 %v465
      %v1695 = vunpack.c.h.b16 %v465
      %v1696 = vunpack.c.l.b16 %v466
      %v1697 = vunpack.c.h.b16 %v466
      %v1698 = vunpack.c.l.b16 %v467
      %v1699 = vunpack.c.h.b16 %v467
      %v1700 = vunpack.c.l.b16 %v468
      %v1701 = vunpack.c.h.b16 %v468
      %v1702 = vunpack.c.l.b16 %v469
      %v1703 = vunpack.c.h.b16 %v469
      %v1704 = vunpack.c.l.b16 %v470
      %v1705 = vunpack.c.h.b16 %v470
      %v1706 = vunpack.c.l.b16 %v471
      %v1707 = vunpack.c.h.b16 %v471
      %v1708 = vunpack.c.l.b16 %v472
      %v1709 = vunpack.c.h.b16 %v472
      %v1710 = vunpack.c.l.b16 %v473
      %v1711 = vunpack.c.h.b16 %v473
      %v1712 = vunpack.c.l.b16 %v474
      %v1713 = vunpack.c.h.b16 %v474
      %v1714 = vunpack.c.l.b16 %v475
      %v1715 = vunpack.c.h.b16 %v475
      %v1716 = vunpack.c.l.b16 %v476
      %v1717 = vunpack.c.h.b16 %v476
      %v1718 = vunpack.c.l.b16 %v477
      %v1719 = vunpack.c.h.b16 %v477
      %v1720 = vunpack.c.l.b16 %v478
      %v1721 = vunpack.c.h.b16 %v478
      %v1722 = vunpack.c.l.b16 %v479
      %v1723 = vunpack.c.h.b16 %v479
      %v1724 = vunpack.c.l.b16 %v480
      %v1725 = vunpack.c.h.b16 %v480
      %v1726 = vunpack.c.l.b16 %v481
      %v1727 = vunpack.c.h.b16 %v481
      %v1728 = vunpack.c.l.b16 %v482
      %v1729 = vunpack.c.h.b16 %v482
      %v1730 = vunpack.c.l.b16 %v483
      %v1731 = vunpack.c.h.b16 %v483
      %v1732 = vunpack.c.l.b16 %v484
      %v1733 = vunpack.c.h.b16 %v484
      %v1734 = vunpack.c.l.b16 %v485
      %v1735 = vunpack.c.h.b16 %v485
      %v1736 = vunpack.c.l.b16 %v486
      %v1737 = vunpack.c.h.b16 %v486
      %v1738 = vunpack.c.l.b16 %v487
      %v1739 = vunpack.c.h.b16 %v487
      %v1740 = vunpack.c.l.b16 %v488
      %v1741 = vunpack.c.h.b16 %v488
      %v1742 = vunpack.c.l.b16 %v489
      %v1743 = vunpack.c.h.b16 %v489
      %v1744 = vunpack.c.l.b16 %v490
      %v1745 = vunpack.c.h.b16 %v490
      %v1746 = vunpack.c.l.b16 %v491
      %v1747 = vunpack.c.h.b16 %v491
      %v1748 = vunpack.c.l.b16 %v492
      %v1749 = vunpack.c.h.b16 %v492
      %v1750 = vunpack.c.l.b16 %v493
      %v1751 = vunpack.c.h.b16 %v493
      %v1752 = vunpack.c.l.b16 %v494
      %v1753 = vunpack.c.h.b16 %v494
      %v1754 = vunpack.c.l.b16 %v495
      %v1755 = vunpack.c.h.b16 %v495
      %v1756 = vunpack.c.l.b16 %v496
      %v1757 = vunpack.c.h.b16 %v496
      %v1758 = vunpack.c.l.b16 %v497
      %v1759 = vunpack.c.h.b16 %v497
      %v1760 = vunpack.c.l.b16 %v498
      %v1761 = vunpack.c.h.b16 %v498
      %v1762 = vunpack.c.l.b16 %v499
      %v1763 = vunpack.c.h.b16 %v499
      %v1764 = vunpack.c.l.b16 %v500
      %v1765 = vunpack.c.h.b16 %v500
      %v1766 = vunpack.c.l.b16 %v501
      %v1767 = vunpack.c.h.b16 %v501
      %v1768 = vunpack.c.l.b16 %v502
      %v1769 = vunpack.c.h.b16 %v502
      %v1770 = vunpack.c.l.b16 %v503
      %v1771 = vunpack.c.h.b16 %v503
      %v1772 = vunpack.c.l.b16 %v504
      %v1773 = vunpack.c.h.b16 %v504
      %v1774 = vunpack.c.l.b16 %v505
      %v1775 = vunpack.c.h.b16 %v505
      %v1776 = vunpack.c.l.b16 %v506
      %v1777 = vunpack.c.h.b16 %v506
      %v1778 = vunpack.c.l.b16 %v507
      %v1779 = vunpack.c.h.b16 %v507
      %v1780 = vunpack.c.l.b16 %v508
      %v1781 = vunpack.c.h.b16 %v508
      %v1782 = vunpack.c.l.b16 %v509
      %v1783 = vunpack.c.h.b16 %v509
      %v1784 = vunpack.c.l.b16 %v510
      %v1785 = vunpack.c.h.b16 %v510
      %v1786 = vunpack.c.l.b16 %v511
      %v1787 = vunpack.c.h.b16 %v511
      %v1788 = vunpack.c.l.b16 %v512
      %v1789 = vunpack.c.h.b16 %v512
      %v1790 = vunpack.c.l.b16 %v513
      %v1791 = vunpack.c.h.b16 %v513
      %v1792 = vunpack.c.l.b16 %v514
      %v1793 = vunpack.c.h.b16 %v514
      %v1794 = vunpack.c.l.b16 %v515
      %v1795 = vunpack.c.h.b16 %v515
      %v1796 = vunpack.c.l.b16 %v516
      %v1797 = vunpack.c.h.b16 %v516
      %v1798 = vunpack.c.l.b16 %v517
      %v1799 = vunpack.c.h.b16 %v517
      %v1800 = vunpack.c.l.b16 %v518
      %v1801 = vunpack.c.h.b16 %v518
      %v1802 = vunpack.c.l.b16 %v519
      %v1803 = vunpack.c.h.b16 %v519
      %v1804 = vunpack.c.l.b16 %v520
      %v1805 = vunpack.c.h.b16 %v520
      %v1806 = vunpack.c.l.b16 %v521
      %v1807 = vunpack.c.h.b16 %v521
      %v1808 = vunpack.c.l.b16 %v522
      %v1809 = vunpack.c.h.b16 %v522
      %v1810 = vunpack.c.l.b16 %v523
      %v1811 = vunpack.c.h.b16 %v523
      %v1812 = vunpack.c.l.b16 %v524
      %v1813 = vunpack.c.h.b16 %v524
      %v1814 = vunpack.c.l.b16 %v525
      %v1815 = vunpack.c.h.b16 %v525
      %v1816 = vunpack.c.l.b16 %v526
      %v1817 = vunpack.c.h.b16 %v526
      %v1818 = vunpack.c.l.b16 %v527
      %v1819 = vunpack.c.h.b16 %v527
      %v1820 = vunpack.c.l.b16 %v528
      %v1821 = vunpack.c.h.b16 %v528
      %v1822 = vunpack.c.l.b16 %v529
      %v1823 = vunpack.c.h.b16 %v529
      %v1824 = vunpack.c.l.b16 %v530
      %v1825 = vunpack.c.h.b16 %v530
      %v1826 = vunpack.c.l.b16 %v531
      %v1827 = vunpack.c.h.b16 %v531
      %v1828 = vunpack.c.l.b16 %v532
      %v1829 = vunpack.c.h.b16 %v532
      %v1830 = vunpack.c.l.b16 %v533
      %v1831 = vunpack.c.h.b16 %v533
      %v1832 = vunpack.c.l.b16 %v534
      %v1833 = vunpack.c.h.b16 %v534
      %v1834 = vunpack.c.l.b16 %v535
      %v1835 = vunpack.c.h.b16 %v535
      %v1836 = vunpack.c.l.b16 %v536
      %v1837 = vunpack.c.h.b16 %v536
      %v1838 = vunpack.c.l.b16 %v537
      %v1839 = vunpack.c.h.b16 %v537
      %v1840 = vunpack.c.l.b16 %v538
      %v1841 = vunpack.c.h.b16 %v538
      %v1842 = vunpack.c.l.b16 %v539
      %v1843 = vunpack.c.h.b16 %v539
      %v1844 = vunpack.c.l.b16 %v540
      %v1845 = vunpack.c.h.b16 %v540
      %v1846 = vunpack.c.l.b16 %v541
      %v1847 = vunpack.c.h.b16 %v541
      %v1848 = vunpack.c.l.b16 %v542
      %v1849 = vunpack.c.h.b16 %v542
      %v1850 = vunpack.c.l.b16 %v543
      %v1851 = vunpack.c.h.b16 %v543
      %v1852 = vunpack.c.l.b16 %v544
      %v1853 = vunpack.c.h.b16 %v544
      %v1854 = vunpack.c.l.b16 %v545
      %v1855 = vunpack.c.h.b16 %v545
      %v1856 = vunpack.c.l.b16 %v546
      %v1857 = vunpack.c.h.b16 %v546
      %v1858 = vunpack.c.l.b16 %v547
      %v1859 = vunpack.c.h.b16 %v547
      %v1860 = vunpack.c.l.b16 %v548
      %v1861 = vunpack.c.h.b16 %v548
      %v1862 = vunpack.c.l.b16 %v549
      %v1863 = vunpack.c.h.b16 %v549
      %v1864 = vunpack.c.l.b16 %v550
      %v1865 = vunpack.c.h.b16 %v550
      %v1866 = vunpack.c.l.b16 %v551
      %v1867 = vunpack.c.h.b16 %v551
      %v1868 = vunpack.c.l.b16 %v552
      %v1869 = vunpack.c.h.b16 %v552
      %v1870 = vunpack.c.l.b16 %v553
      %v1871 = vunpack.c.h.b16 %v553
      %v1872 = vunpack.c.l.b16 %v554
      %v1873 = vunpack.c.h.b16 %v554
      %v1874 = vunpack.c.l.b16 %v555
      %v1875 = vunpack.c.h.b16 %v555
      %v1876 = vunpack.c.l.b16 %v556
      %v1877 = vunpack.c.h.b16 %v556
      %v1878 = vunpack.c.l.b16 %v557
      %v1879 = vunpack.c.h.b16 %v557
      %v1880 = vunpack.c.l.b16 %v558
      %v1881 = vunpack.c.h.b16 %v558
      %v1882 = vunpack.c.l.b16 %v559
      %v1883 = vunpack.c.h.b16 %v559
      %v1884 = vunpack.c.l.b16 %v560
      %v1885 = vunpack.c.h.b16 %v560
      %v1886 = vunpack.c.l.b16 %v561
      %v1887 = vunpack.c.h.b16 %v561
      %v1888 = vunpack.c.l.b16 %v562
      %v1889 = vunpack.c.h.b16 %v562
      %v1890 = vunpack.c.l.b16 %v563
      %v1891 = vunpack.c.h.b16 %v563
      %v1892 = vunpack.c.l.b16 %v564
      %v1893 = vunpack.c.h.b16 %v564
      %v1894 = vunpack.c.l.b16 %v565
      %v1895 = vunpack.c.h.b16 %v565
      %v1896 = vunpack.c.l.b16 %v566
      %v1897 = vunpack.c.h.b16 %v566
      %v1898 = vunpack.c.l.b16 %v567
      %v1899 = vunpack.c.h.b16 %v567
      %v1900 = vunpack.c.l.b16 %v568
      %v1901 = vunpack.c.h.b16 %v568
      %v1902 = vunpack.c.l.b16 %v569
      %v1903 = vunpack.c.h.b16 %v569
      %v1904 = vunpack.c.l.b16 %v570
      %v1905 = vunpack.c.h.b16 %v570
      %v1906 = vunpack.c.l.b16 %v571
      %v1907 = vunpack.c.h.b16 %v571
      %v1908 = vunpack.c.l.b16 %v572
      %v1909 = vunpack.c.h.b16 %v572
      %v1910 = vunpack.c.l.b16 %v573
      %v1911 = vunpack.c.h.b16 %v573
      %v1912 = vunpack.c.l.b16 %v574
      %v1913 = vunpack.c.h.b16 %v574
      %v1914 = vunpack.c.l.b16 %v575
      %v1915 = vunpack.c.h.b16 %v575
      %v1916 = vunpack.c.l.b16 %v576
      %v1917 = vunpack.c.h.b16 %v576
      %v1918 = vunpack.c.l.b16 %v577
      %v1919 = vunpack.c.h.b16 %v577
      %v1920 = vunpack.c.l.b16 %v578
      %v1921 = vunpack.c.h.b16 %v578
      %v1922 = vunpack.c.l.b16 %v579
      %v1923 = vunpack.c.h.b16 %v579
      %v1924 = vunpack.c.l.b16 %v580
      %v1925 = vunpack.c.h.b16 %v580
      %v1926 = vunpack.c.l.b16 %v581
      %v1927 = vunpack.c.h.b16 %v581
      %v1928 = vunpack.c.l.b16 %v582
      %v1929 = vunpack.c.h.b16 %v582
      %v1930 = vunpack.c.l.b16 %v583
      %v1931 = vunpack.c.h.b16 %v583
      %v1932 = vunpack.c.l.b16 %v584
      %v1933 = vunpack.c.h.b16 %v584
      %v1934 = vunpack.c.l.b16 %v585
      %v1935 = vunpack.c.h.b16 %v585
      %v1936 = vunpack.c.l.b16 %v586
      %v1937 = vunpack.c.h.b16 %v586
      %v1938 = vunpack.c.l.b16 %v587
      %v1939 = vunpack.c.h.b16 %v587
      %v1940 = vunpack.c.l.b16 %v588
      %v1941 = vunpack.c.h.b16 %v588
      %v1942 = vunpack.c.l.b16 %v589
      %v1943 = vunpack.c.h.b16 %v589
      %v1944 = vunpack.c.l.b16 %v590
      %v1945 = vunpack.c.h.b16 %v590
      %v1946 = vunpack.c.l.b16 %v591
      %v1947 = vunpack.c.h.b16 %v591
      %v1948 = vunpack.c.l.b16 %v592
      %v1949 = vunpack.c.h.b16 %v592
      %v1950 = vunpack.c.l.b16 %v593
      %v1951 = vunpack.c.h.b16 %v593
      %v1952 = vunpack.c.l.b16 %v594
      %v1953 = vunpack.c.h.b16 %v594
      %v1954 = vunpack.c.l.b16 %v595
      %v1955 = vunpack.c.h.b16 %v595
      %v1956 = vunpack.c.l.b16 %v596
      %v1957 = vunpack.c.h.b16 %v596
      %v1958 = vunpack.c.l.b16 %v597
      %v1959 = vunpack.c.h.b16 %v597
      %v1960 = vunpack.c.l.b16 %v598
      %v1961 = vunpack.c.h.b16 %v598
      %v1962 = vunpack.c.l.b16 %v599
      %v1963 = vunpack.c.h.b16 %v599
      %v1964 = vunpack.c.l.b16 %v600
      %v1965 = vunpack.c.h.b16 %v600
      %v1966 = vunpack.c.l.b16 %v601
      %v1967 = vunpack.c.h.b16 %v601
      %v1968 = vunpack.c.l.b16 %v602
      %v1969 = vunpack.c.h.b16 %v602
      %v1970 = vunpack.c.l.b16 %v603
      %v1971 = vunpack.c.h.b16 %v603
      %v1972 = vunpack.c.l.b16 %v604
      %v1973 = vunpack.c.h.b16 %v604
      %v1974 = vunpack.c.l.b16 %v605
      %v1975 = vunpack.c.h.b16 %v605
      %v1976 = vunpack.c.l.b16 %v606
      %v1977 = vunpack.c.h.b16 %v606
      %v1978 = vunpack.c.l.b16 %v607
      %v1979 = vunpack.c.h.b16 %v607
      %v1980 = vunpack.c.l.b16 %v608
      %v1981 = vunpack.c.h.b16 %v608
      %v1982 = vunpack.c.l.b16 %v609
      %v1983 = vunpack.c.h.b16 %v609
      %v1984 = vunpack.c.l.b16 %v610
      %v1985 = vunpack.c.h.b16 %v610
      %v1986 = vunpack.c.l.b16 %v611
      %v1987 = vunpack.c.h.b16 %v611
      %v1988 = vunpack.c.l.b16 %v612
      %v1989 = vunpack.c.h.b16 %v612
      %v1990 = vunpack.c.l.b16 %v613
      %v1991 = vunpack.c.h.b16 %v613
      %v1992 = vunpack.c.l.b16 %v614
      %v1993 = vunpack.c.h.b16 %v614
      %v1994 = vunpack.c.l.b16 %v615
      %v1995 = vunpack.c.h.b16 %v615
      %v1996 = vunpack.c.l.b16 %v616
      %v1997 = vunpack.c.h.b16 %v616
      %v1998 = vunpack.c.l.b16 %v617
      %v1999 = vunpack.c.h.b16 %v617
      %v2000 = vunpack.c.l.b16 %v618
      %v2001 = vunpack.c.h.b16 %v618
      %v2002 = vunpack.c.l.b16 %v619
      %v2003 = vunpack.c.h.b16 %v619
      %v2004 = vunpack.c.l.b16 %v620
      %v2005 = vunpack.c.h.b16 %v620
      %v2006 = vunpack.c.l.b16 %v621
      %v2007 = vunpack.c.h.b16 %v621
      %v2008 = vunpack.c.l.b16 %v622
      %v2009 = vunpack.c.h.b16 %v622
      %v2010 = vunpack.c.l.b16 %v623
      %v2011 = vunpack.c.h.b16 %v623
      %v2012 = vunpack.c.l.b16 %v624
      %v2013 = vunpack.c.h.b16 %v624
      %v2014 = vunpack.c.l.b16 %v625
      %v2015 = vunpack.c.h.b16 %v625
      %v2016 = vunpack.c.l.b16 %v626
      %v2017 = vunpack.c.h.b16 %v626
      %v2018 = vunpack.c.l.b16 %v627
      %v2019 = vunpack.c.h.b16 %v627
      %v2020 = vunpack.c.l.b16 %v628
      %v2021 = vunpack.c.h.b16 %v628
      %v2022 = vunpack.c.l.b16 %v629
      %v2023 = vunpack.c.h.b16 %v629
      %v2024 = vunpack.c.l.b16 %v630
      %v2025 = vunpack.c.h.b16 %v630
      %v2026 = vunpack.c.l.b16 %v631
      %v2027 = vunpack.c.h.b16 %v631
      %v2028 = vunpack.c.l.b16 %v632
      %v2029 = vunpack.c.h.b16 %v632
      %v2030 = vunpack.c.l.b16 %v633
      %v2031 = vunpack.c.h.b16 %v633
      %v2032 = vunpack.c.l.b16 %v634
      %v2033 = vunpack.c.h.b16 %v634
      %v2034 = vunpack.c.l.b16 %v635
      %v2035 = vunpack.c.h.b16 %v635
      %v2036 = vunpack.c.l.b16 %v636
      %v2037 = vunpack.c.h.b16 %v636
      %v2038 = vunpack.c.l.b16 %v637
      %v2039 = vunpack.c.h.b16 %v637
      %v2040 = vunpack.c.l.b16 %v638
      %v2041 = vunpack.c.h.b16 %v638
      %v2042 = vunpack.c.l.b16 %v639
      %v2043 = vunpack.c.h.b16 %v639
      %v2044 = vunpack.c.l.b16 %v640
      %v2045 = vunpack.c.h.b16 %v640
      %v2046 = vunpack.c.l.b16 %v641
      %v2047 = vunpack.c.h.b16 %v641
      %v2048 = vunpack.c.l.b16 %v642
      %v2049 = vunpack.c.h.b16 %v642
      %v2050 = vunpack.c.l.b16 %v643
      %v2051 = vunpack.c.h.b16 %v643
      %v2052 = vunpack.c.l.b16 %v644
      %v2053 = vunpack.c.h.b16 %v644
      %v2054 = vunpack.c.l.b16 %v645
      %v2055 = vunpack.c.h.b16 %v645
      %v2056 = vunpack.c.l.b16 %v646
      %v2057 = vunpack.c.h.b16 %v646
      %v2058 = vunpack.c.l.b16 %v647
      %v2059 = vunpack.c.h.b16 %v647
      %v2060 = vunpack.c.l.b16 %v648
      %v2061 = vunpack.c.h.b16 %v648
      %v2062 = vunpack.c.l.b16 %v649
      %v2063 = vunpack.c.h.b16 %v649
      %v2064 = vunpack.c.l.b16 %v650
      %v2065 = vunpack.c.h.b16 %v650
      %v2066 = vunpack.c.l.b16 %v651
      %v2067 = vunpack.c.h.b16 %v651
      %v2068 = vunpack.c.l.b16 %v652
      %v2069 = vunpack.c.h.b16 %v652
      %v2070 = vunpack.c.l.b16 %v653
      %v2071 = vunpack.c.h.b16 %v653
      %v2072 = vunpack.c.l.b16 %v654
      %v2073 = vunpack.c.h.b16 %v654
      %v2074 = vunpack.c.l.b16 %v655
      %v2075 = vunpack.c.h.b16 %v655
      %v2076 = vunpack.c.l.b16 %v656
      %v2077 = vunpack.c.h.b16 %v656
      %v2078 = vunpack.c.l.b16 %v657
      %v2079 = vunpack.c.h.b16 %v657
      %v2080 = vunpack.c.l.b16 %v658
      %v2081 = vunpack.c.h.b16 %v658
      %v2082 = vunpack.c.l.b16 %v659
      %v2083 = vunpack.c.h.b16 %v659
      %v2084 = vunpack.c.l.b16 %v660
      %v2085 = vunpack.c.h.b16 %v660
      %v2086 = vunpack.c.l.b16 %v661
      %v2087 = vunpack.c.h.b16 %v661
      %v2088 = vunpack.c.l.b16 %v662
      %v2089 = vunpack.c.h.b16 %v662
      %v2090 = vunpack.c.l.b16 %v663
      %v2091 = vunpack.c.h.b16 %v663
      %v2092 = vunpack.c.l.b16 %v664
      %v2093 = vunpack.c.h.b16 %v664
      %v2094 = vunpack.c.l.b16 %v665
      %v2095 = vunpack.c.h.b16 %v665
      %v2096 = vunpack.c.l.b16 %v666
      %v2097 = vunpack.c.h.b16 %v666
      %v2098 = vunpack.c.l.b16 %v667
      %v2099 = vunpack.c.h.b16 %v667
      %v2100 = vunpack.c.l.b16 %v668
      %v2101 = vunpack.c.h.b16 %v668
      %v2102 = vunpack.c.l.b16 %v669
      %v2103 = vunpack.c.h.b16 %v669
      %v2104 = vunpack.c.l.b16 %v670
      %v2105 = vunpack.c.h.b16 %v670
      %v2106 = vunpack.c.l.b16 %v671
      %v2107 = vunpack.c.h.b16 %v671
      %v2108 = vunpack.c.l.b16 %v672
      %v2109 = vunpack.c.h.b16 %v672
      %v2110 = vunpack.c.l.b16 %v673
      %v2111 = vunpack.c.h.b16 %v673
      %v2112 = vunpack.c.l.b16 %v674
      %v2113 = vunpack.c.h.b16 %v674
      %v2114 = vunpack.c.l.b16 %v675
      %v2115 = vunpack.c.h.b16 %v675
      %v2116 = vunpack.c.l.b16 %v676
      %v2117 = vunpack.c.h.b16 %v676
      %v2118 = vunpack.c.l.b16 %v677
      %v2119 = vunpack.c.h.b16 %v677
      %v2120 = vunpack.c.l.b16 %v678
      %v2121 = vunpack.c.h.b16 %v678
      %v2122 = vunpack.c.l.b16 %v679
      %v2123 = vunpack.c.h.b16 %v679
      %v2124 = vunpack.c.l.b16 %v680
      %v2125 = vunpack.c.h.b16 %v680
      %v2126 = vunpack.c.l.b16 %v681
      %v2127 = vunpack.c.h.b16 %v681
      %v2128 = vunpack.c.l.b16 %v682
      %v2129 = vunpack.c.h.b16 %v682
      %v2130 = vunpack.c.l.b16 %v683
      %v2131 = vunpack.c.h.b16 %v683
      %v2132 = vunpack.c.l.b16 %v684
      %v2133 = vunpack.c.h.b16 %v684
      %v2134 = vunpack.c.l.b16 %v685
      %v2135 = vunpack.c.h.b16 %v685
      %v2136 = vunpack.c.l.b16 %v686
      %v2137 = vunpack.c.h.b16 %v686
      %v2138 = vunpack.c.l.b16 %v687
      %v2139 = vunpack.c.h.b16 %v687
      %v2140 = vunpack.c.l.b16 %v688
      %v2141 = vunpack.c.h.b16 %v688
      %v2142 = vunpack.c.l.b16 %v689
      %v2143 = vunpack.c.h.b16 %v689
      %v2144 = vunpack.c.l.b16 %v690
      %v2145 = vunpack.c.h.b16 %v690
      %v2146 = vunpack.c.l.b16 %v691
      %v2147 = vunpack.c.h.b16 %v691
      %v2148 = vpack.c.b16 %v1256, %v1252
      %v2149 = vpack.c.b16 %v1257, %v1253
      %v2150 = vpack.c.b16 %v1258, %v1254
      %v2151 = vpack.c.b16 %v1259, %v1255
      %v2152 = vpack.c.b16 %v1264, %v1260
      %v2153 = vpack.c.b16 %v1265, %v1261
      %v2154 = vpack.c.b16 %v1266, %v1262
      %v2155 = vpack.c.b16 %v1267, %v1263
      %v2156 = vpack.c.b16 %v1272, %v1268
      %v2157 = vpack.c.b16 %v1273, %v1269
      %v2158 = vpack.c.b16 %v1274, %v1270
      %v2159 = vpack.c.b16 %v1275, %v1271
      %v2160 = vpack.c.b16 %v1280, %v1276
      %v2161 = vpack.c.b16 %v1281, %v1277
      %v2162 = vpack.c.b16 %v1282, %v1278
      %v2163 = vpack.c.b16 %v1283, %v1279
      %v2164 = vpack.c.b16 %v1288, %v1284
      %v2165 = vpack.c.b16 %v1289, %v1285
      %v2166 = vpack.c.b16 %v1290, %v1286
      %v2167 = vpack.c.b16 %v1291, %v1287
      %v2168 = vpack.c.b16 %v1296, %v1292
      %v2169 = vpack.c.b16 %v1297, %v1293
      %v2170 = vpack.c.b16 %v1298, %v1294
      %v2171 = vpack.c.b16 %v1299, %v1295
      %v2172 = vpack.c.b16 %v1304, %v1300
      %v2173 = vpack.c.b16 %v1305, %v1301
      %v2174 = vpack.c.b16 %v1306, %v1302
      %v2175 = vpack.c.b16 %v1307, %v1303
      %v2176 = vpack.c.b16 %v1312, %v1308
      %v2177 = vpack.c.b16 %v1313, %v1309
      %v2178 = vpack.c.b16 %v1314, %v1310
      %v2179 = vpack.c.b16 %v1315, %v1311
      %v2180 = vpack.c.b16 %v1320, %v1316
      %v2181 = vpack.c.b16 %v1321, %v1317
      %v2182 = vpack.c.b16 %v1322, %v1318
      %v2183 = vpack.c.b16 %v1323, %v1319
      %v2184 = vpack.c.b16 %v1328, %v1324
      %v2185 = vpack.c.b16 %v1329, %v1325
      %v2186 = vpack.c.b16 %v1330, %v1326
      %v2187 = vpack.c.b16 %v1331, %v1327
      %v2188 = vpack.c.b16 %v1336, %v1332
      %v2189 = vpack.c.b16 %v1337, %v1333
      %v2190 = vpack.c.b16 %v1338, %v1334
      %v2191 = vpack.c.b16 %v1339, %v1335
      %v2192 = vpack.c.b16 %v1344, %v1340
      %v2193 = vpack.c.b16 %v1345, %v1341
      %v2194 = vpack.c.b16 %v1346, %v1342
      %v2195 = vpack.c.b16 %v1347, %v1343
      %v2196 = vpack.c.b16 %v1352, %v1348
      %v2197 = vpack.c.b16 %v1353, %v1349
      %v2198 = vpack.c.b16 %v1354, %v1350
      %v2199 = vpack.c.b16 %v1355, %v1351
      %v2200 = vpack.c.b16 %v1360, %v1356
      %v2201 = vpack.c.b16 %v1361, %v1357
      %v2202 = vpack.c.b16 %v1362, %v1358
      %v2203 = vpack.c.b16 %v1363, %v1359
      %v2204 = vpack.c.b16 %v1368, %v1364
      %v2205 = vpack.c.b16 %v1369, %v1365
      %v2206 = vpack.c.b16 %v1370, %v1366
      %v2207 = vpack.c.b16 %v1371, %v1367
      %v2208 = vpack.c.b16 %v1376, %v1372
      %v2209 = vpack.c.b16 %v1377, %v1373
      %v2210 = vpack.c.b16 %v1378, %v1374
      %v2211 = vpack.c.b16 %v1379, %v1375
      %v2212 = vpack.c.b16 %v1384, %v1380
      %v2213 = vpack.c.b16 %v1385, %v1381
      %v2214 = vpack.c.b16 %v1386, %v1382
      %v2215 = vpack.c.b16 %v1387, %v1383
      %v2216 = vpack.c.b16 %v1392, %v1388
      %v2217 = vpack.c.b16 %v1393, %v1389
      %v2218 = vpack.c.b16 %v1394, %v1390
      %v2219 = vpack.c.b16 %v1395, %v1391
      %v2220 = vpack.c.b16 %v1400, %v1396
      %v2221 = vpack.c.b16 %v1401, %v1397
      %v2222 = vpack.c.b16 %v1402, %v1398
      %v2223 = vpack.c.b16 %v1403, %v1399
      %v2224 = vpack.c.b16 %v1408, %v1404
      %v2225 = vpack.c.b16 %v1409, %v1405
      %v2226 = vpack.c.b16 %v1410, %v1406
      %v2227 = vpack.c.b16 %v1411, %v1407
      %v2228 = vpack.c.b16 %v1416, %v1412
      %v2229 = vpack.c.b16 %v1417, %v1413
      %v2230 = vpack.c.b16 %v1418, %v1414
      %v2231 = vpack.c.b16 %v1419, %v1415
      %v2232 = vpack.c.b16 %v1424, %v1420
      %v2233 = vpack.c.b16 %v1425, %v1421
      %v2234 = vpack.c.b16 %v1426, %v1422
      %v2235 = vpack.c.b16 %v1427, %v1423
      %v2236 = vpack.c.b16 %v1432, %v1428
      %v2237 = vpack.c.b16 %v1433, %v1429
      %v2238 = vpack.c.b16 %v1434, %v1430
      %v2239 = vpack.c.b16 %v1435, %v1431
      %v2240 = vpack.c.b16 %v1440, %v1436
      %v2241 = vpack.c.b16 %v1441, %v1437
      %v2242 = vpack.c.b16 %v1442, %v1438
      %v2243 = vpack.c.b16 %v1443, %v1439
      %v2244 = vpack.c.b16 %v1448, %v1444
      %v2245 = vpack.c.b16 %v1449, %v1445
      %v2246 = vpack.c.b16 %v1450, %v1446
      %v2247 = vpack.c.b16 %v1451, %v1447
      %v2248 = vpack.c.b16 %v1456, %v1452
      %v2249 = vpack.c.b16 %v1457, %v1453
      %v2250 = vpack.c.b16 %v1458, %v1454
      %v2251 = vpack.c.b16 %v1459, %v1455
      %v2252 = vpack.c.b16 %v1464, %v1460
      %v2253 = vpack.c.b16 %v1465, %v1461
      %v2254 = vpack.c.b16 %v1466, %v1462
      %v2255 = vpack.c.b16 %v1467, %v1463
      %v2256 = vpack.c.b16 %v1472, %v1468
      %v2257 = vpack.c.b16 %v1473, %v1469
      %v2258 = vpack.c.b16 %v1474, %v1470
      %v2259 = vpack.c.b16 %v1475, %v1471
      %v2260 = vpack.c.b16 %v1480, %v1476
      %v2261 = vpack.c.b16 %v1481, %v1477
      %v2262 = vpack.c.b16 %v1482, %v1478
      %v2263 = vpack.c.b16 %v1483, %v1479
      %v2264 = vpack.c.b16 %v1488, %v1484
      %v2265 = vpack.c.b16 %v1489, %v1485
      %v2266 = vpack.c.b16 %v1490, %v1486
      %v2267 = vpack.c.b16 %v1491, %v1487
      %v2268 = vpack.c.b16 %v1496, %v1492
      %v2269 = vpack.c.b16 %v1497, %v1493
      %v2270 = vpack.c.b16 %v1498, %v1494
      %v2271 = vpack.c.b16 %v1499, %v1495
      %v2272 = vpack.c.b16 %v1504, %v1500
      %v2273 = vpack.c.b16 %v1505, %v1501
      %v2274 = vpack.c.b16 %v1506, %v1502
      %v2275 = vpack.c.b16 %v1507, %v1503
      %v2276 = vpack.c.b16 %v1512, %v1508
      %v2277 = vpack.c.b16 %v1513, %v1509
      %v2278 = vpack.c.b16 %v1514, %v1510
      %v2279 = vpack.c.b16 %v1515, %v1511
      %v2280 = vpack.c.b16 %v1520, %v1516
      %v2281 = vpack.c.b16 %v1521, %v1517
      %v2282 = vpack.c.b16 %v1522, %v1518
      %v2283 = vpack.c.b16 %v1523, %v1519
      %v2284 = vpack.c.b16 %v1528, %v1524
      %v2285 = vpack.c.b16 %v1529, %v1525
      %v2286 = vpack.c.b16 %v1530, %v1526
      %v2287 = vpack.c.b16 %v1531, %v1527
      %v2288 = vpack.c.b16 %v1536, %v1532
      %v2289 = vpack.c.b16 %v1537, %v1533
      %v2290 = vpack.c.b16 %v1538, %v1534
      %v2291 = vpack.c.b16 %v1539, %v1535
      %v2292 = vpack.c.b16 %v1544, %v1540
      %v2293 = vpack.c.b16 %v1545, %v1541
      %v2294 = vpack.c.b16 %v1546, %v1542
      %v2295 = vpack.c.b16 %v1547, %v1543
      %v2296 = vpack.c.b16 %v1552, %v1548
      %v2297 = vpack.c.b16 %v1553, %v1549
      %v2298 = vpack.c.b16 %v1554, %v1550
      %v2299 = vpack.c.b16 %v1555, %v1551
      %v2300 = vpack.c.b16 %v1560, %v1556
      %v2301 = vpack.c.b16 %v1561, %v1557
      %v2302 = vpack.c.b16 %v1562, %v1558
      %v2303 = vpack.c.b16 %v1563, %v1559
      %v2304 = vpack.c.b16 %v1568, %v1564
      %v2305 = vpack.c.b16 %v1569, %v1565
      %v2306 = vpack.c.b16 %v1570, %v1566
      %v2307 = vpack.c.b16 %v1571, %v1567
      %v2308 = vpack.c.b16 %v1576, %v1572
      %v2309 = vpack.c.b16 %v1577, %v1573
      %v2310 = vpack.c.b16 %v1578, %v1574
      %v2311 = vpack.c.b16 %v1579, %v1575
      %v2312 = vpack.c.b16 %v1584, %v1580
      %v2313 = vpack.c.b16 %v1585, %v1581
      %v2314 = vpack.c.b16 %v1586, %v1582
      %v2315 = vpack.c.b16 %v1587, %v1583
      %v2316 = vpack.c.b16 %v1592, %v1588
      %v2317 = vpack.c.b16 %v1593, %v1589
      %v2318 = vpack.c.b16 %v1594, %v1590
      %v2319 = vpack.c.b16 %v1595, %v1591
      %v2320 = vpack.c.b16 %v1600, %v1596
      %v2321 = vpack.c.b16 %v1601, %v1597
      %v2322 = vpack.c.b16 %v1602, %v1598
      %v2323 = vpack.c.b16 %v1603, %v1599
      %v2324 = vpack.c.b16 %v1608, %v1604
      %v2325 = vpack.c.b16 %v1609, %v1605
      %v2326 = vpack.c.b16 %v1610, %v1606
      %v2327 = vpack.c.b16 %v1611, %v1607
      %v2328 = vpack.c.b16 %v1616, %v1612
      %v2329 = vpack.c.b16 %v1617, %v1613
      %v2330 = vpack.c.b16 %v1618, %v1614
      %v2331 = vpack.c.b16 %v1619, %v1615
      %v2332 = vpack.c.b16 %v1624, %v1620
      %v2333 = vpack.c.b16 %v1625, %v1621
      %v2334 = vpack.c.b16 %v1626, %v1622
      %v2335 = vpack.c.b16 %v1627, %v1623
      %v2336 = vpack.c.b16 %v1632, %v1628
      %v2337 = vpack.c.b16 %v1633, %v1629
      %v2338 = vpack.c.b16 %v1634, %v1630
      %v2339 = vpack.c.b16 %v1635, %v1631
      %v2340 = vpack.c.b16 %v1640, %v1636
      %v2341 = vpack.c.b16 %v1641, %v1637
      %v2342 = vpack.c.b16 %v1642, %v1638
      %v2343 = vpack.c.b16 %v1643, %v1639
      %v2344 = vpack.c.b16 %v1648, %v1644
      %v2345 = vpack.c.b16 %v1649, %v1645
      %v2346 = vpack.c.b16 %v1650, %v1646
      %v2347 = vpack.c.b16 %v1651, %v1647
      %v2348 = vpack.c.b16 %v1656, %v1652
      %v2349 = vpack.c.b16 %v1657, %v1653
      %v2350 = vpack.c.b16 %v1658, %v1654
      %v2351 = vpack.c.b16 %v1659, %v1655
      %v2352 = vpack.c.b16 %v1664, %v1660
      %v2353 = vpack.c.b16 %v1665, %v1661
      %v2354 = vpack.c.b16 %v1666, %v1662
      %v2355 = vpack.c.b16 %v1667, %v1663
      %v2356 = vpack.c.b16 %v1672, %v1668
      %v2357 = vpack.c.b16 %v1673, %v1669
      %v2358 = vpack.c.b16 %v1674, %v1670
      %v2359 = vpack.c.b16 %v1675, %v1671
      %v2360 = vpack.c.b16 %v1680, %v1676
      %v2361 = vpack.c.b16 %v1681, %v1677
      %v2362 = vpack.c.b16 %v1682, %v1678
      %v2363 = vpack.c.b16 %v1683, %v1679
      %v2364 = vpack.c.b16 %v1688, %v1684
      %v2365 = vpack.c.b16 %v1689, %v1685
      %v2366 = vpack.c.b16 %v1690, %v1686
      %v2367 = vpack.c.b16 %v1691, %v1687
      %v2368 = vpack.c.b16 %v1696, %v1692
      %v2369 = vpack.c.b16 %v1697, %v1693
      %v2370 = vpack.c.b16 %v1698, %v1694
      %v2371 = vpack.c.b16 %v1699, %v1695
      %v2372 = vpack.c.b16 %v1704, %v1700
      %v2373 = vpack.c.b16 %v1705, %v1701
      %v2374 = vpack.c.b16 %v1706, %v1702
      %v2375 = vpack.c.b16 %v1707, %v1703
      %v2376 = vpack.c.b16 %v1712, %v1708
      %v2377 = vpack.c.b16 %v1713, %v1709
      %v2378 = vpack.c.b16 %v1714, %v1710
      %v2379 = vpack.c.b16 %v1715, %v1711
      %v2380 = vpack.c.b16 %v1720, %v1716
      %v2381 = vpack.c.b16 %v1721, %v1717
      %v2382 = vpack.c.b16 %v1722, %v1718
      %v2383 = vpack.c.b16 %v1723, %v1719
      %v2384 = vpack.c.b16 %v1728, %v1724
      %v2385 = vpack.c.b16 %v1729, %v1725
      %v2386 = vpack.c.b16 %v1730, %v1726
      %v2387 = vpack.c.b16 %v1731, %v1727
      %v2388 = vpack.c.b16 %v1736, %v1732
      %v2389 = vpack.c.b16 %v1737, %v1733
      %v2390 = vpack.c.b16 %v1738, %v1734
      %v2391 = vpack.c.b16 %v1739, %v1735
      %v2392 = vpack.c.b16 %v1744, %v1740
      %v2393 = vpack.c.b16 %v1745, %v1741
      %v2394 = vpack.c.b16 %v1746, %v1742
      %v2395 = vpack.c.b16 %v1747, %v1743
      %v2396 = vpack.c.b16 %v1752, %v1748
      %v2397 = vpack.c.b16 %v1753, %v1749
      %v2398 = vpack.c.b16 %v1754, %v1750
      %v2399 = vpack.c.b16 %v1755, %v1751
      %v2400 = vpack.c.b16 %v1760, %v1756
      %v2401 = vpack.c.b16 %v1761, %v1757
      %v2402 = vpack.c.b16 %v1762, %v1758
      %v2403 = vpack.c.b16 %v1763, %v1759
      %v2404 = vpack.c.b16 %v1768, %v1764
      %v2405 = vpack.c.b16 %v1769, %v1765
      %v2406 = vpack.c.b16 %v1770, %v1766
      %v2407 = vpack.c.b16 %v1771, %v1767
      %v2408 = vpack.c.b16 %v1776, %v1772
      %v2409 = vpack.c.b16 %v1777, %v1773
      %v2410 = vpack.c.b16 %v1778, %v1774
      %v2411 = vpack.c.b16 %v1779, %v1775
      %v2412 = vpack.c.b16 %v1784, %v1780
      %v2413 = vpack.c.b16 %v1785, %v1781
      %v2414 = vpack.c.b16 %v1786, %v1782
      %v2415 = vpack.c.b16 %v1787, %v1783
      %v2416 = vpack.c.b16 %v1792, %v1788
      %v2417 = vpack.c.b16 %v1793, %v1789
      %v2418 = vpack.c.b16 %v1794, %v1790
      %v2419 = vpack.c.b16 %v1795, %v1791
      %v2420 = vpack.c.b16 %v1800, %v1796
      %v2421 = vpack.c.b16 %v1801, %v1797
      %v2422 = vpack.c.b16 %v1802, %v1798
      %v2423 = vpack.c.b16 %v1803, %v1799
      %v2424 = vpack.c.b16 %v1808, %v1804
      %v2425 = vpack.c.b16 %v1809, %v1805
      %v2426 = vpack.c.b16 %v1810, %v1806
      %v2427 = vpack.c.b16 %v1811, %v1807
      %v2428 = vpack.c.b16 %v1816, %v1812
      %v2429 = vpack.c.b16 %v1817, %v1813
      %v2430 = vpack.c.b16 %v1818, %v1814
      %v2431 = vpack.c.b16 %v1819, %v1815
      %v2432 = vpack.c.b16 %v1824, %v1820
      %v2433 = vpack.c.b16 %v1825, %v1821
      %v2434 = vpack.c.b16 %v1826, %v1822
      %v2435 = vpack.c.b16 %v1827, %v1823
      %v2436 = vpack.c.b16 %v1832, %v1828
      %v2437 = vpack.c.b16 %v1833, %v1829
      %v2438 = vpack.c.b16 %v1834, %v1830
      %v2439 = vpack.c.b16 %v1835, %v1831
      %v2440 = vpack.c.b16 %v1840, %v1836
      %v2441 = vpack.c.b16 %v1841, %v1837
      %v2442 = vpack.c.b16 %v1842, %v1838
      %v2443 = vpack.c.b16 %v1843, %v1839
      %v2444 = vpack.c.b16 %v1848, %v1844
      %v2445 = vpack.c.b16 %v1849, %v1845
      %v2446 = vpack.c.b16 %v1850, %v1846
      %v2447 = vpack.c.b16 %v1851, %v1847
      %v2448 = vpack.c.b16 %v1856, %v1852
      %v2449 = vpack.c.b16 %v1857, %v1853
      %v2450 = vpack.c.b16 %v1858, %v1854
      %v2451 = vpack.c.b16 %v1859, %v1855
      %v2452 = vpack.c.b16 %v1864, %v1860
      %v2453 = vpack.c.b16 %v1865, %v1861
      %v2454 = vpack.c.b16 %v1866, %v1862
      %v2455 = vpack.c.b16 %v1867, %v1863
      %v2456 = vpack.c.b16 %v1872, %v1868
      %v2457 = vpack.c.b16 %v1873, %v1869
      %v2458 = vpack.c.b16 %v1874, %v1870
      %v2459 = vpack.c.b16 %v1875, %v1871
      %v2460 = vpack.c.b16 %v1880, %v1876
      %v2461 = vpack.c.b16 %v1881, %v1877
      %v2462 = vpack.c.b16 %v1882, %v1878
      %v2463 = vpack.c.b16 %v1883, %v1879
      %v2464 = vpack.c.b16 %v1888, %v1884
      %v2465 = vpack.c.b16 %v1889, %v1885
      %v2466 = vpack.c.b16 %v1890, %v1886
      %v2467 = vpack.c.b16 %v1891, %v1887
      %v2468 = vpack.c.b16 %v1896, %v1892
      %v2469 = vpack.c.b16 %v1897, %v1893
      %v2470 = vpack.c.b16 %v1898, %v1894
      %v2471 = vpack.c.b16 %v1899, %v1895
      %v2472 = vpack.c.b16 %v1904, %v1900
      %v2473 = vpack.c.b16 %v1905, %v1901
      %v2474 = vpack.c.b16 %v1906, %v1902
      %v2475 = vpack.c.b16 %v1907, %v1903
      %v2476 = vpack.c.b16 %v1912, %v1908
      %v2477 = vpack.c.b16 %v1913, %v1909
      %v2478 = vpack.c.b16 %v1914, %v1910
      %v2479 = vpack.c.b16 %v1915, %v1911
      %v2480 = vpack.c.b16 %v1920, %v1916
      %v2481 = vpack.c.b16 %v1921, %v1917
      %v2482 = vpack.c.b16 %v1922, %v1918
      %v2483 = vpack.c.b16 %v1923, %v1919
      %v2484 = vpack.c.b16 %v1928, %v1924
      %v2485 = vpack.c.b16 %v1929, %v1925
      %v2486 = vpack.c.b16 %v1930, %v1926
      %v2487 = vpack.c.b16 %v1931, %v1927
      %v2488 = vpack.c.b16 %v1936, %v1932
      %v2489 = vpack.c.b16 %v1937, %v1933
      %v2490 = vpack.c.b16 %v1938, %v1934
      %v2491 = vpack.c.b16 %v1939, %v1935
      %v2492 = vpack.c.b16 %v1944, %v1940
      %v2493 = vpack.c.b16 %v1945, %v1941
      %v2494 = vpack.c.b16 %v1946, %v1942
      %v2495 = vpack.c.b16 %v1947, %v1943
      %v2496 = vpack.c.b16 %v1952, %v1948
      %v2497 = vpack.c.b16 %v1953, %v1949
      %v2498 = vpack.c.b16 %v1954, %v1950
      %v2499 = vpack.c.b16 %v1955, %v1951
      %v2500 = vpack.c.b16 %v1960, %v1956
      %v2501 = vpack.c.b16 %v1961, %v1957
      %v2502 = vpack.c.b16 %v1962, %v1958
      %v2503 = vpack.c.b16 %v1963, %v1959
      %v2504 = vpack.c.b16 %v1968, %v1964
      %v2505 = vpack.c.b16 %v1969, %v1965
      %v2506 = vpack.c.b16 %v1970, %v1966
      %v2507 = vpack.c.b16 %v1971, %v1967
      %v2508 = vpack.c.b16 %v1976, %v1972
      %v2509 = vpack.c.b16 %v1977, %v1973
      %v2510 = vpack.c.b16 %v1978, %v1974
      %v2511 = vpack.c.b16 %v1979, %v1975
      %v2512 = vpack.c.b16 %v1984, %v1980
      %v2513 = vpack.c.b16 %v1985, %v1981
      %v2514 = vpack.c.b16 %v1986, %v1982
      %v2515 = vpack.c.b16 %v1987, %v1983
      %v2516 = vpack.c.b16 %v1992, %v1988
      %v2517 = vpack.c.b16 %v1993, %v1989
      %v2518 = vpack.c.b16 %v1994, %v1990
      %v2519 = vpack.c.b16 %v1995, %v1991
      %v2520 = vpack.c.b16 %v2000, %v1996
      %v2521 = vpack.c.b16 %v2001, %v1997
      %v2522 = vpack.c.b16 %v2002, %v1998
      %v2523 = vpack.c.b16 %v2003, %v1999
      %v2524 = vpack.c.b16 %v2008, %v2004
      %v2525 = vpack.c.b16 %v2009, %v2005
      %v2526 = vpack.c.b16 %v2010, %v2006
      %v2527 = vpack.c.b16 %v2011, %v2007
      %v2528 = vpack.c.b16 %v2016, %v2012
      %v2529 = vpack.c.b16 %v2017, %v2013
      %v2530 = vpack.c.b16 %v2018, %v2014
      %v2531 = vpack.c.b16 %v2019, %v2015
      %v2532 = vpack.c.b16 %v2024, %v2020
      %v2533 = vpack.c.b16 %v2025, %v2021
      %v2534 = vpack.c.b16 %v2026, %v2022
      %v2535 = vpack.c.b16 %v2027, %v2023
      %v2536 = vpack.c.b16 %v2032, %v2028
      %v2537 = vpack.c.b16 %v2033, %v2029
      %v2538 = vpack.c.b16 %v2034, %v2030
      %v2539 = vpack.c.b16 %v2035, %v2031
      %v2540 = vpack.c.b16 %v2040, %v2036
      %v2541 = vpack.c.b16 %v2041, %v2037
      %v2542 = vpack.c.b16 %v2042, %v2038
      %v2543 = vpack.c.b16 %v2043, %v2039
      %v2544 = vpack.c.b16 %v2048, %v2044
      %v2545 = vpack.c.b16 %v2049, %v2045
      %v2546 = vpack.c.b16 %v2050, %v2046
      %v2547 = vpack.c.b16 %v2051, %v2047
      %v2548 = vpack.c.b16 %v2056, %v2052
      %v2549 = vpack.c.b16 %v2057, %v2053
      %v2550 = vpack.c.b16 %v2058, %v2054
      %v2551 = vpack.c.b16 %v2059, %v2055
      %v2552 = vpack.c.b16 %v2064, %v2060
      %v2553 = vpack.c.b16 %v2065, %v2061
      %v2554 = vpack.c.b16 %v2066, %v2062
      %v2555 = vpack.c.b16 %v2067, %v2063
      %v2556 = vpack.c.b16 %v2072, %v2068
      %v2557 = vpack.c.b16 %v2073, %v2069
      %v2558 = vpack.c.b16 %v2074, %v2070
      %v2559 = vpack.c.b16 %v2075, %v2071
      %v2560 = vpack.c.b16 %v2080, %v2076
      %v2561 = vpack.c.b16 %v2081, %v2077
      %v2562 = vpack.c.b16 %v2082, %v2078
      %v2563 = vpack.c.b16 %v2083, %v2079
      %v2564 = vpack.c.b16 %v2088, %v2084
      %v2565 = vpack.c.b16 %v2089, %v2085
      %v2566 = vpack.c.b16 %v2090, %v2086
      %v2567 = vpack.c.b16 %v2091, %v2087
      %v2568 = vpack.c.b16 %v2096, %v2092
      %v2569 = vpack.c.b16 %v2097, %v2093
      %v2570 = vpack.c.b16 %v2098, %v2094
      %v2571 = vpack.c.b16 %v2099, %v2095
      %v2572 = vpack.c.b16 %v2104, %v2100
      %v2573 = vpack.c.b16 %v2105, %v2101
      %v2574 = vpack.c.b16 %v2106, %v2102
      %v2575 = vpack.c.b16 %v2107, %v2103
      %v2576 = vpack.c.b16 %v2112, %v2108
      %v2577 = vpack.c.b16 %v2113, %v2109
      %v2578 = vpack.c.b16 %v2114, %v2110
      %v2579 = vpack.c.b16 %v2115, %v2111
      %v2580 = vpack.c.b16 %v2120, %v2116
      %v2581 = vpack.c.b16 %v2121, %v2117
      %v2582 = vpack.c.b16 %v2122, %v2118
      %v2583 = vpack.c.b16 %v2123, %v2119
      %v2584 = vpack.c.b16 %v2128, %v2124
      %v2585 = vpack.c.b16 %v2129, %v2125
      %v2586 = vpack.c.b16 %v2130, %v2126
      %v2587 = vpack.c.b16 %v2131, %v2127
      %v2588 = vpack.c.b16 %v2136, %v2132
      %v2589 = vpack.c.b16 %v2137, %v2133
      %v2590 = vpack.c.b16 %v2138, %v2134
      %v2591 = vpack.c.b16 %v2139, %v2135
      %v2592 = vpack.c.b16 %v2144, %v2140
      %v2593 = vpack.c.b16 %v2145, %v2141
      %v2594 = vpack.c.b16 %v2146, %v2142
      %v2595 = vpack.c.b16 %v2147, %v2143
      %3044 = vmatprep.subr.bf16.mxu0 %v2149
      %3045 = vmatpush1.bf16.msra.mxu0 %v2148
      %3046 = vmatprep.subr.bf16.mxu0 %v2153
      %3047 = vmatpush1.bf16.msra.mxu0 %v2152
      %3048 = vmatprep.subr.bf16.mxu0 %v2157
      %3049 = vmatpush1.bf16.msra.mxu0 %v2156
      %3050 = vmatprep.subr.bf16.mxu0 %v2161
      %3051 = vmatpush1.bf16.msra.mxu0 %v2160
      %3052 = vmatprep.subr.bf16.mxu0 %v2165
      %3053 = vmatpush1.bf16.msra.mxu0 %v2164
      %3054 = vmatprep.subr.bf16.mxu0 %v2169
      %3055 = vmatpush1.bf16.msra.mxu0 %v2168
      %3056 = vmatprep.subr.bf16.mxu0 %v2173
      %3057 = vmatpush1.bf16.msra.mxu0 %v2172
      %3058 = vmatprep.subr.bf16.mxu0 %v2177
      %3059 = vmatpush1.bf16.msra.mxu0 %v2176
      %3060 = vmatprep.subr.bf16.mxu0 %v2181
      %3061 = vmatpush1.bf16.msra.mxu0 %v2180
      %3062 = vmatprep.subr.bf16.mxu0 %v2185
      %3063 = vmatpush1.bf16.msra.mxu0 %v2184
      %3064 = vmatprep.subr.bf16.mxu0 %v2189
      %3065 = vmatpush1.bf16.msra.mxu0 %v2188
      %3066 = vmatprep.subr.bf16.mxu0 %v2193
      %3067 = vmatpush1.bf16.msra.mxu0 %v2192
      %3068 = vmatprep.subr.bf16.mxu0 %v2197
      %3069 = vmatpush1.bf16.msra.mxu0 %v2196
      %3070 = vmatprep.subr.bf16.mxu0 %v2201
      %3071 = vmatpush1.bf16.msra.mxu0 %v2200
      %3072 = vmatprep.subr.bf16.mxu0 %v2205
      %3073 = vmatpush1.bf16.msra.mxu0 %v2204
      %3074 = vmatprep.subr.bf16.mxu0 %v2209
      %3075 = vmatpush1.bf16.msra.mxu0 %v2208
      %3076 = vmatprep.mubr.bf16.mxu0 %v731
      %3077 = vmatmul.mubr.bf16.gmra.mrb[0].mxu0 %v717
      %v3078 = vpop.f32.mrb[0].mxu0
      %v3079 = vadd.f32 0.0, %v3078
      %v3080 = vpop.f32.mrb[0].mxu0
      %v3081 = vadd.f32 0.0, %v3080
      %v3082 = vpop.f32.mrb[0].mxu0
      %v3083 = vpop.f32.mrb[0].mxu0
      %3084 = vdwg.mxu0
      %3085 = vmatprep.subr.bf16.mxu0 %v2213
      %3086 = vmatpush1.bf16.msra.mxu0 %v2212
      %3087 = vmatprep.subr.bf16.mxu0 %v2217
      %3088 = vmatpush1.bf16.msra.mxu0 %v2216
      %3089 = vmatprep.subr.bf16.mxu0 %v2221
      %3090 = vmatpush1.bf16.msra.mxu0 %v2220
      %3091 = vmatprep.subr.bf16.mxu0 %v2225
      %3092 = vmatpush1.bf16.msra.mxu0 %v2224
      %3093 = vmatprep.subr.bf16.mxu0 %v2229
      %3094 = vmatpush1.bf16.msra.mxu0 %v2228
      %3095 = vmatprep.subr.bf16.mxu0 %v2233
      %3096 = vmatpush1.bf16.msra.mxu0 %v2232
      %3097 = vmatprep.subr.bf16.mxu0 %v2237
      %3098 = vmatpush1.bf16.msra.mxu0 %v2236
      %3099 = vmatprep.subr.bf16.mxu0 %v2241
      %3100 = vmatpush1.bf16.msra.mxu0 %v2240
      %3101 = vmatprep.subr.bf16.mxu0 %v2245
      %3102 = vmatpush1.bf16.msra.mxu0 %v2244
      %3103 = vmatprep.subr.bf16.mxu0 %v2249
      %3104 = vmatpush1.bf16.msra.mxu0 %v2248
      %3105 = vmatprep.subr.bf16.mxu0 %v2253
      %3106 = vmatpush1.bf16.msra.mxu0 %v2252
      %3107 = vmatprep.subr.bf16.mxu0 %v2257
      %3108 = vmatpush1.bf16.msra.mxu0 %v2256
      %3109 = vmatprep.subr.bf16.mxu0 %v2261
      %3110 = vmatpush1.bf16.msra.mxu0 %v2260
      %3111 = vmatprep.subr.bf16.mxu0 %v2265
      %3112 = vmatpush1.bf16.msra.mxu0 %v2264
      %3113 = vmatprep.subr.bf16.mxu0 %v2269
      %3114 = vmatpush1.bf16.msra.mxu0 %v2268
      %3115 = vmatprep.subr.bf16.mxu0 %v2273
      %3116 = vmatpush1.bf16.msra.mxu0 %v2272
      %3117 = vmatprep.mubr.bf16.mxu0 %v741
      %3118 = vmatmul.mubr.bf16.gmra.mrb[0].mxu0 %v739
      %v3119 = vpop.f32.mrb[0].mxu0
      %v3120 = vadd.f32 %v3079, %v3119
      %v3121 = vpop.f32.mrb[0].mxu0
      %v3122 = vadd.f32 %v3081, %v3121
      %v3123 = vpop.f32.mrb[0].mxu0
      %v3124 = vpop.f32.mrb[0].mxu0
      %3125 = vdwg.mxu0
      %3126 = vmatprep.subr.bf16.mxu0 %v2277
      %3127 = vmatpush1.bf16.msra.mxu0 %v2276
      %3128 = vmatprep.subr.bf16.mxu0 %v2281
      %3129 = vmatpush1.bf16.msra.mxu0 %v2280
      %3130 = vmatprep.subr.bf16.mxu0 %v2285
      %3131 = vmatpush1.bf16.msra.mxu0 %v2284
      %3132 = vmatprep.subr.bf16.mxu0 %v2289
      %3133 = vmatpush1.bf16.msra.mxu0 %v2288
      %3134 = vmatprep.subr.bf16.mxu0 %v2293
      %3135 = vmatpush1.bf16.msra.mxu0 %v2292
      %3136 = vmatprep.subr.bf16.mxu0 %v2297
      %3137 = vmatpush1.bf16.msra.mxu0 %v2296
      %3138 = vmatprep.subr.bf16.mxu0 %v2301
      %3139 = vmatpush1.bf16.msra.mxu0 %v2300
      %3140 = vmatprep.subr.bf16.mxu0 %v2305
      %3141 = vmatpush1.bf16.msra.mxu0 %v2304
      %3142 = vmatprep.subr.bf16.mxu0 %v2309
      %3143 = vmatpush1.bf16.msra.mxu0 %v2308
      %3144 = vmatprep.subr.bf16.mxu0 %v2313
      %3145 = vmatpush1.bf16.msra.mxu0 %v2312
      %3146 = vmatprep.subr.bf16.mxu0 %v2317
      %3147 = vmatpush1.bf16.msra.mxu0 %v2316
      %3148 = vmatprep.subr.bf16.mxu0 %v2321
      %3149 = vmatpush1.bf16.msra.mxu0 %v2320
      %3150 = vmatprep.subr.bf16.mxu0 %v2325
      %3151 = vmatpush1.bf16.msra.mxu0 %v2324
      %3152 = vmatprep.subr.bf16.mxu0 %v2329
      %3153 = vmatpush1.bf16.msra.mxu0 %v2328
      %3154 = vmatprep.subr.bf16.mxu0 %v2333
      %3155 = vmatpush1.bf16.msra.mxu0 %v2332
      %3156 = vmatprep.subr.bf16.mxu0 %v2337
      %3157 = vmatpush1.bf16.msra.mxu0 %v2336
      %3158 = vmatprep.mubr.bf16.mxu0 %v738
      %3159 = vmatmul.mubr.bf16.gmra.mrb[0].mxu0 %v724
      %v3160 = vpop.f32.mrb[0].mxu0
      %v3161 = vadd.f32 %v3120, %v3160
      %v3162 = vpop.f32.mrb[0].mxu0
      %v3163 = vadd.f32 %v3122, %v3162
      %v3164 = vpop.f32.mrb[0].mxu0
      %v3165 = vpop.f32.mrb[0].mxu0
      %3166 = vdwg.mxu0
      %3167 = vmatprep.subr.bf16.mxu0 %v2341
      %3168 = vmatpush1.bf16.msra.mxu0 %v2340
      %3169 = vmatprep.subr.bf16.mxu0 %v2345
      %3170 = vmatpush1.bf16.msra.mxu0 %v2344
      %3171 = vmatprep.subr.bf16.mxu0 %v2349
      %3172 = vmatpush1.bf16.msra.mxu0 %v2348
      %3173 = vmatprep.subr.bf16.mxu0 %v2353
      %3174 = vmatpush1.bf16.msra.mxu0 %v2352
      %3175 = vmatprep.subr.bf16.mxu0 %v2357
      %3176 = vmatpush1.bf16.msra.mxu0 %v2356
      %3177 = vmatprep.subr.bf16.mxu0 %v2361
      %3178 = vmatpush1.bf16.msra.mxu0 %v2360
      %3179 = vmatprep.subr.bf16.mxu0 %v2365
      %3180 = vmatpush1.bf16.msra.mxu0 %v2364
      %3181 = vmatprep.subr.bf16.mxu0 %v2369
      %3182 = vmatpush1.bf16.msra.mxu0 %v2368
      %3183 = vmatprep.subr.bf16.mxu0 %v2373
      %3184 = vmatpush1.bf16.msra.mxu0 %v2372
      %3185 = vmatprep.subr.bf16.mxu0 %v2377
      %3186 = vmatpush1.bf16.msra.mxu0 %v2376
      %3187 = vmatprep.subr.bf16.mxu0 %v2381
      %3188 = vmatpush1.bf16.msra.mxu0 %v2380
      %3189 = vmatprep.subr.bf16.mxu0 %v2385
      %3190 = vmatpush1.bf16.msra.mxu0 %v2384
      %3191 = vmatprep.subr.bf16.mxu0 %v2389
      %3192 = vmatpush1.bf16.msra.mxu0 %v2388
      %3193 = vmatprep.subr.bf16.mxu0 %v2393
      %3194 = vmatpush1.bf16.msra.mxu0 %v2392
      %3195 = vmatprep.subr.bf16.mxu0 %v2397
      %3196 = vmatpush1.bf16.msra.mxu0 %v2396
      %3197 = vmatprep.subr.bf16.mxu0 %v2401
      %3198 = vmatpush1.bf16.msra.mxu0 %v2400
      %3199 = vmatprep.mubr.bf16.mxu0 %v742
      %3200 = vmatmul.mubr.bf16.gmra.mrb[0].mxu0 %v740
      %v3201 = vpop.f32.mrb[0].mxu0
      %v3202 = vadd.f32 %v3161, %v3201
      %v3203 = vpop.f32.mrb[0].mxu0
      %v3204 = vadd.f32 %v3163, %v3203
      %v3205 = vpop.f32.mrb[0].mxu0
      %v3206 = vpop.f32.mrb[0].mxu0
      %3207 = vdwg.mxu0
      %3208 = vmatprep.subr.bf16.mxu0 %v2405
      %3209 = vmatpush1.bf16.msra.mxu0 %v2404
      %3210 = vmatprep.subr.bf16.mxu0 %v2409
      %3211 = vmatpush1.bf16.msra.mxu0 %v2408
      %3212 = vmatprep.subr.bf16.mxu0 %v2413
      %3213 = vmatpush1.bf16.msra.mxu0 %v2412
      %3214 = vmatprep.subr.bf16.mxu0 %v2417
      %3215 = vmatpush1.bf16.msra.mxu0 %v2416
      %3216 = vmatprep.subr.bf16.mxu0 %v2421
      %3217 = vmatpush1.bf16.msra.mxu0 %v2420
      %3218 = vmatprep.subr.bf16.mxu0 %v2425
      %3219 = vmatpush1.bf16.msra.mxu0 %v2424
      %3220 = vmatprep.subr.bf16.mxu0 %v2429
      %3221 = vmatpush1.bf16.msra.mxu0 %v2428
      %3222 = vmatprep.subr.bf16.mxu0 %v2433
      %3223 = vmatpush1.bf16.msra.mxu0 %v2432
      %3224 = vmatprep.subr.bf16.mxu0 %v2437
      %3225 = vmatpush1.bf16.msra.mxu0 %v2436
      %3226 = vmatprep.subr.bf16.mxu0 %v2441
      %3227 = vmatpush1.bf16.msra.mxu0 %v2440
      %3228 = vmatprep.subr.bf16.mxu0 %v2445
      %3229 = vmatpush1.bf16.msra.mxu0 %v2444
      %3230 = vmatprep.subr.bf16.mxu0 %v2449
      %3231 = vmatpush1.bf16.msra.mxu0 %v2448
      %3232 = vmatprep.subr.bf16.mxu0 %v2453
      %3233 = vmatpush1.bf16.msra.mxu0 %v2452
      %3234 = vmatprep.subr.bf16.mxu0 %v2457
      %3235 = vmatpush1.bf16.msra.mxu0 %v2456
      %3236 = vmatprep.subr.bf16.mxu0 %v2461
      %3237 = vmatpush1.bf16.msra.mxu0 %v2460
      %3238 = vmatprep.subr.bf16.mxu0 %v2465
      %3239 = vmatpush1.bf16.msra.mxu0 %v2464
      %3240 = vmatprep.mubr.bf16.mxu0 %v780
      %3241 = vmatmul.mubr.bf16.gmra.mrb[0].mxu0 %v766
      %v3242 = vpop.f32.mrb[0].mxu0
      %v3243 = vadd.f32 %v3202, %v3242
      %v3244 = vpop.f32.mrb[0].mxu0
      %v3245 = vadd.f32 %v3204, %v3244
      %v3246 = vpop.f32.mrb[0].mxu0
      %v3247 = vpop.f32.mrb[0].mxu0
      %3248 = vdwg.mxu0
      %3249 = vmatprep.subr.bf16.mxu0 %v2469
      %3250 = vmatpush1.bf16.msra.mxu0 %v2468
      %3251 = vmatprep.subr.bf16.mxu0 %v2473
      %3252 = vmatpush1.bf16.msra.mxu0 %v2472
      %3253 = vmatprep.subr.bf16.mxu0 %v2477
      %3254 = vmatpush1.bf16.msra.mxu0 %v2476
      %3255 = vmatprep.subr.bf16.mxu0 %v2481
      %3256 = vmatpush1.bf16.msra.mxu0 %v2480
      %3257 = vmatprep.subr.bf16.mxu0 %v2485
      %3258 = vmatpush1.bf16.msra.mxu0 %v2484
      %3259 = vmatprep.subr.bf16.mxu0 %v2489
      %3260 = vmatpush1.bf16.msra.mxu0 %v2488
      %3261 = vmatprep.subr.bf16.mxu0 %v2493
      %3262 = vmatpush1.bf16.msra.mxu0 %v2492
      %3263 = vmatprep.subr.bf16.mxu0 %v2497
      %3264 = vmatpush1.bf16.msra.mxu0 %v2496
      %3265 = vmatprep.subr.bf16.mxu0 %v2501
      %3266 = vmatpush1.bf16.msra.mxu0 %v2500
      %3267 = vmatprep.subr.bf16.mxu0 %v2505
      %3268 = vmatpush1.bf16.msra.mxu0 %v2504
      %3269 = vmatprep.subr.bf16.mxu0 %v2509
      %3270 = vmatpush1.bf16.msra.mxu0 %v2508
      %3271 = vmatprep.subr.bf16.mxu0 %v2513
      %3272 = vmatpush1.bf16.msra.mxu0 %v2512
      %3273 = vmatprep.subr.bf16.mxu0 %v2517
      %3274 = vmatpush1.bf16.msra.mxu0 %v2516
      %3275 = vmatprep.subr.bf16.mxu0 %v2521
      %3276 = vmatpush1.bf16.msra.mxu0 %v2520
      %3277 = vmatprep.subr.bf16.mxu0 %v2525
      %3278 = vmatpush1.bf16.msra.mxu0 %v2524
      %3279 = vmatprep.subr.bf16.mxu0 %v2529
      %3280 = vmatpush1.bf16.msra.mxu0 %v2528
      %3281 = vmatprep.mubr.bf16.mxu0 %v789
      %3282 = vmatmul.mubr.bf16.gmra.mrb[0].mxu0 %v788
      %v3283 = vpop.f32.mrb[0].mxu0
      %v3284 = vadd.f32 %v3243, %v3283
      %v3285 = vpop.f32.mrb[0].mxu0
      %v3286 = vadd.f32 %v3245, %v3285
      %v3287 = vpop.f32.mrb[0].mxu0
      %v3288 = vpop.f32.mrb[0].mxu0
      %3289 = vdwg.mxu0
      %3290 = vmatprep.subr.bf16.mxu0 %v2533
      %3291 = vmatpush1.bf16.msra.mxu0 %v2532
      %3292 = vmatprep.subr.bf16.mxu0 %v2537
      %3293 = vmatpush1.bf16.msra.mxu0 %v2536
      %3294 = vmatprep.subr.bf16.mxu0 %v2541
      %3295 = vmatpush1.bf16.msra.mxu0 %v2540
      %3296 = vmatprep.subr.bf16.mxu0 %v2545
      %3297 = vmatpush1.bf16.msra.mxu0 %v2544
      %3298 = vmatprep.subr.bf16.mxu0 %v2549
      %3299 = vmatpush1.bf16.msra.mxu0 %v2548
      %3300 = vmatprep.subr.bf16.mxu0 %v2553
      %3301 = vmatpush1.bf16.msra.mxu0 %v2552
      %3302 = vmatprep.subr.bf16.mxu0 %v2557
      %3303 = vmatpush1.bf16.msra.mxu0 %v2556
      %3304 = vmatprep.subr.bf16.mxu0 %v2561
      %3305 = vmatpush1.bf16.msra.mxu0 %v2560
      %3306 = vmatprep.subr.bf16.mxu0 %v2565
      %3307 = vmatpush1.bf16.msra.mxu0 %v2564
      %3308 = vmatprep.subr.bf16.mxu0 %v2569
      %3309 = vmatpush1.bf16.msra.mxu0 %v2568
      %3310 = vmatprep.subr.bf16.mxu0 %v2573
      %3311 = vmatpush1.bf16.msra.mxu0 %v2572
      %3312 = vmatprep.subr.bf16.mxu0 %v2577
      %3313 = vmatpush1.bf16.msra.mxu0 %v2576
      %3314 = vmatprep.subr.bf16.mxu0 %v2581
      %3315 = vmatpush1.bf16.msra.mxu0 %v2580
      %3316 = vmatprep.subr.bf16.mxu0 %v2585
      %3317 = vmatpush1.bf16.msra.mxu0 %v2584
      %3318 = vmatprep.subr.bf16.mxu0 %v2589
      %3319 = vmatpush1.bf16.msra.mxu0 %v2588
      %3320 = vmatprep.subr.bf16.mxu0 %v2593
      %3321 = vmatpush1.bf16.msra.mxu0 %v2592
      %3322 = vmatprep.mubr.bf16.mxu0 %v787
      %3323 = vmatmul.mubr.bf16.gmra.mrb[0].mxu0 %v773
      %v3324 = vpop.f32.mrb[0].mxu0
      %v3325 = vadd.f32 %v3284, %v3324
      %v3326 = vpop.f32.mrb[0].mxu0
      %v3327 = vadd.f32 %v3286, %v3326
      %v3328 = vpop.f32.mrb[0].mxu0
      %v3329 = vpop.f32.mrb[0].mxu0
      %3330 = vdwg.mxu0
      %3331 = vmatprep.subr.bf16.mxu0 %v2151
      %3332 = vmatpush1.bf16.msra.mxu0 %v2150
      %3333 = vmatprep.subr.bf16.mxu0 %v2155
      %3334 = vmatpush1.bf16.msra.mxu0 %v2154
      %3335 = vmatprep.subr.bf16.mxu0 %v2159
      %3336 = vmatpush1.bf16.msra.mxu0 %v2158
      %3337 = vmatprep.subr.bf16.mxu0 %v2163
      %3338 = vmatpush1.bf16.msra.mxu0 %v2162
      %3339 = vmatprep.subr.bf16.mxu0 %v2167
      %3340 = vmatpush1.bf16.msra.mxu0 %v2166
      %3341 = vmatprep.subr.bf16.mxu0 %v2171
      %3342 = vmatpush1.bf16.msra.mxu0 %v2170
      %3343 = vmatprep.subr.bf16.mxu0 %v2175
      %3344 = vmatpush1.bf16.msra.mxu0 %v2174
      %3345 = vmatprep.subr.bf16.mxu0 %v2179
      %3346 = vmatpush1.bf16.msra.mxu0 %v2178
      %3347 = vmatprep.subr.bf16.mxu0 %v2183
      %3348 = vmatpush1.bf16.msra.mxu0 %v2182
      %3349 = vmatprep.subr.bf16.mxu0 %v2187
      %3350 = vmatpush1.bf16.msra.mxu0 %v2186
      %3351 = vmatprep.subr.bf16.mxu0 %v2191
      %3352 = vmatpush1.bf16.msra.mxu0 %v2190
      %3353 = vmatprep.subr.bf16.mxu0 %v2195
      %3354 = vmatpush1.bf16.msra.mxu0 %v2194
      %3355 = vmatprep.subr.bf16.mxu0 %v2199
      %3356 = vmatpush1.bf16.msra.mxu0 %v2198
      %3357 = vmatprep.subr.bf16.mxu0 %v2203
      %3358 = vmatpush1.bf16.msra.mxu0 %v2202
      %3359 = vmatprep.subr.bf16.mxu0 %v2207
      %3360 = vmatpush1.bf16.msra.mxu0 %v2206
      %3361 = vmatprep.subr.bf16.mxu0 %v2211
      %3362 = vmatpush1.bf16.msra.mxu0 %v2210
      %3363 = vmatprep.mubr.bf16.mxu0 %v731
      %3364 = vmatmul.mubr.bf16.gmra.mrb[0].mxu0 %v717
      %v3365 = vpop.f32.mrb[0].mxu0
      %v3366 = vadd.f32 0.0, %v3365
      %v3367 = vpop.f32.mrb[0].mxu0
      %v3368 = vadd.f32 0.0, %v3367
      %v3369 = vpop.f32.mrb[0].mxu0
      %v3370 = vpop.f32.mrb[0].mxu0
      %3371 = vdwg.mxu0
      %3372 = vmatprep.subr.bf16.mxu0 %v2215
      %3373 = vmatpush1.bf16.msra.mxu0 %v2214
      %3374 = vmatprep.subr.bf16.mxu0 %v2219
      %3375 = vmatpush1.bf16.msra.mxu0 %v2218
      %3376 = vmatprep.subr.bf16.mxu0 %v2223
      %3377 = vmatpush1.bf16.msra.mxu0 %v2222
      %3378 = vmatprep.subr.bf16.mxu0 %v2227
      %3379 = vmatpush1.bf16.msra.mxu0 %v2226
      %3380 = vmatprep.subr.bf16.mxu0 %v2231
      %3381 = vmatpush1.bf16.msra.mxu0 %v2230
      %3382 = vmatprep.subr.bf16.mxu0 %v2235
      %3383 = vmatpush1.bf16.msra.mxu0 %v2234
      %3384 = vmatprep.subr.bf16.mxu0 %v2239
      %3385 = vmatpush1.bf16.msra.mxu0 %v2238
      %3386 = vmatprep.subr.bf16.mxu0 %v2243
      %3387 = vmatpush1.bf16.msra.mxu0 %v2242
      %3388 = vmatprep.subr.bf16.mxu0 %v2247
      %3389 = vmatpush1.bf16.msra.mxu0 %v2246
      %3390 = vmatprep.subr.bf16.mxu0 %v2251
      %3391 = vmatpush1.bf16.msra.mxu0 %v2250
      %3392 = vmatprep.subr.bf16.mxu0 %v2255
      %3393 = vmatpush1.bf16.msra.mxu0 %v2254
      %3394 = vmatprep.subr.bf16.mxu0 %v2259
      %3395 = vmatpush1.bf16.msra.mxu0 %v2258
      %3396 = vmatprep.subr.bf16.mxu0 %v2263
      %3397 = vmatpush1.bf16.msra.mxu0 %v2262
      %3398 = vmatprep.subr.bf16.mxu0 %v2267
      %3399 = vmatpush1.bf16.msra.mxu0 %v2266
      %3400 = vmatprep.subr.bf16.mxu0 %v2271
      %3401 = vmatpush1.bf16.msra.mxu0 %v2270
      %3402 = vmatprep.subr.bf16.mxu0 %v2275
      %3403 = vmatpush1.bf16.msra.mxu0 %v2274
      %3404 = vmatprep.mubr.bf16.mxu0 %v741
      %3405 = vmatmul.mubr.bf16.gmra.mrb[0].mxu0 %v739
      %v3406 = vpop.f32.mrb[0].mxu0
      %v3407 = vadd.f32 %v3366, %v3406
      %v3408 = vpop.f32.mrb[0].mxu0
      %v3409 = vadd.f32 %v3368, %v3408
      %v3410 = vpop.f32.mrb[0].mxu0
      %v3411 = vpop.f32.mrb[0].mxu0
      %3412 = vdwg.mxu0
      %3413 = vmatprep.subr.bf16.mxu0 %v2279
      %3414 = vmatpush1.bf16.msra.mxu0 %v2278
      %3415 = vmatprep.subr.bf16.mxu0 %v2283
      %3416 = vmatpush1.bf16.msra.mxu0 %v2282
      %3417 = vmatprep.subr.bf16.mxu0 %v2287
      %3418 = vmatpush1.bf16.msra.mxu0 %v2286
      %3419 = vmatprep.subr.bf16.mxu0 %v2291
      %3420 = vmatpush1.bf16.msra.mxu0 %v2290
      %3421 = vmatprep.subr.bf16.mxu0 %v2295
      %3422 = vmatpush1.bf16.msra.mxu0 %v2294
      %3423 = vmatprep.subr.bf16.mxu0 %v2299
      %3424 = vmatpush1.bf16.msra.mxu0 %v2298
      %3425 = vmatprep.subr.bf16.mxu0 %v2303
      %3426 = vmatpush1.bf16.msra.mxu0 %v2302
      %3427 = vmatprep.subr.bf16.mxu0 %v2307
      %3428 = vmatpush1.bf16.msra.mxu0 %v2306
      %3429 = vmatprep.subr.bf16.mxu0 %v2311
      %3430 = vmatpush1.bf16.msra.mxu0 %v2310
      %3431 = vmatprep.subr.bf16.mxu0 %v2315
      %3432 = vmatpush1.bf16.msra.mxu0 %v2314
      %3433 = vmatprep.subr.bf16.mxu0 %v2319
      %3434 = vmatpush1.bf16.msra.mxu0 %v2318
      %3435 = vmatprep.subr.bf16.mxu0 %v2323
      %3436 = vmatpush1.bf16.msra.mxu0 %v2322
      %3437 = vmatprep.subr.bf16.mxu0 %v2327
      %3438 = vmatpush1.bf16.msra.mxu0 %v2326
      %3439 = vmatprep.subr.bf16.mxu0 %v2331
      %3440 = vmatpush1.bf16.msra.mxu0 %v2330
      %3441 = vmatprep.subr.bf16.mxu0 %v2335
      %3442 = vmatpush1.bf16.msra.mxu0 %v2334
      %3443 = vmatprep.subr.bf16.mxu0 %v2339
      %3444 = vmatpush1.bf16.msra.mxu0 %v2338
      %3445 = vmatprep.mubr.bf16.mxu0 %v738
      %3446 = vmatmul.mubr.bf16.gmra.mrb[0].mxu0 %v724
      %v3447 = vpop.f32.mrb[0].mxu0
      %v3448 = vadd.f32 %v3407, %v3447
      %v3449 = vpop.f32.mrb[0].mxu0
      %v3450 = vadd.f32 %v3409, %v3449
      %v3451 = vpop.f32.mrb[0].mxu0
      %v3452 = vpop.f32.mrb[0].mxu0
      %3453 = vdwg.mxu0
      %3454 = vmatprep.subr.bf16.mxu0 %v2343
      %3455 = vmatpush1.bf16.msra.mxu0 %v2342
      %3456 = vmatprep.subr.bf16.mxu0 %v2347
      %3457 = vmatpush1.bf16.msra.mxu0 %v2346
      %3458 = vmatprep.subr.bf16.mxu0 %v2351
      %3459 = vmatpush1.bf16.msra.mxu0 %v2350
      %3460 = vmatprep.subr.bf16.mxu0 %v2355
      %3461 = vmatpush1.bf16.msra.mxu0 %v2354
      %3462 = vmatprep.subr.bf16.mxu0 %v2359
      %3463 = vmatpush1.bf16.msra.mxu0 %v2358
      %3464 = vmatprep.subr.bf16.mxu0 %v2363
      %3465 = vmatpush1.bf16.msra.mxu0 %v2362
      %3466 = vmatprep.subr.bf16.mxu0 %v2367
      %3467 = vmatpush1.bf16.msra.mxu0 %v2366
      %3468 = vmatprep.subr.bf16.mxu0 %v2371
      %3469 = vmatpush1.bf16.msra.mxu0 %v2370
      %3470 = vmatprep.subr.bf16.mxu0 %v2375
      %3471 = vmatpush1.bf16.msra.mxu0 %v2374
      %3472 = vmatprep.subr.bf16.mxu0 %v2379
      %3473 = vmatpush1.bf16.msra.mxu0 %v2378
      %3474 = vmatprep.subr.bf16.mxu0 %v2383
      %3475 = vmatpush1.bf16.msra.mxu0 %v2382
      %3476 = vmatprep.subr.bf16.mxu0 %v2387
      %3477 = vmatpush1.bf16.msra.mxu0 %v2386
      %3478 = vmatprep.subr.bf16.mxu0 %v2391
      %3479 = vmatpush1.bf16.msra.mxu0 %v2390
      %3480 = vmatprep.subr.bf16.mxu0 %v2395
      %3481 = vmatpush1.bf16.msra.mxu0 %v2394
      %3482 = vmatprep.subr.bf16.mxu0 %v2399
      %3483 = vmatpush1.bf16.msra.mxu0 %v2398
      %3484 = vmatprep.subr.bf16.mxu0 %v2403
      %3485 = vmatpush1.bf16.msra.mxu0 %v2402
      %3486 = vmatprep.mubr.bf16.mxu0 %v742
      %3487 = vmatmul.mubr.bf16.gmra.mrb[0].mxu0 %v740
      %v3488 = vpop.f32.mrb[0].mxu0
      %v3489 = vadd.f32 %v3448, %v3488
      %v3490 = vpop.f32.mrb[0].mxu0
      %v3491 = vadd.f32 %v3450, %v3490
      %v3492 = vpop.f32.mrb[0].mxu0
      %v3493 = vpop.f32.mrb[0].mxu0
      %3494 = vdwg.mxu0
      %3495 = vmatprep.subr.bf16.mxu0 %v2407
      %3496 = vmatpush1.bf16.msra.mxu0 %v2406
      %3497 = vmatprep.subr.bf16.mxu0 %v2411
      %3498 = vmatpush1.bf16.msra.mxu0 %v2410
      %3499 = vmatprep.subr.bf16.mxu0 %v2415
      %3500 = vmatpush1.bf16.msra.mxu0 %v2414
      %3501 = vmatprep.subr.bf16.mxu0 %v2419
      %3502 = vmatpush1.bf16.msra.mxu0 %v2418
      %3503 = vmatprep.subr.bf16.mxu0 %v2423
      %3504 = vmatpush1.bf16.msra.mxu0 %v2422
      %3505 = vmatprep.subr.bf16.mxu0 %v2427
      %3506 = vmatpush1.bf16.msra.mxu0 %v2426
      %3507 = vmatprep.subr.bf16.mxu0 %v2431
      %3508 = vmatpush1.bf16.msra.mxu0 %v2430
      %3509 = vmatprep.subr.bf16.mxu0 %v2435
      %3510 = vmatpush1.bf16.msra.mxu0 %v2434
      %3511 = vmatprep.subr.bf16.mxu0 %v2439
      %3512 = vmatpush1.bf16.msra.mxu0 %v2438
      %3513 = vmatprep.subr.bf16.mxu0 %v2443
      %3514 = vmatpush1.bf16.msra.mxu0 %v2442
      %3515 = vmatprep.subr.bf16.mxu0 %v2447
      %3516 = vmatpush1.bf16.msra.mxu0 %v2446
      %3517 = vmatprep.subr.bf16.mxu0 %v2451
      %3518 = vmatpush1.bf16.msra.mxu0 %v2450
      %3519 = vmatprep.subr.bf16.mxu0 %v2455
      %3520 = vmatpush1.bf16.msra.mxu0 %v2454
      %3521 = vmatprep.subr.bf16.mxu0 %v2459
      %3522 = vmatpush1.bf16.msra.mxu0 %v2458
      %3523 = vmatprep.subr.bf16.mxu0 %v2463
      %3524 = vmatpush1.bf16.msra.mxu0 %v2462
      %3525 = vmatprep.subr.bf16.mxu0 %v2467
      %3526 = vmatpush1.bf16.msra.mxu0 %v2466
      %3527 = vmatprep.mubr.bf16.mxu0 %v780
      %3528 = vmatmul.mubr.bf16.gmra.mrb[0].mxu0 %v766
      %v3529 = vpop.f32.mrb[0].mxu0
      %v3530 = vadd.f32 %v3489, %v3529
      %v3531 = vpop.f32.mrb[0].mxu0
      %v3532 = vadd.f32 %v3491, %v3531
      %v3533 = vpop.f32.mrb[0].mxu0
      %v3534 = vpop.f32.mrb[0].mxu0
      %3535 = vdwg.mxu0
      %3536 = vmatprep.subr.bf16.mxu0 %v2471
      %3537 = vmatpush1.bf16.msra.mxu0 %v2470
      %3538 = vmatprep.subr.bf16.mxu0 %v2475
      %3539 = vmatpush1.bf16.msra.mxu0 %v2474
      %3540 = vmatprep.subr.bf16.mxu0 %v2479
      %3541 = vmatpush1.bf16.msra.mxu0 %v2478
      %3542 = vmatprep.subr.bf16.mxu0 %v2483
      %3543 = vmatpush1.bf16.msra.mxu0 %v2482
      %3544 = vmatprep.subr.bf16.mxu0 %v2487
      %3545 = vmatpush1.bf16.msra.mxu0 %v2486
      %3546 = vmatprep.subr.bf16.mxu0 %v2491
      %3547 = vmatpush1.bf16.msra.mxu0 %v2490
      %3548 = vmatprep.subr.bf16.mxu0 %v2495
      %3549 = vmatpush1.bf16.msra.mxu0 %v2494
      %3550 = vmatprep.subr.bf16.mxu0 %v2499
      %3551 = vmatpush1.bf16.msra.mxu0 %v2498
      %3552 = vmatprep.subr.bf16.mxu0 %v2503
      %3553 = vmatpush1.bf16.msra.mxu0 %v2502
      %3554 = vmatprep.subr.bf16.mxu0 %v2507
      %3555 = vmatpush1.bf16.msra.mxu0 %v2506
      %3556 = vmatprep.subr.bf16.mxu0 %v2511
      %3557 = vmatpush1.bf16.msra.mxu0 %v2510
      %3558 = vmatprep.subr.bf16.mxu0 %v2515
      %3559 = vmatpush1.bf16.msra.mxu0 %v2514
      %3560 = vmatprep.subr.bf16.mxu0 %v2519
      %3561 = vmatpush1.bf16.msra.mxu0 %v2518
      %3562 = vmatprep.subr.bf16.mxu0 %v2523
      %3563 = vmatpush1.bf16.msra.mxu0 %v2522
      %3564 = vmatprep.subr.bf16.mxu0 %v2527
      %3565 = vmatpush1.bf16.msra.mxu0 %v2526
      %3566 = vmatprep.subr.bf16.mxu0 %v2531
      %3567 = vmatpush1.bf16.msra.mxu0 %v2530
      %3568 = vmatprep.mubr.bf16.mxu0 %v789
      %3569 = vmatmul.mubr.bf16.gmra.mrb[0].mxu0 %v788
      %v3570 = vpop.f32.mrb[0].mxu0
      %v3571 = vadd.f32 %v3530, %v3570
      %v3572 = vpop.f32.mrb[0].mxu0
      %v3573 = vadd.f32 %v3532, %v3572
      %v3574 = vpop.f32.mrb[0].mxu0
      %v3575 = vpop.f32.mrb[0].mxu0
      %3576 = vdwg.mxu0
      %3577 = vmatprep.subr.bf16.mxu0 %v2535
      %3578 = vmatpush1.bf16.msra.mxu0 %v2534
      %3579 = vmatprep.subr.bf16.mxu0 %v2539
      %3580 = vmatpush1.bf16.msra.mxu0 %v2538
      %3581 = vmatprep.subr.bf16.mxu0 %v2543
      %3582 = vmatpush1.bf16.msra.mxu0 %v2542
      %3583 = vmatprep.subr.bf16.mxu0 %v2547
      %3584 = vmatpush1.bf16.msra.mxu0 %v2546
      %3585 = vmatprep.subr.bf16.mxu0 %v2551
      %3586 = vmatpush1.bf16.msra.mxu0 %v2550
      %3587 = vmatprep.subr.bf16.mxu0 %v2555
      %3588 = vmatpush1.bf16.msra.mxu0 %v2554
      %3589 = vmatprep.subr.bf16.mxu0 %v2559
      %3590 = vmatpush1.bf16.msra.mxu0 %v2558
      %3591 = vmatprep.subr.bf16.mxu0 %v2563
      %3592 = vmatpush1.bf16.msra.mxu0 %v2562
      %3593 = vmatprep.subr.bf16.mxu0 %v2567
      %3594 = vmatpush1.bf16.msra.mxu0 %v2566
      %3595 = vmatprep.subr.bf16.mxu0 %v2571
      %3596 = vmatpush1.bf16.msra.mxu0 %v2570
      %3597 = vmatprep.subr.bf16.mxu0 %v2575
      %3598 = vmatpush1.bf16.msra.mxu0 %v2574
      %3599 = vmatprep.subr.bf16.mxu0 %v2579
      %3600 = vmatpush1.bf16.msra.mxu0 %v2578
      %3601 = vmatprep.subr.bf16.mxu0 %v2583
      %3602 = vmatpush1.bf16.msra.mxu0 %v2582
      %3603 = vmatprep.subr.bf16.mxu0 %v2587
      %3604 = vmatpush1.bf16.msra.mxu0 %v2586
      %3605 = vmatprep.subr.bf16.mxu0 %v2591
      %3606 = vmatpush1.bf16.msra.mxu0 %v2590
      %3607 = vmatprep.subr.bf16.mxu0 %v2595
      %3608 = vmatpush1.bf16.msra.mxu0 %v2594
      %3609 = vmatprep.mubr.bf16.mxu0 %v787
      %3610 = vmatmul.mubr.bf16.gmra.mrb[0].mxu0 %v773
      %v3611 = vpop.f32.mrb[0].mxu0
      %v3612 = vadd.f32 %v3571, %v3611
      %v3613 = vpop.f32.mrb[0].mxu0
      %v3614 = vadd.f32 %v3573, %v3613
      %v3615 = vpop.f32.mrb[0].mxu0
      %v3616 = vpop.f32.mrb[0].mxu0
      %3617 = vdwg.mxu0
      %v3622 = vcombine.low %v3325, %v3327
      %v3623 = vcombine.low %v3612, %v3614
      %v3625 = vunpack.c.l.s4 1983009808
      %v3626 = vunpack.c.0.s8 %v3625
      %v3627 = vlaneseq
      %v3628 = vshrl.u32 %v3627, 7
      %v3629 = vsub.s32 %v3626, %v3628
      %v3630 = vrot.slane %v3622, %v3629
      %v3632 = vunpack.c.l.s4 1983009808
      %v3633 = vunpack.c.0.s8 %v3632
      %v3634 = vlaneseq
      %v3635 = vshrl.u32 %v3634, 7
      %v3636 = vsub.s32 %v3633, %v3635
      %v3637 = vrot.slane %v3623, %v3636
      %v3638 = vcombine.low %v3630, %v3637
      %v3640 = vadd.f32 %v241, %v3638
      %3641 = vst [vmem:[#allocation2] sm:$0xff] %v3640
      %p3642 = scmp.eq.s32.totalorder %s18, 2
      // Predicated region
      $region45: #{_lambda_.7} parent=39 // pred_check
        %p3643 = pneg %p3642
      $region46: #{_lambda_.7} parent=39 // pred_check_branch
        %3645 = sbr.rel (%p3643) target = $region48
      $region47: #{_lambda_.7} parent=39 // pred_region
        %v3646 = vld [vmem:[#allocation2] sm:$0xff]
        %v3647 = vld [vmem:[%s2] sm:$0xf]
        %v3649 = vlaneseq
        %v3650 = vshrl.u32 %v3649, 7
        %v3651 = vsub.s32 0, %v3650
        %v3652 = vrot.slane %v3647, %v3651
        %v3653 = vlaneseq
        %v3654 = vshrl.u32 %v3653, 7
        %v3655 = vsub.s32 1, %v3654
        %v3656 = vrot.slane %v3647, %v3655
        %v3657 = vlaneseq
        %v3658 = vshrl.u32 %v3657, 7
        %v3659 = vsub.s32 2, %v3658
        %v3660 = vrot.slane %v3647, %v3659
        %v3661 = vlaneseq
        %v3662 = vshrl.u32 %v3661, 7
        %v3663 = vsub.s32 3, %v3662
        %v3664 = vrot.slane %v3647, %v3663
        %v3665 = vcombine.low %v3652, %v3656
        %v3666 = vcombine.low %v3660, %v3664
        %v3668 = vunpack.c.l.s4 1983009808
        %v3669 = vunpack.c.0.s8 %v3668
        %v3670 = vlaneseq
        %v3671 = vshrl.u32 %v3670, 7
        %v3672 = vsub.s32 %v3669, %v3671
        %v3673 = vrot.slane %v3665, %v3672
        %v3675 = vunpack.c.l.s4 1983009808
        %v3676 = vunpack.c.0.s8 %v3675
        %v3677 = vlaneseq
        %v3678 = vshrl.u32 %v3677, 7
        %v3679 = vsub.s32 %v3676, %v3678
        %v3680 = vrot.slane %v3666, %v3679
        %v3681 = vcombine.low %v3673, %v3680
        %v3683 = vadd.f32 %v3646, %v3681
        %v3684 = vmax.f32 %v3683, 0.0
        %v3685 = vld [vmem:[%s3] sm:$0xf]
        %v3687 = vlaneseq
        %v3688 = vshrl.u32 %v3687, 7
        %v3689 = vsub.s32 0, %v3688
        %v3690 = vrot.slane %v3685, %v3689
        %v3691 = vlaneseq
        %v3692 = vshrl.u32 %v3691, 7
        %v3693 = vsub.s32 1, %v3692
        %v3694 = vrot.slane %v3685, %v3693
        %v3695 = vlaneseq
        %v3696 = vshrl.u32 %v3695, 7
        %v3697 = vsub.s32 2, %v3696
        %v3698 = vrot.slane %v3685, %v3697
        %v3699 = vlaneseq
        %v3700 = vshrl.u32 %v3699, 7
        %v3701 = vsub.s32 3, %v3700
        %v3702 = vrot.slane %v3685, %v3701
        %v3703 = vcombine.low %v3690, %v3694
        %v3704 = vcombine.low %v3698, %v3702
        %v3706 = vunpack.c.l.s4 1983009808
        %v3707 = vunpack.c.0.s8 %v3706
        %v3708 = vlaneseq
        %v3709 = vshrl.u32 %v3708, 7
        %v3710 = vsub.s32 %v3707, %v3709
        %v3711 = vrot.slane %v3703, %v3710
        %v3713 = vunpack.c.l.s4 1983009808
        %v3714 = vunpack.c.0.s8 %v3713
        %v3715 = vlaneseq
        %v3716 = vshrl.u32 %v3715, 7
        %v3717 = vsub.s32 %v3714, %v3716
        %v3718 = vrot.slane %v3704, %v3717
        %v3719 = vcombine.low %v3711, %v3718
        %v3721 = vmul.f32 %v3684, %v3719
        %v3723 = vcombine.high %v3721, %v3721
        %v3725 = vunpack.c.l.s4 1983009808
        %v3726 = vunpack.c.0.s8 %v3725
        %v3727 = vlaneseq
        %v3728 = vshrl.u32 %v3727, 7
        %v3729 = vsub.s32 %v3726, %v3728
        %v3730 = vrot.slane %v3721, %v3729
        %v3732 = vunpack.c.l.s4 1983009808
        %v3733 = vunpack.c.0.s8 %v3732
        %v3734 = vlaneseq
        %v3735 = vshrl.u32 %v3734, 7
        %v3736 = vsub.s32 %v3733, %v3735
        %v3737 = vrot.slane %v3723, %v3736
        %v3738 = vcombine.high %v3730, %v3730
        %v3739 = vcombine.high %v3737, %v3737
        %vm3744 = vcmask 1041408
        %v3745 = vsel %vm3744, %v3730, 0.0
        %v3746 = vsel %vm3744, %v3738, 0.0
        %v3747 = vadd.f32 %v3745, %v3746
        %v3748 = vsel %vm3744, %v3737, 0.0
        %v3749 = vadd.f32 %v3747, %v3748
        %v3750 = vsel %vm3744, %v3739, 0.0
        %v3751 = vadd.f32 %v3749, %v3750
        %3752 = vadd.xlane.f32.xlu0 %v3751
        %v3753 = vpop.xlane.xlu0 %3752
        %v3754 = vld [vmem:[#allocation3] sm:$0x1]
        %s3755 = vtos %v3754
        %v3756 = vstv %s3755
        %v3757 = vadd.f32 %v3753, %v3756
        %vm3758 = vcmask 1024
        %3759 = vst.msk [vmem:[%s5] sm:$0x3] %vm3758, %v3757
      $region48: #{_lambda_.7} parent=39 // pred_fallthru
        _
      // Predicated region
      $region49: #{_lambda_.7} parent=39 // pred_check
        %p3760 = pneg %p146
      $region50: #{_lambda_.7} parent=39 // pred_check_branch
        %3762 = sbr.rel (%p3760) target = $region52
      $region51: #{_lambda_.7} parent=39 // pred_region
        _
      $region52: #{_lambda_.7} parent=39 // pred_fallthru
        _
      // Predicated region
      $region53: #{_lambda_.7} parent=39 // pred_check
        %p3763 = pneg %p146
      $region54: #{_lambda_.7} parent=39 // pred_check_branch
        %3765 = sbr.rel (%p3763) target = $region56
      $region55: #{_lambda_.7} parent=39 // pred_region
        _
      $region56: #{_lambda_.7} parent=39 // pred_fallthru
        _
    $region40: #{_lambda_.7} parent=5 // pred_fallthru
      _
    %p3766 = scmp.le.s32.totalorder 2, %s13
    // Predicated region
    $region57: #{_lambda_.7} parent=5 // pred_check
      %p3767 = pneg %p3766
    $region58: #{_lambda_.7} parent=5 // pred_check_branch
      %3769 = sbr.rel (%p3767) target = $region60
    $region59: #{_lambda_.7} parent=5 // pred_region
      %s3770 = ssub.s32 %s13, 2
    $region60: #{_lambda_.7} parent=5 // pred_fallthru
      _
  $region6: #{_lambda_.7} parent=0 // loop_footer
    %s17 = sadd.s32 1, %s13
  $region7: #{_lambda_.7} parent=0 // loop_footer_branch
    %12 = sbr.rel target = $region3
  $region8: #{_lambda_.7} parent=0 // loop_exit
    _

</llo_original>
